<compile_context>
chip_gen: v5e
topology: v5e:2x2
jax: 0.10.0
libtpu: 0.0.40
codegen_flags: <defaults>
</compile_context>

<pallas_src>
import numpy as np
import jax
import jax.numpy as jnp
from jax.experimental import pallas as pl
from jax.experimental.pallas import tpu as pltpu

# ----------------------------- small config -----------------------------
B = 2            # batch
C_IN = 3         # config.channel_dim
W = 8            # config.resolution[0]
H = 8            # config.resolution[1]
D_LAT = 32       # config.backbone_feature_dim (latent_dim)
KQ_DIM = 132     # hard-coded kq_dim in SceneNet.__init__
K_LOCAL = 5      # local window size K  -> K*K = 25 local neighbours per node
NUM_LONG_RANGE = 1
N = W * H                               # nodes per image (the +1 dummy node is folded
                                        # analytically, see kernel step 4)
K_TOT = K_LOCAL * K_LOCAL + NUM_LONG_RANGE      # 26 neighbours per node
K_PAD = 32                                       # 26 -> 32 sublanes (unmasked stores)
SCALE = float(D_LAT) ** -0.5            # logits scaled by D ** (-0.5), D = latent_dim
BN = B * N                              # 128  (lane-dense node axis)


# ----------------------------- the fused kernel -----------------------------
def _scene_net_kernel(patches_ref, conv_w_ref, conv_b_ref, gsum_ref,
                      m_ref, cq_ref, ck_ref, c0_ref, vg_ref,
                      logits_ref, adj_ref):
    # 1) backbone grid conv as an im2col matmul on the MXU.
    # TODO(synk): the full RDN backbone (residual dense blocks) is not in the provided
    # source; a single 3x3 conv grid feature extractor stands in for it.
    conv = (jnp.dot(patches_ref[...], conv_w_ref[...],
                    preferred_element_type=jnp.float32) + conv_b_ref[...])       # (BN, D)

    # 2) F.normalize(conv_features, dim=-1, p=2) over the spatial H axis, done as a
    #    block-diagonal group-sum MATMUL (rows sharing (b, w) are summed) -- no in-kernel
    #    4-D reshape / relayout.
    ss = jnp.dot(gsum_ref[...], conv * conv, preferred_element_type=jnp.float32)  # (BN, D)
    feat = conv / jnp.maximum(jnp.sqrt(ss), 1e-12)                                # (BN, D)

    # 3) folded kq bilinear form.
    #    x_mat[r] = (feat_r Wk + bk) Wq^T   (32-deep contraction, no 256-lane padding)
    #    s0[c, r] = feat_c . x_mat[r]  = ks_r . (feat_c Wq)      (bf16 operands, f32 acc)
    #    kb[r] + c0 = ks_r . bq   (added post-gather; also the exact dummy-node logit)
    # TODO(synk): the original torch.gather uses index.repeat(1,1,D_latent), which would
    # truncate the kq contraction to the first latent_dim channels; the full kq_dim
    # contraction (as in the previously accepted version / reference) is kept here.
    x_mat = jnp.dot(feat, m_ref[...], preferred_element_type=jnp.float32) + cq_ref[...]
    s0 = jax.lax.dot_general(feat.astype(jnp.bfloat16), x_mat.astype(jnp.bfloat16),
                             (((1,), (1,)), ((), ())),
                             preferred_element_type=jnp.float32)                  # (BN, BN)
    kb = jax.lax.dot_general(ck_ref[...], feat, (((1,), (1,)), ((), ())),
                             preferred_element_type=jnp.float32) + c0_ref[...]    # (1, BN)

    # 4) neighbour gather: per-k 2-D one-hot compare + sublane reduce (no 3-D tensors).
    #    vg[k, r] = b*N + v  for real neighbours, -1 for the dummy node (matches nothing,
    #    so the selected value is 0 and the logit reduces to kb + c0 -- exact).
    vg = vg_ref[...]                                                              # (K_PAD, BN)
    iota_q = jax.lax.broadcasted_iota(jnp.int32, (BN, BN), 0)
    row_iota = jax.lax.broadcasted_iota(jnp.int32, (K_PAD, BN), 0)
    logits_full = jnp.zeros((K_PAD, BN), jnp.float32)
    for k in range(K_TOT):                                  # unrolled, 26 steps
        onehot = iota_q == vg[k:k + 1, :]                   # (BN, BN)
        sel = jnp.sum(jnp.where(onehot, s0, 0.0), axis=0, keepdims=True)          # (1, BN)
        logits_full = jnp.where(row_iota == k, sel, logits_full)
    logits_full = (logits_full + kb) * SCALE                                       # (K_PAD, BN)
    logits_ref[...] = logits_full                            # unmasked (32,128) store

    # 5) compute_masks(): adj = softmax(logits, K axis); adj /= max(adj, K).clamp(1e-12).
    #    Padded K rows are masked to -inf so only the true 26 slots participate.
    masked = jnp.where(row_iota < K_TOT, logits_full, -1e30)
    m = jnp.max(masked, axis=0, keepdims=True)
    e = jnp.exp(masked - m)
    p = e * pl.reciprocal(jnp.sum(e, axis=0, keepdims=True), approx=True)
    adj_ref[...] = p * pl.reciprocal(
        jnp.maximum(jnp.max(p, axis=0, keepdims=True), 1e-12), approx=True)


# ----------------------------- pallas_call wrapper -----------------------------
def _scene_net_pallas(patches, conv_w, conv_b, gsum, m_mat, cq_row, ck_row, c0, vg):
    flops = 2 * (BN * (9 * C_IN) * D_LAT        # conv
                 + BN * BN * D_LAT              # group-sum normalisation
                 + BN * D_LAT * D_LAT           # folded projection
                 + BN * BN * D_LAT              # score matrix (32-deep)
                 + BN * D_LAT                   # bias row
                 + K_TOT * BN * BN)             # one-hot gather select/reduce
    bytes_accessed = 4 * (patches.size + conv_w.size + conv_b.size + gsum.size
                          + m_mat.size + cq_row.size + ck_row.size + c0.size
                          + vg.size + 2 * K_PAD * BN)

    def full(shape):
        return pl.BlockSpec(shape, lambda i: (0, 0))

    return pl.pallas_call(
        _scene_net_kernel,
        out_shape=(jax.ShapeDtypeStruct((K_PAD, BN), jnp.float32),
                   jax.ShapeDtypeStruct((K_PAD, BN), jnp.float32)),
        grid=(1,),
        in_specs=[full((BN, 9 * C_IN)),
                  full((9 * C_IN, D_LAT)),
                  full((1, D_LAT)),
                  full((BN, BN)),
                  full((D_LAT, D_LAT)),
                  full((1, D_LAT)),
                  full((1, D_LAT)),
                  full((1, 1)),
                  full((K_PAD, BN))],
        out_specs=(full((K_PAD, BN)), full((K_PAD, BN))),
        compiler_params=pltpu.CompilerParams(
            dimension_semantics=("arbitrary",),
            vmem_limit_bytes=32 * 1024 * 1024),
        cost_estimate=pl.CostEstimate(flops=flops,
                                      transcendentals=K_TOT * BN + BN * D_LAT,
                                      bytes_accessed=bytes_accessed),
    )(patches, conv_w, conv_b, gsum, m_mat, cq_row, ck_row, c0, vg)


# ----------------------------- glue (plain JAX / numpy) -----------------------------
def generate_local_indices(img_size, K):
    """Numpy port of the torch helper (ReflectionPad2d + F.unfold)."""
    Hh, Ww = img_size
    idx = np.arange(Hh * Ww).reshape(Hh, Ww)
    half = (K - 1) // 2
    padded = np.pad(idx, half, mode="reflect")            # ReflectionPad2d(half)
    cols = []
    for kh in range(K):
        for kw in range(K):
            cols.append(padded[kh:kh + Hh, kw:kw + Ww].reshape(-1))
    return np.stack(cols, axis=1).astype(np.int32)        # [Hh*Ww, K*K]


def _im2col(ims):
    # ims: [B, C, W, H] (PyTorch convention) -> patches [B*N, 9*C]
    # TODO(synk): at real resolutions the 3x3 patch extraction should move inside the
    # kernel (slice a VMEM-resident input tile) to avoid 9x HBM traffic; trivial at 8x8.
    x = jnp.transpose(ims, (0, 2, 3, 1))                  # [B, W, H, C]
    xp = jnp.pad(x, ((0, 0), (1, 1), (1, 1), (0, 0)))
    pats = []
    for kw in range(3):
        for kh in range(3):
            pats.append(xp[:, kw:kw + W, kh:kh + H, :])
    return jnp.concatenate(pats, axis=-1).reshape(B * N, 9 * C_IN)


def _fold_kq(params):
    # Algebraic fold of the ks/qs linear maps into a D_LAT x D_LAT bilinear form plus
    # rank-1 bias corrections (exact):  <ks, qs> = x M y^T + x.ck + y.cq + c0.
    wk, bk = params["wk"], params["bk"]
    wq, bq = params["wq"], params["bq"]
    m_mat = wk @ wq.T                  # (D, D)
    cq_row = bk @ wq.T                 # (1, D)   pairs with the q-side (neighbour) feat
    ck_row = bq @ wk.T                 # (1, D)   pairs with the k-side (node) feat
    c0 = bk @ bq.T                     # (1, 1)
    return m_mat, cq_row, ck_row, c0


def _group_sum_matrix():
    # Block-diagonal 0/1 matrix: rows sharing (b, w) (i.e. the same H-group of 8) sum.
    r = np.arange(BN)
    g = (r[:, None] // H) == (r[None, :] // H)
    return jnp.asarray(g.astype(np.float32))              # (BN, BN)


def _prep_indices(v_idx):
    # neighbour indices with per-batch row offsets, k-major (K_PAD, B*N).
    # The dummy node (index N) maps to -1: it matches no one-hot row, and its logit is
    # exactly the post-gather bias term kb + c0 because its feature row is zero.
    boff = (jnp.arange(B, dtype=jnp.int32) * N).reshape(B, 1, 1)
    vg = jnp.where(v_idx == N, jnp.int32(-1), v_idx.astype(jnp.int32) + boff)   # [B,N,K]
    vg = jnp.transpose(vg.reshape(B * N, K_TOT))                                 # (K, BN)
    pad = jnp.full((K_PAD - K_TOT, B * N), -1, jnp.int32)
    return jnp.concatenate([vg, pad], axis=0)                                    # (K_PAD, BN)


def scene_net_forward(ims, params, v_idx):
    patches = _im2col(ims)
    m_mat, cq_row, ck_row, c0 = _fold_kq(params)
    gsum = _group_sum_matrix()
    vg = _prep_indices(v_idx)

    logits_t, adj_t = _scene_net_pallas(patches, params["conv_w"], params["conv_b"],
                                        gsum, m_mat, cq_row, ck_row, c0, vg)

    logits = jnp.transpose(logits_t[:K_TOT].reshape(K_TOT, B, N), (1, 2, 0))     # [B, N, K]
    local_adj = jnp.transpose(adj_t[:K_TOT].reshape(K_TOT, B, N), (1, 2, 0))     # [B, N, K]

    outputs = {}
    outputs["all_logits"] = [logits]
    outputs["local_adj"] = local_adj
    # TODO(synk): compute_loss needs target_masks (None by default) and an undefined
    # `logit()` helper in the source; skipped.
    outputs["loss"] = jnp.float32(0.0)
    # TODO(synk): GraphPropagation / Competition modules (and torch_sparse SparseTensor)
    # are not provided in the source, so mask extraction is not reproduced.
    outputs["masks"] = None
    outputs["alive"] = None
    return outputs


# ----------------------------- pure-JAX reference (for verification) -----------------------------
def _reference_forward(ims, params, v_idx):
    patches = _im2col(ims)
    cf = (patches @ params["conv_w"] + params["conv_b"]).reshape(B, W, H, D_LAT)
    cf = cf / jnp.maximum(jnp.sqrt(jnp.sum(cf * cf, axis=2, keepdims=True)), 1e-12)
    flat = cf.reshape(B, N, D_LAT)
    flat = jnp.concatenate([flat, jnp.zeros((B, 1, D_LAT), jnp.float32)], axis=1)
    ks = flat @ params["wk"] + params["bk"]
    qs = flat @ params["wq"] + params["bq"]
    vi = v_idx.reshape(B, N * K_TOT)
    y = jnp.take_along_axis(
        qs, jnp.broadcast_to(vi[:, :, None], (B, N * K_TOT, KQ_DIM)), axis=1)
    y = y.reshape(B, N, K_TOT, KQ_DIM)
    logits = jnp.einsum("bnd,bnkd->bnk", ks[:, :N, :], y) * SCALE
    p = jax.nn.softmax(logits, axis=-1)
    adj = p / jnp.maximum(jnp.max(p, axis=-1, keepdims=True), 1e-12)
    return logits, adj


# ----------------------------- main -----------------------------
if __name__ == "__main__":
    key = jax.random.PRNGKey(0)
    k_im, k_cw, k_cb, k_wk, k_bk, k_wq, k_bq, k_rand = jax.random.split(key, 8)

    ims = jax.random.normal(k_im, (B, C_IN, W, H), jnp.float32)

    params = {
        "conv_w": 0.1 * jax.random.normal(k_cw, (9 * C_IN, D_LAT), jnp.float32),
        "conv_b": 0.01 * jax.random.normal(k_cb, (1, D_LAT), jnp.float32),
        "wk": 0.1 * jax.random.normal(k_wk, (D_LAT, KQ_DIM), jnp.float32),
        "bk": 0.01 * jax.random.normal(k_bk, (1, KQ_DIM), jnp.float32),
        "wq": 0.1 * jax.random.normal(k_wq, (D_LAT, KQ_DIM), jnp.float32),
        "bq": 0.01 * jax.random.normal(k_bq, (1, KQ_DIM), jnp.float32),
    }

    # local 5x5 window indices (+1 random long-range index per node), as in forward()
    local = generate_local_indices([W, H], K_LOCAL)                       # [N, 25]
    local = jnp.asarray(np.tile(local[None], (B, 1, 1)), jnp.int32)       # [B, N, 25]
    long_range = jax.random.randint(k_rand, (B, N, NUM_LONG_RANGE), 0, H * W, jnp.int32)
    v_idx = jnp.concatenate([local, long_range], axis=-1)                 # [B, N, 26]

    fwd = jax.jit(scene_net_forward)
    out = fwd(ims, params, v_idx)
    logits = jax.block_until_ready(out["all_logits"][0])
    local_adj = jax.block_until_ready(out["local_adj"])

    ref_logits, ref_adj = _reference_forward(ims, params, v_idx)
    np.testing.assert_allclose(np.asarray(logits), np.asarray(ref_logits),
                               atol=1e-2, rtol=1e-2)
    np.testing.assert_allclose(np.asarray(local_adj), np.asarray(ref_adj),
                               atol=1e-2, rtol=1e-2)

    print("KERNEL_OK")
</pallas_src>

<mosaic_0001>
module attributes {stable_mosaic.version = 11 : i64} {
  func.func @_scene_net_kernel(%arg0: i32, %arg1: memref<128x27xf32, #tpu.memory_space<vmem>>, %arg2: memref<27x32xf32, #tpu.memory_space<vmem>>, %arg3: memref<1x32xf32, #tpu.memory_space<vmem>>, %arg4: memref<128x128xf32, #tpu.memory_space<vmem>>, %arg5: memref<32x32xf32, #tpu.memory_space<vmem>>, %arg6: memref<1x32xf32, #tpu.memory_space<vmem>>, %arg7: memref<1x32xf32, #tpu.memory_space<vmem>>, %arg8: memref<1x1xf32, #tpu.memory_space<vmem>>, %arg9: memref<32x128xi32, #tpu.memory_space<vmem>>, %arg10: memref<32x128xf32, #tpu.memory_space<vmem>>, %arg11: memref<32x128xf32, #tpu.memory_space<vmem>>) attributes {dimension_semantics = [#tpu.dimension_semantics<arbitrary>], iteration_bounds = array<i64: 1>, scalar_prefetch = 0 : i64, scratch_operands = 0 : i64, tpu.core_type = #tpu.core_type<tc>, window_params = [{pipeline_mode = #tpu.pipeline_mode<synchronous>, transform_indices = @transform_0, window_bounds = array<i64: 128, 27>}, {pipeline_mode = #tpu.pipeline_mode<synchronous>, transform_indices = @transform_1, window_bounds = array<i64: 27, 32>}, {pipeline_mode = #tpu.pipeline_mode<synchronous>, transform_indices = @transform_2, window_bounds = array<i64: 1, 32>}, {pipeline_mode = #tpu.pipeline_mode<synchronous>, transform_indices = @transform_3, window_bounds = array<i64: 128, 128>}, {pipeline_mode = #tpu.pipeline_mode<synchronous>, transform_indices = @transform_4, window_bounds = array<i64: 32, 32>}, {pipeline_mode = #tpu.pipeline_mode<synchronous>, transform_indices = @transform_5, window_bounds = array<i64: 1, 32>}, {pipeline_mode = #tpu.pipeline_mode<synchronous>, transform_indices = @transform_6, window_bounds = array<i64: 1, 32>}, {pipeline_mode = #tpu.pipeline_mode<synchronous>, transform_indices = @transform_7, window_bounds = array<i64: 1, 1>}, {pipeline_mode = #tpu.pipeline_mode<synchronous>, transform_indices = @transform_8, window_bounds = array<i64: 32, 128>}, {pipeline_mode = #tpu.pipeline_mode<synchronous>, transform_indices = @transform_9, window_bounds = array<i64: 32, 128>}, {pipeline_mode = #tpu.pipeline_mode<synchronous>, transform_indices = @transform_10, window_bounds = array<i64: 32, 128>}]} {
    %c0 = arith.constant 0 : index
    %c0_0 = arith.constant 0 : index
    %0 = vector.load %arg1[%c0, %c0_0] : memref<128x27xf32, #tpu.memory_space<vmem>>, vector<128x27xf32>
    %c0_1 = arith.constant 0 : index
    %c0_2 = arith.constant 0 : index
    %1 = vector.load %arg2[%c0_1, %c0_2] : memref<27x32xf32, #tpu.memory_space<vmem>>, vector<27x32xf32>
    %cst = arith.constant dense<0.000000e+00> : vector<128x32xf32>
    %2 = tpu.matmul %0, %1, %cst {dimension_numbers = #tpu.dot_dimension_numbers<[1], [0], [0], [1], [0, 0, 1, 1], [], []>} : vector<128x27xf32>, vector<27x32xf32>, vector<128x32xf32> -> vector<128x32xf32>
    %c0_3 = arith.constant 0 : index
    %c0_4 = arith.constant 0 : index
    %3 = vector.load %arg3[%c0_3, %c0_4] : memref<1x32xf32, #tpu.memory_space<vmem>>, vector<1x32xf32>
    %4 = vector.broadcast %3 : vector<1x32xf32> to vector<128x32xf32>
    %5 = arith.addf %2, %4 : vector<128x32xf32>
    %c0_5 = arith.constant 0 : index
    %c0_6 = arith.constant 0 : index
    %6 = vector.load %arg4[%c0_5, %c0_6] : memref<128x128xf32, #tpu.memory_space<vmem>>, vector<128x128xf32>
    %7 = arith.mulf %5, %5 : vector<128x32xf32>
    %cst_7 = arith.constant dense<0.000000e+00> : vector<128x32xf32>
    %8 = tpu.matmul %6, %7, %cst_7 {dimension_numbers = #tpu.dot_dimension_numbers<[1], [0], [0], [1], [0, 0, 1, 1], [], []>} : vector<128x128xf32>, vector<128x32xf32>, vector<128x32xf32> -> vector<128x32xf32>
    %9 = math.sqrt %8 : vector<128x32xf32>
    %cst_8 = arith.constant 9.99999996E-13 : f32
    %10 = vector.broadcast %cst_8 : f32 to vector<128x32xf32>
    %11 = arith.maximumf %9, %10 : vector<128x32xf32>
    %12 = arith.divf %5, %11 : vector<128x32xf32>
    %c0_9 = arith.constant 0 : index
    %c0_10 = arith.constant 0 : index
    %13 = vector.load %arg5[%c0_9, %c0_10] : memref<32x32xf32, #tpu.memory_space<vmem>>, vector<32x32xf32>
    %cst_11 = arith.constant dense<0.000000e+00> : vector<128x32xf32>
    %14 = tpu.matmul %12, %13, %cst_11 {dimension_numbers = #tpu.dot_dimension_numbers<[1], [0], [0], [1], [0, 0, 1, 1], [], []>} : vector<128x32xf32>, vector<32x32xf32>, vector<128x32xf32> -> vector<128x32xf32>
    %c0_12 = arith.constant 0 : index
    %c0_13 = arith.constant 0 : index
    %15 = vector.load %arg6[%c0_12, %c0_13] : memref<1x32xf32, #tpu.memory_space<vmem>>, vector<1x32xf32>
    %16 = vector.broadcast %15 : vector<1x32xf32> to vector<128x32xf32>
    %17 = arith.addf %14, %16 : vector<128x32xf32>
    %18 = arith.truncf %12 : vector<128x32xf32> to vector<128x32xbf16>
    %19 = arith.truncf %17 : vector<128x32xf32> to vector<128x32xbf16>
    %cst_14 = arith.constant dense<0.000000e+00> : vector<128x128xf32>
    %20 = tpu.matmul %18, %19, %cst_14 {dimension_numbers = #tpu.dot_dimension_numbers<[1], [1], [0], [0], [0, 0, 1, 0], [], []>} : vector<128x32xbf16>, vector<128x32xbf16>, vector<128x128xf32> -> vector<128x128xf32>
    %c0_15 = arith.constant 0 : index
    %c0_16 = arith.constant 0 : index
    %21 = vector.load %arg7[%c0_15, %c0_16] : memref<1x32xf32, #tpu.memory_space<vmem>>, vector<1x32xf32>
    %cst_17 = arith.constant dense<0.000000e+00> : vector<1x128xf32>
    %22 = tpu.matmul %21, %12, %cst_17 {dimension_numbers = #tpu.dot_dimension_numbers<[1], [1], [0], [0], [0, 0, 1, 0], [], []>} : vector<1x32xf32>, vector<128x32xf32>, vector<1x128xf32> -> vector<1x128xf32>
    %c0_18 = arith.constant 0 : index
    %c0_19 = arith.constant 0 : index
    %23 = vector.load %arg8[%c0_18, %c0_19] : memref<1x1xf32, #tpu.memory_space<vmem>>, vector<1x1xf32>
    %24 = vector.broadcast %23 : vector<1x1xf32> to vector<1x128xf32>
    %25 = arith.addf %22, %24 : vector<1x128xf32>
    %c0_20 = arith.constant 0 : index
    %c0_21 = arith.constant 0 : index
    %26 = vector.load %arg9[%c0_20, %c0_21] : memref<32x128xi32, #tpu.memory_space<vmem>>, vector<32x128xi32>
    %27 = tpu.iota {dimensions = array<i32: 0>} : vector<128x128xi32>
    %28 = tpu.iota {dimensions = array<i32: 0>} : vector<32x128xi32>
    %cst_22 = arith.constant 0.000000e+00 : f32
    %29 = vector.broadcast %cst_22 : f32 to vector<32x128xf32>
    %30 = vector.extract_strided_slice %26 {offsets = [0, 0], sizes = [1, 128], strides = [1, 1]} : vector<32x128xi32> to vector<1x128xi32>
    %31 = vector.broadcast %30 : vector<1x128xi32> to vector<128x128xi32>
    %32 = arith.cmpi eq, %27, %31 : vector<128x128xi32>
    %cst_23 = arith.constant 0.000000e+00 : f32
    %33 = vector.broadcast %cst_23 : f32 to vector<128x128xf32>
    %34 = arith.select %32, %20, %33 : vector<128x128xi1>, vector<128x128xf32>
    %cst_24 = arith.constant dense<0.000000e+00> : vector<128xf32>
    %35 = vector.multi_reduction <add>, %34, %cst_24 [0] : vector<128x128xf32> to vector<128xf32>
    %36 = vector.shape_cast %35 : vector<128xf32> to vector<1x128xf32>
    %c0_i32 = arith.constant 0 : i32
    %37 = vector.broadcast %c0_i32 : i32 to vector<32x128xi32>
    %38 = arith.cmpi eq, %28, %37 : vector<32x128xi32>
    %39 = vector.shape_cast %36 : vector<1x128xf32> to vector<1x128xf32>
    %40 = vector.broadcast %39 : vector<1x128xf32> to vector<32x128xf32>
    %41 = arith.select %38, %40, %29 : vector<32x128xi1>, vector<32x128xf32>
    %42 = vector.extract_strided_slice %26 {offsets = [1, 0], sizes = [1, 128], strides = [1, 1]} : vector<32x128xi32> to vector<1x128xi32>
    %43 = vector.broadcast %42 : vector<1x128xi32> to vector<128x128xi32>
    %44 = arith.cmpi eq, %27, %43 : vector<128x128xi32>
    %cst_25 = arith.constant 0.000000e+00 : f32
    %45 = vector.broadcast %cst_25 : f32 to vector<128x128xf32>
    %46 = arith.select %44, %20, %45 : vector<128x128xi1>, vector<128x128xf32>
    %cst_26 = arith.constant dense<0.000000e+00> : vector<128xf32>
    %47 = vector.multi_reduction <add>, %46, %cst_26 [0] : vector<128x128xf32> to vector<128xf32>
    %48 = vector.shape_cast %47 : vector<128xf32> to vector<1x128xf32>
    %c1_i32 = arith.constant 1 : i32
    %49 = vector.broadcast %c1_i32 : i32 to vector<32x128xi32>
    %50 = arith.cmpi eq, %28, %49 : vector<32x128xi32>
    %51 = vector.shape_cast %48 : vector<1x128xf32> to vector<1x128xf32>
    %52 = vector.broadcast %51 : vector<1x128xf32> to vector<32x128xf32>
    %53 = arith.select %50, %52, %41 : vector<32x128xi1>, vector<32x128xf32>
    %54 = vector.extract_strided_slice %26 {offsets = [2, 0], sizes = [1, 128], strides = [1, 1]} : vector<32x128xi32> to vector<1x128xi32>
    %55 = vector.broadcast %54 : vector<1x128xi32> to vector<128x128xi32>
    %56 = arith.cmpi eq, %27, %55 : vector<128x128xi32>
    %cst_27 = arith.constant 0.000000e+00 : f32
    %57 = vector.broadcast %cst_27 : f32 to vector<128x128xf32>
    %58 = arith.select %56, %20, %57 : vector<128x128xi1>, vector<128x128xf32>
    %cst_28 = arith.constant dense<0.000000e+00> : vector<128xf32>
    %59 = vector.multi_reduction <add>, %58, %cst_28 [0] : vector<128x128xf32> to vector<128xf32>
    %60 = vector.shape_cast %59 : vector<128xf32> to vector<1x128xf32>
    %c2_i32 = arith.constant 2 : i32
    %61 = vector.broadcast %c2_i32 : i32 to vector<32x128xi32>
    %62 = arith.cmpi eq, %28, %61 : vector<32x128xi32>
    %63 = vector.shape_cast %60 : vector<1x128xf32> to vector<1x128xf32>
    %64 = vector.broadcast %63 : vector<1x128xf32> to vector<32x128xf32>
    %65 = arith.select %62, %64, %53 : vector<32x128xi1>, vector<32x128xf32>
    %66 = vector.extract_strided_slice %26 {offsets = [3, 0], sizes = [1, 128], strides = [1, 1]} : vector<32x128xi32> to vector<1x128xi32>
    %67 = vector.broadcast %66 : vector<1x128xi32> to vector<128x128xi32>
    %68 = arith.cmpi eq, %27, %67 : vector<128x128xi32>
    %cst_29 = arith.constant 0.000000e+00 : f32
    %69 = vector.broadcast %cst_29 : f32 to vector<128x128xf32>
    %70 = arith.select %68, %20, %69 : vector<128x128xi1>, vector<128x128xf32>
    %cst_30 = arith.constant dense<0.000000e+00> : vector<128xf32>
    %71 = vector.multi_reduction <add>, %70, %cst_30 [0] : vector<128x128xf32> to vector<128xf32>
    %72 = vector.shape_cast %71 : vector<128xf32> to vector<1x128xf32>
    %c3_i32 = arith.constant 3 : i32
    %73 = vector.broadcast %c3_i32 : i32 to vector<32x128xi32>
    %74 = arith.cmpi eq, %28, %73 : vector<32x128xi32>
    %75 = vector.shape_cast %72 : vector<1x128xf32> to vector<1x128xf32>
    %76 = vector.broadcast %75 : vector<1x128xf32> to vector<32x128xf32>
    %77 = arith.select %74, %76, %65 : vector<32x128xi1>, vector<32x128xf32>
    %78 = vector.extract_strided_slice %26 {offsets = [4, 0], sizes = [1, 128], strides = [1, 1]} : vector<32x128xi32> to vector<1x128xi32>
    %79 = vector.broadcast %78 : vector<1x128xi32> to vector<128x128xi32>
    %80 = arith.cmpi eq, %27, %79 : vector<128x128xi32>
    %cst_31 = arith.constant 0.000000e+00 : f32
    %81 = vector.broadcast %cst_31 : f32 to vector<128x128xf32>
    %82 = arith.select %80, %20, %81 : vector<128x128xi1>, vector<128x128xf32>
    %cst_32 = arith.constant dense<0.000000e+00> : vector<128xf32>
    %83 = vector.multi_reduction <add>, %82, %cst_32 [0] : vector<128x128xf32> to vector<128xf32>
    %84 = vector.shape_cast %83 : vector<128xf32> to vector<1x128xf32>
    %c4_i32 = arith.constant 4 : i32
    %85 = vector.broadcast %c4_i32 : i32 to vector<32x128xi32>
    %86 = arith.cmpi eq, %28, %85 : vector<32x128xi32>
    %87 = vector.shape_cast %84 : vector<1x128xf32> to vector<1x128xf32>
    %88 = vector.broadcast %87 : vector<1x128xf32> to vector<32x128xf32>
    %89 = arith.select %86, %88, %77 : vector<32x128xi1>, vector<32x128xf32>
    %90 = vector.extract_strided_slice %26 {offsets = [5, 0], sizes = [1, 128], strides = [1, 1]} : vector<32x128xi32> to vector<1x128xi32>
    %91 = vector.broadcast %90 : vector<1x128xi32> to vector<128x128xi32>
    %92 = arith.cmpi eq, %27, %91 : vector<128x128xi32>
    %cst_33 = arith.constant 0.000000e+00 : f32
    %93 = vector.broadcast %cst_33 : f32 to vector<128x128xf32>
    %94 = arith.select %92, %20, %93 : vector<128x128xi1>, vector<128x128xf32>
    %cst_34 = arith.constant dense<0.000000e+00> : vector<128xf32>
    %95 = vector.multi_reduction <add>, %94, %cst_34 [0] : vector<128x128xf32> to vector<128xf32>
    %96 = vector.shape_cast %95 : vector<128xf32> to vector<1x128xf32>
    %c5_i32 = arith.constant 5 : i32
    %97 = vector.broadcast %c5_i32 : i32 to vector<32x128xi32>
    %98 = arith.cmpi eq, %28, %97 : vector<32x128xi32>
    %99 = vector.shape_cast %96 : vector<1x128xf32> to vector<1x128xf32>
    %100 = vector.broadcast %99 : vector<1x128xf32> to vector<32x128xf32>
    %101 = arith.select %98, %100, %89 : vector<32x128xi1>, vector<32x128xf32>
    %102 = vector.extract_strided_slice %26 {offsets = [6, 0], sizes = [1, 128], strides = [1, 1]} : vector<32x128xi32> to vector<1x128xi32>
    %103 = vector.broadcast %102 : vector<1x128xi32> to vector<128x128xi32>
    %104 = arith.cmpi eq, %27, %103 : vector<128x128xi32>
    %cst_35 = arith.constant 0.000000e+00 : f32
    %105 = vector.broadcast %cst_35 : f32 to vector<128x128xf32>
    %106 = arith.select %104, %20, %105 : vector<128x128xi1>, vector<128x128xf32>
    %cst_36 = arith.constant dense<0.000000e+00> : vector<128xf32>
    %107 = vector.multi_reduction <add>, %106, %cst_36 [0] : vector<128x128xf32> to vector<128xf32>
    %108 = vector.shape_cast %107 : vector<128xf32> to vector<1x128xf32>
    %c6_i32 = arith.constant 6 : i32
    %109 = vector.broadcast %c6_i32 : i32 to vector<32x128xi32>
    %110 = arith.cmpi eq, %28, %109 : vector<32x128xi32>
    %111 = vector.shape_cast %108 : vector<1x128xf32> to vector<1x128xf32>
    %112 = vector.broadcast %111 : vector<1x128xf32> to vector<32x128xf32>
    %113 = arith.select %110, %112, %101 : vector<32x128xi1>, vector<32x128xf32>
    %114 = vector.extract_strided_slice %26 {offsets = [7, 0], sizes = [1, 128], strides = [1, 1]} : vector<32x128xi32> to vector<1x128xi32>
    %115 = vector.broadcast %114 : vector<1x128xi32> to vector<128x128xi32>
    %116 = arith.cmpi eq, %27, %115 : vector<128x128xi32>
    %cst_37 = arith.constant 0.000000e+00 : f32
    %117 = vector.broadcast %cst_37 : f32 to vector<128x128xf32>
    %118 = arith.select %116, %20, %117 : vector<128x128xi1>, vector<128x128xf32>
    %cst_38 = arith.constant dense<0.000000e+00> : vector<128xf32>
    %119 = vector.multi_reduction <add>, %118, %cst_38 [0] : vector<128x128xf32> to vector<128xf32>
    %120 = vector.shape_cast %119 : vector<128xf32> to vector<1x128xf32>
    %c7_i32 = arith.constant 7 : i32
    %121 = vector.broadcast %c7_i32 : i32 to vector<32x128xi32>
    %122 = arith.cmpi eq, %28, %121 : vector<32x128xi32>
    %123 = vector.shape_cast %120 : vector<1x128xf32> to vector<1x128xf32>
    %124 = vector.broadcast %123 : vector<1x128xf32> to vector<32x128xf32>
    %125 = arith.select %122, %124, %113 : vector<32x128xi1>, vector<32x128xf32>
    %126 = vector.extract_strided_slice %26 {offsets = [8, 0], sizes = [1, 128], strides = [1, 1]} : vector<32x128xi32> to vector<1x128xi32>
    %127 = vector.broadcast %126 : vector<1x128xi32> to vector<128x128xi32>
    %128 = arith.cmpi eq, %27, %127 : vector<128x128xi32>
    %cst_39 = arith.constant 0.000000e+00 : f32
    %129 = vector.broadcast %cst_39 : f32 to vector<128x128xf32>
    %130 = arith.select %128, %20, %129 : vector<128x128xi1>, vector<128x128xf32>
    %cst_40 = arith.constant dense<0.000000e+00> : vector<128xf32>
    %131 = vector.multi_reduction <add>, %130, %cst_40 [0] : vector<128x128xf32> to vector<128xf32>
    %132 = vector.shape_cast %131 : vector<128xf32> to vector<1x128xf32>
    %c8_i32 = arith.constant 8 : i32
    %133 = vector.broadcast %c8_i32 : i32 to vector<32x128xi32>
    %134 = arith.cmpi eq, %28, %133 : vector<32x128xi32>
    %135 = vector.shape_cast %132 : vector<1x128xf32> to vector<1x128xf32>
    %136 = vector.broadcast %135 : vector<1x128xf32> to vector<32x128xf32>
    %137 = arith.select %134, %136, %125 : vector<32x128xi1>, vector<32x128xf32>
    %138 = vector.extract_strided_slice %26 {offsets = [9, 0], sizes = [1, 128], strides = [1, 1]} : vector<32x128xi32> to vector<1x128xi32>
    %139 = vector.broadcast %138 : vector<1x128xi32> to vector<128x128xi32>
    %140 = arith.cmpi eq, %27, %139 : vector<128x128xi32>
    %cst_41 = arith.constant 0.000000e+00 : f32
    %141 = vector.broadcast %cst_41 : f32 to vector<128x128xf32>
    %142 = arith.select %140, %20, %141 : vector<128x128xi1>, vector<128x128xf32>
    %cst_42 = arith.constant dense<0.000000e+00> : vector<128xf32>
    %143 = vector.multi_reduction <add>, %142, %cst_42 [0] : vector<128x128xf32> to vector<128xf32>
    %144 = vector.shape_cast %143 : vector<128xf32> to vector<1x128xf32>
    %c9_i32 = arith.constant 9 : i32
    %145 = vector.broadcast %c9_i32 : i32 to vector<32x128xi32>
    %146 = arith.cmpi eq, %28, %145 : vector<32x128xi32>
    %147 = vector.shape_cast %144 : vector<1x128xf32> to vector<1x128xf32>
    %148 = vector.broadcast %147 : vector<1x128xf32> to vector<32x128xf32>
    %149 = arith.select %146, %148, %137 : vector<32x128xi1>, vector<32x128xf32>
    %150 = vector.extract_strided_slice %26 {offsets = [10, 0], sizes = [1, 128], strides = [1, 1]} : vector<32x128xi32> to vector<1x128xi32>
    %151 = vector.broadcast %150 : vector<1x128xi32> to vector<128x128xi32>
    %152 = arith.cmpi eq, %27, %151 : vector<128x128xi32>
    %cst_43 = arith.constant 0.000000e+00 : f32
    %153 = vector.broadcast %cst_43 : f32 to vector<128x128xf32>
    %154 = arith.select %152, %20, %153 : vector<128x128xi1>, vector<128x128xf32>
    %cst_44 = arith.constant dense<0.000000e+00> : vector<128xf32>
    %155 = vector.multi_reduction <add>, %154, %cst_44 [0] : vector<128x128xf32> to vector<128xf32>
    %156 = vector.shape_cast %155 : vector<128xf32> to vector<1x128xf32>
    %c10_i32 = arith.constant 10 : i32
    %157 = vector.broadcast %c10_i32 : i32 to vector<32x128xi32>
    %158 = arith.cmpi eq, %28, %157 : vector<32x128xi32>
    %159 = vector.shape_cast %156 : vector<1x128xf32> to vector<1x128xf32>
    %160 = vector.broadcast %159 : vector<1x128xf32> to vector<32x128xf32>
    %161 = arith.select %158, %160, %149 : vector<32x128xi1>, vector<32x128xf32>
    %162 = vector.extract_strided_slice %26 {offsets = [11, 0], sizes = [1, 128], strides = [1, 1]} : vector<32x128xi32> to vector<1x128xi32>
    %163 = vector.broadcast %162 : vector<1x128xi32> to vector<128x128xi32>
    %164 = arith.cmpi eq, %27, %163 : vector<128x128xi32>
    %cst_45 = arith.constant 0.000000e+00 : f32
    %165 = vector.broadcast %cst_45 : f32 to vector<128x128xf32>
    %166 = arith.select %164, %20, %165 : vector<128x128xi1>, vector<128x128xf32>
    %cst_46 = arith.constant dense<0.000000e+00> : vector<128xf32>
    %167 = vector.multi_reduction <add>, %166, %cst_46 [0] : vector<128x128xf32> to vector<128xf32>
    %168 = vector.shape_cast %167 : vector<128xf32> to vector<1x128xf32>
    %c11_i32 = arith.constant 11 : i32
    %169 = vector.broadcast %c11_i32 : i32 to vector<32x128xi32>
    %170 = arith.cmpi eq, %28, %169 : vector<32x128xi32>
    %171 = vector.shape_cast %168 : vector<1x128xf32> to vector<1x128xf32>
    %172 = vector.broadcast %171 : vector<1x128xf32> to vector<32x128xf32>
    %173 = arith.select %170, %172, %161 : vector<32x128xi1>, vector<32x128xf32>
    %174 = vector.extract_strided_slice %26 {offsets = [12, 0], sizes = [1, 128], strides = [1, 1]} : vector<32x128xi32> to vector<1x128xi32>
    %175 = vector.broadcast %174 : vector<1x128xi32> to vector<128x128xi32>
    %176 = arith.cmpi eq, %27, %175 : vector<128x128xi32>
    %cst_47 = arith.constant 0.000000e+00 : f32
    %177 = vector.broadcast %cst_47 : f32 to vector<128x128xf32>
    %178 = arith.select %176, %20, %177 : vector<128x128xi1>, vector<128x128xf32>
    %cst_48 = arith.constant dense<0.000000e+00> : vector<128xf32>
    %179 = vector.multi_reduction <add>, %178, %cst_48 [0] : vector<128x128xf32> to vector<128xf32>
    %180 = vector.shape_cast %179 : vector<128xf32> to vector<1x128xf32>
    %c12_i32 = arith.constant 12 : i32
    %181 = vector.broadcast %c12_i32 : i32 to vector<32x128xi32>
    %182 = arith.cmpi eq, %28, %181 : vector<32x128xi32>
    %183 = vector.shape_cast %180 : vector<1x128xf32> to vector<1x128xf32>
    %184 = vector.broadcast %183 : vector<1x128xf32> to vector<32x128xf32>
    %185 = arith.select %182, %184, %173 : vector<32x128xi1>, vector<32x128xf32>
    %186 = vector.extract_strided_slice %26 {offsets = [13, 0], sizes = [1, 128], strides = [1, 1]} : vector<32x128xi32> to vector<1x128xi32>
    %187 = vector.broadcast %186 : vector<1x128xi32> to vector<128x128xi32>
    %188 = arith.cmpi eq, %27, %187 : vector<128x128xi32>
    %cst_49 = arith.constant 0.000000e+00 : f32
    %189 = vector.broadcast %cst_49 : f32 to vector<128x128xf32>
    %190 = arith.select %188, %20, %189 : vector<128x128xi1>, vector<128x128xf32>
    %cst_50 = arith.constant dense<0.000000e+00> : vector<128xf32>
    %191 = vector.multi_reduction <add>, %190, %cst_50 [0] : vector<128x128xf32> to vector<128xf32>
    %192 = vector.shape_cast %191 : vector<128xf32> to vector<1x128xf32>
    %c13_i32 = arith.constant 13 : i32
    %193 = vector.broadcast %c13_i32 : i32 to vector<32x128xi32>
    %194 = arith.cmpi eq, %28, %193 : vector<32x128xi32>
    %195 = vector.shape_cast %192 : vector<1x128xf32> to vector<1x128xf32>
    %196 = vector.broadcast %195 : vector<1x128xf32> to vector<32x128xf32>
    %197 = arith.select %194, %196, %185 : vector<32x128xi1>, vector<32x128xf32>
    %198 = vector.extract_strided_slice %26 {offsets = [14, 0], sizes = [1, 128], strides = [1, 1]} : vector<32x128xi32> to vector<1x128xi32>
    %199 = vector.broadcast %198 : vector<1x128xi32> to vector<128x128xi32>
    %200 = arith.cmpi eq, %27, %199 : vector<128x128xi32>
    %cst_51 = arith.constant 0.000000e+00 : f32
    %201 = vector.broadcast %cst_51 : f32 to vector<128x128xf32>
    %202 = arith.select %200, %20, %201 : vector<128x128xi1>, vector<128x128xf32>
    %cst_52 = arith.constant dense<0.000000e+00> : vector<128xf32>
    %203 = vector.multi_reduction <add>, %202, %cst_52 [0] : vector<128x128xf32> to vector<128xf32>
    %204 = vector.shape_cast %203 : vector<128xf32> to vector<1x128xf32>
    %c14_i32 = arith.constant 14 : i32
    %205 = vector.broadcast %c14_i32 : i32 to vector<32x128xi32>
    %206 = arith.cmpi eq, %28, %205 : vector<32x128xi32>
    %207 = vector.shape_cast %204 : vector<1x128xf32> to vector<1x128xf32>
    %208 = vector.broadcast %207 : vector<1x128xf32> to vector<32x128xf32>
    %209 = arith.select %206, %208, %197 : vector<32x128xi1>, vector<32x128xf32>
    %210 = vector.extract_strided_slice %26 {offsets = [15, 0], sizes = [1, 128], strides = [1, 1]} : vector<32x128xi32> to vector<1x128xi32>
    %211 = vector.broadcast %210 : vector<1x128xi32> to vector<128x128xi32>
    %212 = arith.cmpi eq, %27, %211 : vector<128x128xi32>
    %cst_53 = arith.constant 0.000000e+00 : f32
    %213 = vector.broadcast %cst_53 : f32 to vector<128x128xf32>
    %214 = arith.select %212, %20, %213 : vector<128x128xi1>, vector<128x128xf32>
    %cst_54 = arith.constant dense<0.000000e+00> : vector<128xf32>
    %215 = vector.multi_reduction <add>, %214, %cst_54 [0] : vector<128x128xf32> to vector<128xf32>
    %216 = vector.shape_cast %215 : vector<128xf32> to vector<1x128xf32>
    %c15_i32 = arith.constant 15 : i32
    %217 = vector.broadcast %c15_i32 : i32 to vector<32x128xi32>
    %218 = arith.cmpi eq, %28, %217 : vector<32x128xi32>
    %219 = vector.shape_cast %216 : vector<1x128xf32> to vector<1x128xf32>
    %220 = vector.broadcast %219 : vector<1x128xf32> to vector<32x128xf32>
    %221 = arith.select %218, %220, %209 : vector<32x128xi1>, vector<32x128xf32>
    %222 = vector.extract_strided_slice %26 {offsets = [16, 0], sizes = [1, 128], strides = [1, 1]} : vector<32x128xi32> to vector<1x128xi32>
    %223 = vector.broadcast %222 : vector<1x128xi32> to vector<128x128xi32>
    %224 = arith.cmpi eq, %27, %223 : vector<128x128xi32>
    %cst_55 = arith.constant 0.000000e+00 : f32
    %225 = vector.broadcast %cst_55 : f32 to vector<128x128xf32>
    %226 = arith.select %224, %20, %225 : vector<128x128xi1>, vector<128x128xf32>
    %cst_56 = arith.constant dense<0.000000e+00> : vector<128xf32>
    %227 = vector.multi_reduction <add>, %226, %cst_56 [0] : vector<128x128xf32> to vector<128xf32>
    %228 = vector.shape_cast %227 : vector<128xf32> to vector<1x128xf32>
    %c16_i32 = arith.constant 16 : i32
    %229 = vector.broadcast %c16_i32 : i32 to vector<32x128xi32>
    %230 = arith.cmpi eq, %28, %229 : vector<32x128xi32>
    %231 = vector.shape_cast %228 : vector<1x128xf32> to vector<1x128xf32>
    %232 = vector.broadcast %231 : vector<1x128xf32> to vector<32x128xf32>
    %233 = arith.select %230, %232, %221 : vector<32x128xi1>, vector<32x128xf32>
    %234 = vector.extract_strided_slice %26 {offsets = [17, 0], sizes = [1, 128], strides = [1, 1]} : vector<32x128xi32> to vector<1x128xi32>
    %235 = vector.broadcast %234 : vector<1x128xi32> to vector<128x128xi32>
    %236 = arith.cmpi eq, %27, %235 : vector<128x128xi32>
    %cst_57 = arith.constant 0.000000e+00 : f32
    %237 = vector.broadcast %cst_57 : f32 to vector<128x128xf32>
    %238 = arith.select %236, %20, %237 : vector<128x128xi1>, vector<128x128xf32>
    %cst_58 = arith.constant dense<0.000000e+00> : vector<128xf32>
    %239 = vector.multi_reduction <add>, %238, %cst_58 [0] : vector<128x128xf32> to vector<128xf32>
    %240 = vector.shape_cast %239 : vector<128xf32> to vector<1x128xf32>
    %c17_i32 = arith.constant 17 : i32
    %241 = vector.broadcast %c17_i32 : i32 to vector<32x128xi32>
    %242 = arith.cmpi eq, %28, %241 : vector<32x128xi32>
    %243 = vector.shape_cast %240 : vector<1x128xf32> to vector<1x128xf32>
    %244 = vector.broadcast %243 : vector<1x128xf32> to vector<32x128xf32>
    %245 = arith.select %242, %244, %233 : vector<32x128xi1>, vector<32x128xf32>
    %246 = vector.extract_strided_slice %26 {offsets = [18, 0], sizes = [1, 128], strides = [1, 1]} : vector<32x128xi32> to vector<1x128xi32>
    %247 = vector.broadcast %246 : vector<1x128xi32> to vector<128x128xi32>
    %248 = arith.cmpi eq, %27, %247 : vector<128x128xi32>
    %cst_59 = arith.constant 0.000000e+00 : f32
    %249 = vector.broadcast %cst_59 : f32 to vector<128x128xf32>
    %250 = arith.select %248, %20, %249 : vector<128x128xi1>, vector<128x128xf32>
    %cst_60 = arith.constant dense<0.000000e+00> : vector<128xf32>
    %251 = vector.multi_reduction <add>, %250, %cst_60 [0] : vector<128x128xf32> to vector<128xf32>
    %252 = vector.shape_cast %251 : vector<128xf32> to vector<1x128xf32>
    %c18_i32 = arith.constant 18 : i32
    %253 = vector.broadcast %c18_i32 : i32 to vector<32x128xi32>
    %254 = arith.cmpi eq, %28, %253 : vector<32x128xi32>
    %255 = vector.shape_cast %252 : vector<1x128xf32> to vector<1x128xf32>
    %256 = vector.broadcast %255 : vector<1x128xf32> to vector<32x128xf32>
    %257 = arith.select %254, %256, %245 : vector<32x128xi1>, vector<32x128xf32>
    %258 = vector.extract_strided_slice %26 {offsets = [19, 0], sizes = [1, 128], strides = [1, 1]} : vector<32x128xi32> to vector<1x128xi32>
    %259 = vector.broadcast %258 : vector<1x128xi32> to vector<128x128xi32>
    %260 = arith.cmpi eq, %27, %259 : vector<128x128xi32>
    %cst_61 = arith.constant 0.000000e+00 : f32
    %261 = vector.broadcast %cst_61 : f32 to vector<128x128xf32>
    %262 = arith.select %260, %20, %261 : vector<128x128xi1>, vector<128x128xf32>
    %cst_62 = arith.constant dense<0.000000e+00> : vector<128xf32>
    %263 = vector.multi_reduction <add>, %262, %cst_62 [0] : vector<128x128xf32> to vector<128xf32>
    %264 = vector.shape_cast %263 : vector<128xf32> to vector<1x128xf32>
    %c19_i32 = arith.constant 19 : i32
    %265 = vector.broadcast %c19_i32 : i32 to vector<32x128xi32>
    %266 = arith.cmpi eq, %28, %265 : vector<32x128xi32>
    %267 = vector.shape_cast %264 : vector<1x128xf32> to vector<1x128xf32>
    %268 = vector.broadcast %267 : vector<1x128xf32> to vector<32x128xf32>
    %269 = arith.select %266, %268, %257 : vector<32x128xi1>, vector<32x128xf32>
    %270 = vector.extract_strided_slice %26 {offsets = [20, 0], sizes = [1, 128], strides = [1, 1]} : vector<32x128xi32> to vector<1x128xi32>
    %271 = vector.broadcast %270 : vector<1x128xi32> to vector<128x128xi32>
    %272 = arith.cmpi eq, %27, %271 : vector<128x128xi32>
    %cst_63 = arith.constant 0.000000e+00 : f32
    %273 = vector.broadcast %cst_63 : f32 to vector<128x128xf32>
    %274 = arith.select %272, %20, %273 : vector<128x128xi1>, vector<128x128xf32>
    %cst_64 = arith.constant dense<0.000000e+00> : vector<128xf32>
    %275 = vector.multi_reduction <add>, %274, %cst_64 [0] : vector<128x128xf32> to vector<128xf32>
    %276 = vector.shape_cast %275 : vector<128xf32> to vector<1x128xf32>
    %c20_i32 = arith.constant 20 : i32
    %277 = vector.broadcast %c20_i32 : i32 to vector<32x128xi32>
    %278 = arith.cmpi eq, %28, %277 : vector<32x128xi32>
    %279 = vector.shape_cast %276 : vector<1x128xf32> to vector<1x128xf32>
    %280 = vector.broadcast %279 : vector<1x128xf32> to vector<32x128xf32>
    %281 = arith.select %278, %280, %269 : vector<32x128xi1>, vector<32x128xf32>
    %282 = vector.extract_strided_slice %26 {offsets = [21, 0], sizes = [1, 128], strides = [1, 1]} : vector<32x128xi32> to vector<1x128xi32>
    %283 = vector.broadcast %282 : vector<1x128xi32> to vector<128x128xi32>
    %284 = arith.cmpi eq, %27, %283 : vector<128x128xi32>
    %cst_65 = arith.constant 0.000000e+00 : f32
    %285 = vector.broadcast %cst_65 : f32 to vector<128x128xf32>
    %286 = arith.select %284, %20, %285 : vector<128x128xi1>, vector<128x128xf32>
    %cst_66 = arith.constant dense<0.000000e+00> : vector<128xf32>
    %287 = vector.multi_reduction <add>, %286, %cst_66 [0] : vector<128x128xf32> to vector<128xf32>
    %288 = vector.shape_cast %287 : vector<128xf32> to vector<1x128xf32>
    %c21_i32 = arith.constant 21 : i32
    %289 = vector.broadcast %c21_i32 : i32 to vector<32x128xi32>
    %290 = arith.cmpi eq, %28, %289 : vector<32x128xi32>
    %291 = vector.shape_cast %288 : vector<1x128xf32> to vector<1x128xf32>
    %292 = vector.broadcast %291 : vector<1x128xf32> to vector<32x128xf32>
    %293 = arith.select %290, %292, %281 : vector<32x128xi1>, vector<32x128xf32>
    %294 = vector.extract_strided_slice %26 {offsets = [22, 0], sizes = [1, 128], strides = [1, 1]} : vector<32x128xi32> to vector<1x128xi32>
    %295 = vector.broadcast %294 : vector<1x128xi32> to vector<128x128xi32>
    %296 = arith.cmpi eq, %27, %295 : vector<128x128xi32>
    %cst_67 = arith.constant 0.000000e+00 : f32
    %297 = vector.broadcast %cst_67 : f32 to vector<128x128xf32>
    %298 = arith.select %296, %20, %297 : vector<128x128xi1>, vector<128x128xf32>
    %cst_68 = arith.constant dense<0.000000e+00> : vector<128xf32>
    %299 = vector.multi_reduction <add>, %298, %cst_68 [0] : vector<128x128xf32> to vector<128xf32>
    %300 = vector.shape_cast %299 : vector<128xf32> to vector<1x128xf32>
    %c22_i32 = arith.constant 22 : i32
    %301 = vector.broadcast %c22_i32 : i32 to vector<32x128xi32>
    %302 = arith.cmpi eq, %28, %301 : vector<32x128xi32>
    %303 = vector.shape_cast %300 : vector<1x128xf32> to vector<1x128xf32>
    %304 = vector.broadcast %303 : vector<1x128xf32> to vector<32x128xf32>
    %305 = arith.select %302, %304, %293 : vector<32x128xi1>, vector<32x128xf32>
    %306 = vector.extract_strided_slice %26 {offsets = [23, 0], sizes = [1, 128], strides = [1, 1]} : vector<32x128xi32> to vector<1x128xi32>
    %307 = vector.broadcast %306 : vector<1x128xi32> to vector<128x128xi32>
    %308 = arith.cmpi eq, %27, %307 : vector<128x128xi32>
    %cst_69 = arith.constant 0.000000e+00 : f32
    %309 = vector.broadcast %cst_69 : f32 to vector<128x128xf32>
    %310 = arith.select %308, %20, %309 : vector<128x128xi1>, vector<128x128xf32>
    %cst_70 = arith.constant dense<0.000000e+00> : vector<128xf32>
    %311 = vector.multi_reduction <add>, %310, %cst_70 [0] : vector<128x128xf32> to vector<128xf32>
    %312 = vector.shape_cast %311 : vector<128xf32> to vector<1x128xf32>
    %c23_i32 = arith.constant 23 : i32
    %313 = vector.broadcast %c23_i32 : i32 to vector<32x128xi32>
    %314 = arith.cmpi eq, %28, %313 : vector<32x128xi32>
    %315 = vector.shape_cast %312 : vector<1x128xf32> to vector<1x128xf32>
    %316 = vector.broadcast %315 : vector<1x128xf32> to vector<32x128xf32>
    %317 = arith.select %314, %316, %305 : vector<32x128xi1>, vector<32x128xf32>
    %318 = vector.extract_strided_slice %26 {offsets = [24, 0], sizes = [1, 128], strides = [1, 1]} : vector<32x128xi32> to vector<1x128xi32>
    %319 = vector.broadcast %318 : vector<1x128xi32> to vector<128x128xi32>
    %320 = arith.cmpi eq, %27, %319 : vector<128x128xi32>
    %cst_71 = arith.constant 0.000000e+00 : f32
    %321 = vector.broadcast %cst_71 : f32 to vector<128x128xf32>
    %322 = arith.select %320, %20, %321 : vector<128x128xi1>, vector<128x128xf32>
    %cst_72 = arith.constant dense<0.000000e+00> : vector<128xf32>
    %323 = vector.multi_reduction <add>, %322, %cst_72 [0] : vector<128x128xf32> to vector<128xf32>
    %324 = vector.shape_cast %323 : vector<128xf32> to vector<1x128xf32>
    %c24_i32 = arith.constant 24 : i32
    %325 = vector.broadcast %c24_i32 : i32 to vector<32x128xi32>
    %326 = arith.cmpi eq, %28, %325 : vector<32x128xi32>
    %327 = vector.shape_cast %324 : vector<1x128xf32> to vector<1x128xf32>
    %328 = vector.broadcast %327 : vector<1x128xf32> to vector<32x128xf32>
    %329 = arith.select %326, %328, %317 : vector<32x128xi1>, vector<32x128xf32>
    %330 = vector.extract_strided_slice %26 {offsets = [25, 0], sizes = [1, 128], strides = [1, 1]} : vector<32x128xi32> to vector<1x128xi32>
    %331 = vector.broadcast %330 : vector<1x128xi32> to vector<128x128xi32>
    %332 = arith.cmpi eq, %27, %331 : vector<128x128xi32>
    %cst_73 = arith.constant 0.000000e+00 : f32
    %333 = vector.broadcast %cst_73 : f32 to vector<128x128xf32>
    %334 = arith.select %332, %20, %333 : vector<128x128xi1>, vector<128x128xf32>
    %cst_74 = arith.constant dense<0.000000e+00> : vector<128xf32>
    %335 = vector.multi_reduction <add>, %334, %cst_74 [0] : vector<128x128xf32> to vector<128xf32>
    %336 = vector.shape_cast %335 : vector<128xf32> to vector<1x128xf32>
    %c25_i32 = arith.constant 25 : i32
    %337 = vector.broadcast %c25_i32 : i32 to vector<32x128xi32>
    %338 = arith.cmpi eq, %28, %337 : vector<32x128xi32>
    %339 = vector.shape_cast %336 : vector<1x128xf32> to vector<1x128xf32>
    %340 = vector.broadcast %339 : vector<1x128xf32> to vector<32x128xf32>
    %341 = arith.select %338, %340, %329 : vector<32x128xi1>, vector<32x128xf32>
    %342 = vector.broadcast %25 : vector<1x128xf32> to vector<32x128xf32>
    %343 = arith.addf %341, %342 : vector<32x128xf32>
    %cst_75 = arith.constant 0.176776692 : f32
    %344 = vector.broadcast %cst_75 : f32 to vector<32x128xf32>
    %345 = arith.mulf %343, %344 : vector<32x128xf32>
    %c0_76 = arith.constant 0 : index
    %c0_77 = arith.constant 0 : index
    %346 = vector.load %arg10[%c0_76, %c0_77] : memref<32x128xf32, #tpu.memory_space<vmem>>, vector<32x128xf32>
    tpu.vector_store %arg10[%c0_76, %c0_77], %345 {strides = array<i32>} : memref<32x128xf32, #tpu.memory_space<vmem>>, vector<32x128xf32>,
    %c26_i32 = arith.constant 26 : i32
    %347 = vector.broadcast %c26_i32 : i32 to vector<32x128xi32>
    %348 = arith.cmpi slt, %28, %347 : vector<32x128xi32>
    %cst_78 = arith.constant -1.000000e+30 : f32
    %349 = vector.broadcast %cst_78 : f32 to vector<32x128xf32>
    %350 = arith.select %348, %345, %349 : vector<32x128xi1>, vector<32x128xf32>
    %cst_79 = arith.constant dense<0xFF800000> : vector<128xf32>
    %351 = vector.multi_reduction <maximumf>, %350, %cst_79 [0] : vector<32x128xf32> to vector<128xf32>
    %352 = vector.shape_cast %351 : vector<128xf32> to vector<1x128xf32>
    %353 = vector.broadcast %352 : vector<1x128xf32> to vector<32x128xf32>
    %354 = arith.subf %350, %353 : vector<32x128xf32>
    %355 = math.exp %354 : vector<32x128xf32>
    %cst_80 = arith.constant dense<0.000000e+00> : vector<128xf32>
    %356 = vector.multi_reduction <add>, %355, %cst_80 [0] : vector<32x128xf32> to vector<128xf32>
    %357 = vector.shape_cast %356 : vector<128xf32> to vector<1x128xf32>
    %358 = tpu.reciprocal %357 {approx = true} : vector<1x128xf32> -> vector<1x128xf32>
    %359 = vector.broadcast %358 : vector<1x128xf32> to vector<32x128xf32>
    %360 = arith.mulf %355, %359 : vector<32x128xf32>
    %cst_81 = arith.constant dense<0xFF800000> : vector<128xf32>
    %361 = vector.multi_reduction <maximumf>, %360, %cst_81 [0] : vector<32x128xf32> to vector<128xf32>
    %362 = vector.shape_cast %361 : vector<128xf32> to vector<1x128xf32>
    %cst_82 = arith.constant 9.99999996E-13 : f32
    %363 = vector.broadcast %cst_82 : f32 to vector<1x128xf32>
    %364 = arith.maximumf %362, %363 : vector<1x128xf32>
    %365 = tpu.reciprocal %364 {approx = true} : vector<1x128xf32> -> vector<1x128xf32>
    %366 = vector.broadcast %365 : vector<1x128xf32> to vector<32x128xf32>
    %367 = arith.mulf %360, %366 : vector<32x128xf32>
    %c0_83 = arith.constant 0 : index
    %c0_84 = arith.constant 0 : index
    %368 = vector.load %arg11[%c0_83, %c0_84] : memref<32x128xf32, #tpu.memory_space<vmem>>, vector<32x128xf32>
    tpu.vector_store %arg11[%c0_83, %c0_84], %367 {strides = array<i32>} : memref<32x128xf32, #tpu.memory_space<vmem>>, vector<32x128xf32>,
    return
  }
  func.func @transform_0(%arg0: i32) -> (i32, i32) {
    %c0_i32 = arith.constant 0 : i32
    %c0_i32_0 = arith.constant 0 : i32
    %c0_i32_1 = arith.constant 0 : i32
    return %c0_i32, %c0_i32_0 : i32, i32
  }
  func.func @transform_1(%arg0: i32) -> (i32, i32) {
    %c0_i32 = arith.constant 0 : i32
    %c0_i32_0 = arith.constant 0 : i32
    %c0_i32_1 = arith.constant 0 : i32
    return %c0_i32, %c0_i32_0 : i32, i32
  }
  func.func @transform_2(%arg0: i32) -> (i32, i32) {
    %c0_i32 = arith.constant 0 : i32
    %c0_i32_0 = arith.constant 0 : i32
    %c0_i32_1 = arith.constant 0 : i32
    return %c0_i32, %c0_i32_0 : i32, i32
  }
  func.func @transform_3(%arg0: i32) -> (i32, i32) {
    %c0_i32 = arith.constant 0 : i32
    %c0_i32_0 = arith.constant 0 : i32
    %c0_i32_1 = arith.constant 0 : i32
    return %c0_i32, %c0_i32_0 : i32, i32
  }
  func.func @transform_4(%arg0: i32) -> (i32, i32) {
    %c0_i32 = arith.constant 0 : i32
    %c0_i32_0 = arith.constant 0 : i32
    %c0_i32_1 = arith.constant 0 : i32
    return %c0_i32, %c0_i32_0 : i32, i32
  }
  func.func @transform_5(%arg0: i32) -> (i32, i32) {
    %c0_i32 = arith.constant 0 : i32
    %c0_i32_0 = arith.constant 0 : i32
    %c0_i32_1 = arith.constant 0 : i32
    return %c0_i32, %c0_i32_0 : i32, i32
  }
  func.func @transform_6(%arg0: i32) -> (i32, i32) {
    %c0_i32 = arith.constant 0 : i32
    %c0_i32_0 = arith.constant 0 : i32
    %c0_i32_1 = arith.constant 0 : i32
    return %c0_i32, %c0_i32_0 : i32, i32
  }
  func.func @transform_7(%arg0: i32) -> (i32, i32) {
    %c0_i32 = arith.constant 0 : i32
    %c0_i32_0 = arith.constant 0 : i32
    %c0_i32_1 = arith.constant 0 : i32
    return %c0_i32, %c0_i32_0 : i32, i32
  }
  func.func @transform_8(%arg0: i32) -> (i32, i32) {
    %c0_i32 = arith.constant 0 : i32
    %c0_i32_0 = arith.constant 0 : i32
    %c0_i32_1 = arith.constant 0 : i32
    return %c0_i32, %c0_i32_0 : i32, i32
  }
  func.func @transform_9(%arg0: i32) -> (i32, i32) {
    %c0_i32 = arith.constant 0 : i32
    %c0_i32_0 = arith.constant 0 : i32
    %c0_i32_1 = arith.constant 0 : i32
    return %c0_i32, %c0_i32_0 : i32, i32
  }
  func.func @transform_10(%arg0: i32) -> (i32, i32) {
    %c0_i32 = arith.constant 0 : i32
    %c0_i32_0 = arith.constant 0 : i32
    %c0_i32_1 = arith.constant 0 : i32
    return %c0_i32, %c0_i32_0 : i32, i32
  }
}

</mosaic_0001>

<llo_original>
// kernel: scene_net_forward.1
$region0: #{scene_net_forward.1}
  #allocation0 [shape = 'u32[]', space=smem, size = 0x4, offset = 0x4, fixed_abs, tag = 'smem constant byte address 0x4 - core index']
  #allocation1 [shape = 'u32[72,128]{1,0:T(1,128)}', space=vmem, size = 0x9000, scoped, tag = 'internal scratch']
  #allocation2 [shape = 'f32[1,1]{1,0:T(1,128)S(1)}', space=vmem, size = 0x200, scoped, tag = 'scoped memory for scene_net_forward.1']
  %s0 = inlined_call_operand.vmem [shape: f32[128,27], index: 0, kind: input, shape index: {}]
  %s1 = inlined_call_operand.vmem [shape: f32[27,32], index: 1, kind: input, shape index: {}]
  %s2 = inlined_call_operand.vmem [shape: f32[1,32], index: 2, kind: input, shape index: {}]
  %s3 = inlined_call_operand.vmem [shape: f32[128,128], index: 3, kind: input, shape index: {}]
  %s4 = inlined_call_operand.vmem [shape: f32[32,32], index: 4, kind: input, shape index: {}]
  %s5 = inlined_call_operand.vmem [shape: f32[1,32], index: 5, kind: input, shape index: {}]
  %s6 = inlined_call_operand.vmem [shape: f32[1,32], index: 6, kind: input, shape index: {}]
  %s7 = inlined_call_operand.<no memory space> [shape: f32[1,1], index: 7, kind: input, shape index: {}]
  %s8 = inlined_call_operand.vmem [shape: s32[32,128], index: 8, kind: input, shape index: {}]
  %s9 = inlined_call_operand.vmem [shape: f32[32,128], index: 9, kind: output, shape index: {0}]
  %s10 = inlined_call_operand.vmem [shape: f32[32,128], index: 10, kind: output, shape index: {1}]
  %11 = xla_tuple %s9, %s10
  %s12 = sld [smem:[#allocation0]]
  $region54: #{scene_net_forward.1} parent=0
    _
  %s14 = ssub.s32 1, %s12
  %s15 = scalar_select 0, %s14, %s12
  %v16 = vstv %s7
  %17 = vst [vmem:[#allocation2] sm:$0x1] %v16
  // Predicated region
  $region2: #{scene_net_forward.1} parent=0 // pred_check
    _
  $region3: #{scene_net_forward.1} parent=0 // pred_check_branch
    %19 = sbr.rel (0) target = $region5
  $region4: #{scene_net_forward.1} parent=0 // pred_region
    _
  $region5: #{scene_net_forward.1} parent=0 // pred_fallthru
    _
  // Predicated region
  $region6: #{scene_net_forward.1} parent=0 // pred_check
    _
  $region7: #{scene_net_forward.1} parent=0 // pred_check_branch
    %21 = sbr.rel (0) target = $region9
  $region8: #{scene_net_forward.1} parent=0 // pred_region
    _
  $region9: #{scene_net_forward.1} parent=0 // pred_fallthru
    _
  // Predicated region
  $region10: #{scene_net_forward.1} parent=0 // pred_check
    _
  $region11: #{scene_net_forward.1} parent=0 // pred_check_branch
    %23 = sbr.rel (0) target = $region13
  $region12: #{scene_net_forward.1} parent=0 // pred_region
    _
  $region13: #{scene_net_forward.1} parent=0 // pred_fallthru
    _
  // Predicated region
  $region14: #{scene_net_forward.1} parent=0 // pred_check
    _
  $region15: #{scene_net_forward.1} parent=0 // pred_check_branch
    %25 = sbr.rel (0) target = $region17
  $region16: #{scene_net_forward.1} parent=0 // pred_region
    _
  $region17: #{scene_net_forward.1} parent=0 // pred_fallthru
    _
  // Predicated region
  $region18: #{scene_net_forward.1} parent=0 // pred_check
    _
  $region19: #{scene_net_forward.1} parent=0 // pred_check_branch
    %27 = sbr.rel (0) target = $region21
  $region20: #{scene_net_forward.1} parent=0 // pred_region
    _
  $region21: #{scene_net_forward.1} parent=0 // pred_fallthru
    _
  // Predicated region
  $region22: #{scene_net_forward.1} parent=0 // pred_check
    _
  $region23: #{scene_net_forward.1} parent=0 // pred_check_branch
    %29 = sbr.rel (0) target = $region25
  $region24: #{scene_net_forward.1} parent=0 // pred_region
    _
  $region25: #{scene_net_forward.1} parent=0 // pred_fallthru
    _
  // Predicated region
  $region26: #{scene_net_forward.1} parent=0 // pred_check
    _
  $region27: #{scene_net_forward.1} parent=0 // pred_check_branch
    %31 = sbr.rel (0) target = $region29
  $region28: #{scene_net_forward.1} parent=0 // pred_region
    _
  $region29: #{scene_net_forward.1} parent=0 // pred_fallthru
    _
  // Predicated region
  $region30: #{scene_net_forward.1} parent=0 // pred_check
    _
  $region31: #{scene_net_forward.1} parent=0 // pred_check_branch
    %33 = sbr.rel (0) target = $region33
  $region32: #{scene_net_forward.1} parent=0 // pred_region
    _
  $region33: #{scene_net_forward.1} parent=0 // pred_fallthru
    _
  // Predicated region
  $region34: #{scene_net_forward.1} parent=0 // pred_check
    _
  $region35: #{scene_net_forward.1} parent=0 // pred_check_branch
    %35 = sbr.rel (0) target = $region37
  $region36: #{scene_net_forward.1} parent=0 // pred_region
    _
  $region37: #{scene_net_forward.1} parent=0 // pred_fallthru
    _
  %v36 = vld [vmem:[%s0] sm:$0xff]
  %v37 = vld [vmem:[%s0 + $0x8] sm:$0xff]
  %v38 = vld [vmem:[%s0 + $0x10] sm:$0xff]
  %v39 = vld [vmem:[%s0 + $0x18] sm:$0xff]
  %v40 = vld [vmem:[%s0 + $0x20] sm:$0xff]
  %v41 = vld [vmem:[%s0 + $0x28] sm:$0xff]
  %v42 = vld [vmem:[%s0 + $0x30] sm:$0xff]
  %v43 = vld [vmem:[%s0 + $0x38] sm:$0xff]
  %v44 = vld [vmem:[%s0 + $0x40] sm:$0xff]
  %v45 = vld [vmem:[%s0 + $0x48] sm:$0xff]
  %v46 = vld [vmem:[%s0 + $0x50] sm:$0xff]
  %v47 = vld [vmem:[%s0 + $0x58] sm:$0xff]
  %v48 = vld [vmem:[%s0 + $0x60] sm:$0xff]
  %v49 = vld [vmem:[%s0 + $0x68] sm:$0xff]
  %v50 = vld [vmem:[%s0 + $0x70] sm:$0xff]
  %v51 = vld [vmem:[%s0 + $0x78] sm:$0xff]
  %v52 = vld [vmem:[%s1] sm:$0xff]
  %v53 = vld [vmem:[%s1 + $0x8] sm:$0xff]
  %v54 = vld [vmem:[%s1 + $0x10] sm:$0xff]
  %v55 = vld [vmem:[%s1 + $0x18] sm:$0x7]
  %v56 = vld [vmem:[%s2] sm:$0x1]
  %v58 = vperm.slane %v56, 0
  %vm60 = vcmask 220160
  %v62 = vsel %vm60, %v36, 0
  %v65 = vsel %vm60, %v37, 0
  %v68 = vsel %vm60, %v38, 0
  %v71 = vsel %vm60, %v39, 0
  %v74 = vsel %vm60, %v40, 0
  %v77 = vsel %vm60, %v41, 0
  %v80 = vsel %vm60, %v42, 0
  %v83 = vsel %vm60, %v43, 0
  %v86 = vsel %vm60, %v44, 0
  %v89 = vsel %vm60, %v45, 0
  %v92 = vsel %vm60, %v46, 0
  %v95 = vsel %vm60, %v47, 0
  %v98 = vsel %vm60, %v48, 0
  %v101 = vsel %vm60, %v49, 0
  %v104 = vsel %vm60, %v50, 0
  %v107 = vsel %vm60, %v51, 0
  %vm109 = vcmask 1042432
  %v111 = vsel %vm109, %v55, 0
  %113 = vmatpush.msra.mxu0 0.0
  %114 = vmatpush.msra.mxu0 0.0
  %115 = vmatpush.msra.mxu0 0.0
  %116 = vmatpush.msra.mxu0 0.0
  %117 = vmatpush.msra.mxu0 0.0
  %118 = vmatpush.msra.mxu0 0.0
  %119 = vmatpush.msra.mxu0 0.0
  %120 = vmatpush.msra.mxu0 0.0
  %121 = vmatpush.msra.mxu0 0.0
  %122 = vmatpush.msra.mxu0 0.0
  %123 = vmatpush.msra.mxu0 0.0
  %124 = vmatpush.msra.mxu0 0.0
  %125 = vmatpush.msra.mxu0 %v111
  %126 = vmatpush.msra.mxu0 %v54
  %127 = vmatpush.msra.mxu0 %v53
  %128 = vmatpush.msra.mxu0 %v52
  %129 = vmatmul.f32.gmra.mxu0 %v62
  %v130 = vpop.f32.mrf.mxu0
  %v131 = vadd.f32 %v58, %v130
  %132 = vmatmul.f32.gmra.mxu0 %v65
  %v133 = vpop.f32.mrf.mxu0
  %v134 = vadd.f32 %v58, %v133
  %135 = vmatmul.f32.gmra.mxu0 %v68
  %v136 = vpop.f32.mrf.mxu0
  %v137 = vadd.f32 %v58, %v136
  %138 = vmatmul.f32.gmra.mxu0 %v71
  %v139 = vpop.f32.mrf.mxu0
  %v140 = vadd.f32 %v58, %v139
  %141 = vmatmul.f32.gmra.mxu0 %v74
  %v142 = vpop.f32.mrf.mxu0
  %v143 = vadd.f32 %v58, %v142
  %144 = vmatmul.f32.gmra.mxu0 %v77
  %v145 = vpop.f32.mrf.mxu0
  %v146 = vadd.f32 %v58, %v145
  %147 = vmatmul.f32.gmra.mxu0 %v80
  %v148 = vpop.f32.mrf.mxu0
  %v149 = vadd.f32 %v58, %v148
  %150 = vmatmul.f32.gmra.mxu0 %v83
  %v151 = vpop.f32.mrf.mxu0
  %v152 = vadd.f32 %v58, %v151
  %153 = vmatmul.f32.gmra.mxu0 %v86
  %v154 = vpop.f32.mrf.mxu0
  %v155 = vadd.f32 %v58, %v154
  %156 = vmatmul.f32.gmra.mxu0 %v89
  %v157 = vpop.f32.mrf.mxu0
  %v158 = vadd.f32 %v58, %v157
  %159 = vmatmul.f32.gmra.mxu0 %v92
  %v160 = vpop.f32.mrf.mxu0
  %v161 = vadd.f32 %v58, %v160
  %162 = vmatmul.f32.gmra.mxu0 %v95
  %v163 = vpop.f32.mrf.mxu0
  %v164 = vadd.f32 %v58, %v163
  %165 = vmatmul.f32.gmra.mxu0 %v98
  %v166 = vpop.f32.mrf.mxu0
  %v167 = vadd.f32 %v58, %v166
  %168 = vmatmul.f32.gmra.mxu0 %v101
  %v169 = vpop.f32.mrf.mxu0
  %v170 = vadd.f32 %v58, %v169
  %171 = vmatmul.f32.gmra.mxu0 %v104
  %v172 = vpop.f32.mrf.mxu0
  %v173 = vadd.f32 %v58, %v172
  %174 = vmatmul.f32.gmra.mxu0 %v107
  %v175 = vpop.f32.mrf.mxu0
  %v176 = vadd.f32 %v58, %v175
  %177 = vdwg.mxu0
  %v178 = vld [vmem:[%s3] sm:$0xff]
  %v179 = vld [vmem:[%s3 + $0x8] sm:$0xff]
  %v180 = vld [vmem:[%s3 + $0x10] sm:$0xff]
  %v181 = vld [vmem:[%s3 + $0x18] sm:$0xff]
  %v182 = vld [vmem:[%s3 + $0x20] sm:$0xff]
  %v183 = vld [vmem:[%s3 + $0x28] sm:$0xff]
  %v184 = vld [vmem:[%s3 + $0x30] sm:$0xff]
  %v185 = vld [vmem:[%s3 + $0x38] sm:$0xff]
  %v186 = vld [vmem:[%s3 + $0x40] sm:$0xff]
  %v187 = vld [vmem:[%s3 + $0x48] sm:$0xff]
  %v188 = vld [vmem:[%s3 + $0x50] sm:$0xff]
  %v189 = vld [vmem:[%s3 + $0x58] sm:$0xff]
  %v190 = vld [vmem:[%s3 + $0x60] sm:$0xff]
  %v191 = vld [vmem:[%s3 + $0x68] sm:$0xff]
  %v192 = vld [vmem:[%s3 + $0x70] sm:$0xff]
  %v193 = vld [vmem:[%s3 + $0x78] sm:$0xff]
  %v194 = vmul.f32 %v131, %v131
  %v195 = vmul.f32 %v134, %v134
  %v196 = vmul.f32 %v137, %v137
  %v197 = vmul.f32 %v140, %v140
  %v198 = vmul.f32 %v143, %v143
  %v199 = vmul.f32 %v146, %v146
  %v200 = vmul.f32 %v149, %v149
  %v201 = vmul.f32 %v152, %v152
  %v202 = vmul.f32 %v155, %v155
  %v203 = vmul.f32 %v158, %v158
  %v204 = vmul.f32 %v161, %v161
  %v205 = vmul.f32 %v164, %v164
  %v206 = vmul.f32 %v167, %v167
  %v207 = vmul.f32 %v170, %v170
  %v208 = vmul.f32 %v173, %v173
  %v209 = vmul.f32 %v176, %v176
  %210 = vmatpush.msra.mxu0 %v209
  %211 = vmatpush.msra.mxu0 %v208
  %212 = vmatpush.msra.mxu0 %v207
  %213 = vmatpush.msra.mxu0 %v206
  %214 = vmatpush.msra.mxu0 %v205
  %215 = vmatpush.msra.mxu0 %v204
  %216 = vmatpush.msra.mxu0 %v203
  %217 = vmatpush.msra.mxu0 %v202
  %218 = vmatpush.msra.mxu0 %v201
  %219 = vmatpush.msra.mxu0 %v200
  %220 = vmatpush.msra.mxu0 %v199
  %221 = vmatpush.msra.mxu0 %v198
  %222 = vmatpush.msra.mxu0 %v197
  %223 = vmatpush.msra.mxu0 %v196
  %224 = vmatpush.msra.mxu0 %v195
  %225 = vmatpush.msra.mxu0 %v194
  %226 = vmatmul.f32.gmra.mxu0 %v178
  %v227 = vpop.f32.mrf.mxu0
  %v228 = vadd.f32 0.0, %v227
  %229 = vmatmul.f32.gmra.mxu0 %v179
  %v230 = vpop.f32.mrf.mxu0
  %v231 = vadd.f32 0.0, %v230
  %232 = vmatmul.f32.gmra.mxu0 %v180
  %v233 = vpop.f32.mrf.mxu0
  %v234 = vadd.f32 0.0, %v233
  %235 = vmatmul.f32.gmra.mxu0 %v181
  %v236 = vpop.f32.mrf.mxu0
  %v237 = vadd.f32 0.0, %v236
  %238 = vmatmul.f32.gmra.mxu0 %v182
  %v239 = vpop.f32.mrf.mxu0
  %v240 = vadd.f32 0.0, %v239
  %241 = vmatmul.f32.gmra.mxu0 %v183
  %v242 = vpop.f32.mrf.mxu0
  %v243 = vadd.f32 0.0, %v242
  %244 = vmatmul.f32.gmra.mxu0 %v184
  %v245 = vpop.f32.mrf.mxu0
  %v246 = vadd.f32 0.0, %v245
  %247 = vmatmul.f32.gmra.mxu0 %v185
  %v248 = vpop.f32.mrf.mxu0
  %v249 = vadd.f32 0.0, %v248
  %250 = vmatmul.f32.gmra.mxu0 %v186
  %v251 = vpop.f32.mrf.mxu0
  %v252 = vadd.f32 0.0, %v251
  %253 = vmatmul.f32.gmra.mxu0 %v187
  %v254 = vpop.f32.mrf.mxu0
  %v255 = vadd.f32 0.0, %v254
  %256 = vmatmul.f32.gmra.mxu0 %v188
  %v257 = vpop.f32.mrf.mxu0
  %v258 = vadd.f32 0.0, %v257
  %259 = vmatmul.f32.gmra.mxu0 %v189
  %v260 = vpop.f32.mrf.mxu0
  %v261 = vadd.f32 0.0, %v260
  %262 = vmatmul.f32.gmra.mxu0 %v190
  %v263 = vpop.f32.mrf.mxu0
  %v264 = vadd.f32 0.0, %v263
  %265 = vmatmul.f32.gmra.mxu0 %v191
  %v266 = vpop.f32.mrf.mxu0
  %v267 = vadd.f32 0.0, %v266
  %268 = vmatmul.f32.gmra.mxu0 %v192
  %v269 = vpop.f32.mrf.mxu0
  %v270 = vadd.f32 0.0, %v269
  %271 = vmatmul.f32.gmra.mxu0 %v193
  %v272 = vpop.f32.mrf.mxu0
  %v273 = vadd.f32 0.0, %v272
  %274 = vdwg.mxu0
  %v275 = vrsqrt.pop %v228
  %v276 = vmul.f32 %v275, %v228
  %v277 = vmul.f32 %v276, %v275
  %v278 = vmul.f32 0.5, %v277
  %v279 = vsub.f32 1.5, %v278
  %v280 = vmul.f32 %v275, %v279
  %v281 = vmul.f32 %v228, %v280
  %vm282 = vcmp.eq.f32.partialorder %v228, inf
  %v283 = vsel %vm282, %v228, %v281
  %vm284 = vcmp.eq.f32.partialorder %v228, 0.0
  %v285 = vand.u32 %v228, 2147483648
  %v286 = vsel %vm284, %v285, %v283
  %v287 = vrsqrt.pop %v231
  %v288 = vmul.f32 %v287, %v231
  %v289 = vmul.f32 %v288, %v287
  %v290 = vmul.f32 0.5, %v289
  %v291 = vsub.f32 1.5, %v290
  %v292 = vmul.f32 %v287, %v291
  %v293 = vmul.f32 %v231, %v292
  %vm294 = vcmp.eq.f32.partialorder %v231, inf
  %v295 = vsel %vm294, %v231, %v293
  %vm296 = vcmp.eq.f32.partialorder %v231, 0.0
  %v297 = vand.u32 %v231, 2147483648
  %v298 = vsel %vm296, %v297, %v295
  %v299 = vrsqrt.pop %v234
  %v300 = vmul.f32 %v299, %v234
  %v301 = vmul.f32 %v300, %v299
  %v302 = vmul.f32 0.5, %v301
  %v303 = vsub.f32 1.5, %v302
  %v304 = vmul.f32 %v299, %v303
  %v305 = vmul.f32 %v234, %v304
  %vm306 = vcmp.eq.f32.partialorder %v234, inf
  %v307 = vsel %vm306, %v234, %v305
  %vm308 = vcmp.eq.f32.partialorder %v234, 0.0
  %v309 = vand.u32 %v234, 2147483648
  %v310 = vsel %vm308, %v309, %v307
  %v311 = vrsqrt.pop %v237
  %v312 = vmul.f32 %v311, %v237
  %v313 = vmul.f32 %v312, %v311
  %v314 = vmul.f32 0.5, %v313
  %v315 = vsub.f32 1.5, %v314
  %v316 = vmul.f32 %v311, %v315
  %v317 = vmul.f32 %v237, %v316
  %vm318 = vcmp.eq.f32.partialorder %v237, inf
  %v319 = vsel %vm318, %v237, %v317
  %vm320 = vcmp.eq.f32.partialorder %v237, 0.0
  %v321 = vand.u32 %v237, 2147483648
  %v322 = vsel %vm320, %v321, %v319
  %v323 = vrsqrt.pop %v240
  %v324 = vmul.f32 %v323, %v240
  %v325 = vmul.f32 %v324, %v323
  %v326 = vmul.f32 0.5, %v325
  %v327 = vsub.f32 1.5, %v326
  %v328 = vmul.f32 %v323, %v327
  %v329 = vmul.f32 %v240, %v328
  %vm330 = vcmp.eq.f32.partialorder %v240, inf
  %v331 = vsel %vm330, %v240, %v329
  %vm332 = vcmp.eq.f32.partialorder %v240, 0.0
  %v333 = vand.u32 %v240, 2147483648
  %v334 = vsel %vm332, %v333, %v331
  %v335 = vrsqrt.pop %v243
  %v336 = vmul.f32 %v335, %v243
  %v337 = vmul.f32 %v336, %v335
  %v338 = vmul.f32 0.5, %v337
  %v339 = vsub.f32 1.5, %v338
  %v340 = vmul.f32 %v335, %v339
  %v341 = vmul.f32 %v243, %v340
  %vm342 = vcmp.eq.f32.partialorder %v243, inf
  %v343 = vsel %vm342, %v243, %v341
  %vm344 = vcmp.eq.f32.partialorder %v243, 0.0
  %v345 = vand.u32 %v243, 2147483648
  %v346 = vsel %vm344, %v345, %v343
  %v347 = vrsqrt.pop %v246
  %v348 = vmul.f32 %v347, %v246
  %v349 = vmul.f32 %v348, %v347
  %v350 = vmul.f32 0.5, %v349
  %v351 = vsub.f32 1.5, %v350
  %v352 = vmul.f32 %v347, %v351
  %v353 = vmul.f32 %v246, %v352
  %vm354 = vcmp.eq.f32.partialorder %v246, inf
  %v355 = vsel %vm354, %v246, %v353
  %vm356 = vcmp.eq.f32.partialorder %v246, 0.0
  %v357 = vand.u32 %v246, 2147483648
  %v358 = vsel %vm356, %v357, %v355
  %v359 = vrsqrt.pop %v249
  %v360 = vmul.f32 %v359, %v249
  %v361 = vmul.f32 %v360, %v359
  %v362 = vmul.f32 0.5, %v361
  %v363 = vsub.f32 1.5, %v362
  %v364 = vmul.f32 %v359, %v363
  %v365 = vmul.f32 %v249, %v364
  %vm366 = vcmp.eq.f32.partialorder %v249, inf
  %v367 = vsel %vm366, %v249, %v365
  %vm368 = vcmp.eq.f32.partialorder %v249, 0.0
  %v369 = vand.u32 %v249, 2147483648
  %v370 = vsel %vm368, %v369, %v367
  %v371 = vrsqrt.pop %v252
  %v372 = vmul.f32 %v371, %v252
  %v373 = vmul.f32 %v372, %v371
  %v374 = vmul.f32 0.5, %v373
  %v375 = vsub.f32 1.5, %v374
  %v376 = vmul.f32 %v371, %v375
  %v377 = vmul.f32 %v252, %v376
  %vm378 = vcmp.eq.f32.partialorder %v252, inf
  %v379 = vsel %vm378, %v252, %v377
  %vm380 = vcmp.eq.f32.partialorder %v252, 0.0
  %v381 = vand.u32 %v252, 2147483648
  %v382 = vsel %vm380, %v381, %v379
  %v383 = vrsqrt.pop %v255
  %v384 = vmul.f32 %v383, %v255
  %v385 = vmul.f32 %v384, %v383
  %v386 = vmul.f32 0.5, %v385
  %v387 = vsub.f32 1.5, %v386
  %v388 = vmul.f32 %v383, %v387
  %v389 = vmul.f32 %v255, %v388
  %vm390 = vcmp.eq.f32.partialorder %v255, inf
  %v391 = vsel %vm390, %v255, %v389
  %vm392 = vcmp.eq.f32.partialorder %v255, 0.0
  %v393 = vand.u32 %v255, 2147483648
  %v394 = vsel %vm392, %v393, %v391
  %v395 = vrsqrt.pop %v258
  %v396 = vmul.f32 %v395, %v258
  %v397 = vmul.f32 %v396, %v395
  %v398 = vmul.f32 0.5, %v397
  %v399 = vsub.f32 1.5, %v398
  %v400 = vmul.f32 %v395, %v399
  %v401 = vmul.f32 %v258, %v400
  %vm402 = vcmp.eq.f32.partialorder %v258, inf
  %v403 = vsel %vm402, %v258, %v401
  %vm404 = vcmp.eq.f32.partialorder %v258, 0.0
  %v405 = vand.u32 %v258, 2147483648
  %v406 = vsel %vm404, %v405, %v403
  %v407 = vrsqrt.pop %v261
  %v408 = vmul.f32 %v407, %v261
  %v409 = vmul.f32 %v408, %v407
  %v410 = vmul.f32 0.5, %v409
  %v411 = vsub.f32 1.5, %v410
  %v412 = vmul.f32 %v407, %v411
  %v413 = vmul.f32 %v261, %v412
  %vm414 = vcmp.eq.f32.partialorder %v261, inf
  %v415 = vsel %vm414, %v261, %v413
  %vm416 = vcmp.eq.f32.partialorder %v261, 0.0
  %v417 = vand.u32 %v261, 2147483648
  %v418 = vsel %vm416, %v417, %v415
  %v419 = vrsqrt.pop %v264
  %v420 = vmul.f32 %v419, %v264
  %v421 = vmul.f32 %v420, %v419
  %v422 = vmul.f32 0.5, %v421
  %v423 = vsub.f32 1.5, %v422
  %v424 = vmul.f32 %v419, %v423
  %v425 = vmul.f32 %v264, %v424
  %vm426 = vcmp.eq.f32.partialorder %v264, inf
  %v427 = vsel %vm426, %v264, %v425
  %vm428 = vcmp.eq.f32.partialorder %v264, 0.0
  %v429 = vand.u32 %v264, 2147483648
  %v430 = vsel %vm428, %v429, %v427
  %v431 = vrsqrt.pop %v267
  %v432 = vmul.f32 %v431, %v267
  %v433 = vmul.f32 %v432, %v431
  %v434 = vmul.f32 0.5, %v433
  %v435 = vsub.f32 1.5, %v434
  %v436 = vmul.f32 %v431, %v435
  %v437 = vmul.f32 %v267, %v436
  %vm438 = vcmp.eq.f32.partialorder %v267, inf
  %v439 = vsel %vm438, %v267, %v437
  %vm440 = vcmp.eq.f32.partialorder %v267, 0.0
  %v441 = vand.u32 %v267, 2147483648
  %v442 = vsel %vm440, %v441, %v439
  %v443 = vrsqrt.pop %v270
  %v444 = vmul.f32 %v443, %v270
  %v445 = vmul.f32 %v444, %v443
  %v446 = vmul.f32 0.5, %v445
  %v447 = vsub.f32 1.5, %v446
  %v448 = vmul.f32 %v443, %v447
  %v449 = vmul.f32 %v270, %v448
  %vm450 = vcmp.eq.f32.partialorder %v270, inf
  %v451 = vsel %vm450, %v270, %v449
  %vm452 = vcmp.eq.f32.partialorder %v270, 0.0
  %v453 = vand.u32 %v270, 2147483648
  %v454 = vsel %vm452, %v453, %v451
  %v455 = vrsqrt.pop %v273
  %v456 = vmul.f32 %v455, %v273
  %v457 = vmul.f32 %v456, %v455
  %v458 = vmul.f32 0.5, %v457
  %v459 = vsub.f32 1.5, %v458
  %v460 = vmul.f32 %v455, %v459
  %v461 = vmul.f32 %v273, %v460
  %vm462 = vcmp.eq.f32.partialorder %v273, inf
  %v463 = vsel %vm462, %v273, %v461
  %vm464 = vcmp.eq.f32.partialorder %v273, 0.0
  %v465 = vand.u32 %v273, 2147483648
  %v466 = vsel %vm464, %v465, %v463
  %v467 = vmax.f32 %v286, 1e-12
  %v468 = vmax.f32 %v298, 1e-12
  %v469 = vmax.f32 %v310, 1e-12
  %v470 = vmax.f32 %v322, 1e-12
  %v471 = vmax.f32 %v334, 1e-12
  %v472 = vmax.f32 %v346, 1e-12
  %v473 = vmax.f32 %v358, 1e-12
  %v474 = vmax.f32 %v370, 1e-12
  %v475 = vmax.f32 %v382, 1e-12
  %v476 = vmax.f32 %v394, 1e-12
  %v477 = vmax.f32 %v406, 1e-12
  %v478 = vmax.f32 %v418, 1e-12
  %v479 = vmax.f32 %v430, 1e-12
  %v480 = vmax.f32 %v442, 1e-12
  %v481 = vmax.f32 %v454, 1e-12
  %v482 = vmax.f32 %v466, 1e-12
  %v483 = vrcp.pop %v467
  %v484 = vmul.f32 %v467, %v483
  %v485 = vsub.f32 1.0, %v484
  %v486 = vmul.f32 %v483, %v485
  %v487 = vadd.f32 %v483, %v486
  %vm488 = vweird.f32 %v467
  %vm489 = vweird.f32 %v483
  %vm490 = vmor %vm488, %vm489
  %v491 = vsel %vm490, %v483, %v487
  %v492 = vand.u32 2147483647, %v467
  %vm493 = vcmp.eq.f32.partialorder %v492, 8.507059e+37
  %v494 = vand.u32 %v467, 2147483648
  %v495 = vor.u32 1.1754944e-38, %v494
  %v496 = vsel %vm493, %v495, %v491
  %v497 = vmul.f32 %v131, %v496
  %v498 = vrcp.pop %v468
  %v499 = vmul.f32 %v468, %v498
  %v500 = vsub.f32 1.0, %v499
  %v501 = vmul.f32 %v498, %v500
  %v502 = vadd.f32 %v498, %v501
  %vm503 = vweird.f32 %v468
  %vm504 = vweird.f32 %v498
  %vm505 = vmor %vm503, %vm504
  %v506 = vsel %vm505, %v498, %v502
  %v507 = vand.u32 2147483647, %v468
  %vm508 = vcmp.eq.f32.partialorder %v507, 8.507059e+37
  %v509 = vand.u32 %v468, 2147483648
  %v510 = vor.u32 1.1754944e-38, %v509
  %v511 = vsel %vm508, %v510, %v506
  %v512 = vmul.f32 %v134, %v511
  %v513 = vrcp.pop %v469
  %v514 = vmul.f32 %v469, %v513
  %v515 = vsub.f32 1.0, %v514
  %v516 = vmul.f32 %v513, %v515
  %v517 = vadd.f32 %v513, %v516
  %vm518 = vweird.f32 %v469
  %vm519 = vweird.f32 %v513
  %vm520 = vmor %vm518, %vm519
  %v521 = vsel %vm520, %v513, %v517
  %v522 = vand.u32 2147483647, %v469
  %vm523 = vcmp.eq.f32.partialorder %v522, 8.507059e+37
  %v524 = vand.u32 %v469, 2147483648
  %v525 = vor.u32 1.1754944e-38, %v524
  %v526 = vsel %vm523, %v525, %v521
  %v527 = vmul.f32 %v137, %v526
  %v528 = vrcp.pop %v470
  %v529 = vmul.f32 %v470, %v528
  %v530 = vsub.f32 1.0, %v529
  %v531 = vmul.f32 %v528, %v530
  %v532 = vadd.f32 %v528, %v531
  %vm533 = vweird.f32 %v470
  %vm534 = vweird.f32 %v528
  %vm535 = vmor %vm533, %vm534
  %v536 = vsel %vm535, %v528, %v532
  %v537 = vand.u32 2147483647, %v470
  %vm538 = vcmp.eq.f32.partialorder %v537, 8.507059e+37
  %v539 = vand.u32 %v470, 2147483648
  %v540 = vor.u32 1.1754944e-38, %v539
  %v541 = vsel %vm538, %v540, %v536
  %v542 = vmul.f32 %v140, %v541
  %v543 = vrcp.pop %v471
  %v544 = vmul.f32 %v471, %v543
  %v545 = vsub.f32 1.0, %v544
  %v546 = vmul.f32 %v543, %v545
  %v547 = vadd.f32 %v543, %v546
  %vm548 = vweird.f32 %v471
  %vm549 = vweird.f32 %v543
  %vm550 = vmor %vm548, %vm549
  %v551 = vsel %vm550, %v543, %v547
  %v552 = vand.u32 2147483647, %v471
  %vm553 = vcmp.eq.f32.partialorder %v552, 8.507059e+37
  %v554 = vand.u32 %v471, 2147483648
  %v555 = vor.u32 1.1754944e-38, %v554
  %v556 = vsel %vm553, %v555, %v551
  %v557 = vmul.f32 %v143, %v556
  %v558 = vrcp.pop %v472
  %v559 = vmul.f32 %v472, %v558
  %v560 = vsub.f32 1.0, %v559
  %v561 = vmul.f32 %v558, %v560
  %v562 = vadd.f32 %v558, %v561
  %vm563 = vweird.f32 %v472
  %vm564 = vweird.f32 %v558
  %vm565 = vmor %vm563, %vm564
  %v566 = vsel %vm565, %v558, %v562
  %v567 = vand.u32 2147483647, %v472
  %vm568 = vcmp.eq.f32.partialorder %v567, 8.507059e+37
  %v569 = vand.u32 %v472, 2147483648
  %v570 = vor.u32 1.1754944e-38, %v569
  %v571 = vsel %vm568, %v570, %v566
  %v572 = vmul.f32 %v146, %v571
  %v573 = vrcp.pop %v473
  %v574 = vmul.f32 %v473, %v573
  %v575 = vsub.f32 1.0, %v574
  %v576 = vmul.f32 %v573, %v575
  %v577 = vadd.f32 %v573, %v576
  %vm578 = vweird.f32 %v473
  %vm579 = vweird.f32 %v573
  %vm580 = vmor %vm578, %vm579
  %v581 = vsel %vm580, %v573, %v577
  %v582 = vand.u32 2147483647, %v473
  %vm583 = vcmp.eq.f32.partialorder %v582, 8.507059e+37
  %v584 = vand.u32 %v473, 2147483648
  %v585 = vor.u32 1.1754944e-38, %v584
  %v586 = vsel %vm583, %v585, %v581
  %v587 = vmul.f32 %v149, %v586
  %v588 = vrcp.pop %v474
  %v589 = vmul.f32 %v474, %v588
  %v590 = vsub.f32 1.0, %v589
  %v591 = vmul.f32 %v588, %v590
  %v592 = vadd.f32 %v588, %v591
  %vm593 = vweird.f32 %v474
  %vm594 = vweird.f32 %v588
  %vm595 = vmor %vm593, %vm594
  %v596 = vsel %vm595, %v588, %v592
  %v597 = vand.u32 2147483647, %v474
  %vm598 = vcmp.eq.f32.partialorder %v597, 8.507059e+37
  %v599 = vand.u32 %v474, 2147483648
  %v600 = vor.u32 1.1754944e-38, %v599
  %v601 = vsel %vm598, %v600, %v596
  %v602 = vmul.f32 %v152, %v601
  %v603 = vrcp.pop %v475
  %v604 = vmul.f32 %v475, %v603
  %v605 = vsub.f32 1.0, %v604
  %v606 = vmul.f32 %v603, %v605
  %v607 = vadd.f32 %v603, %v606
  %vm608 = vweird.f32 %v475
  %vm609 = vweird.f32 %v603
  %vm610 = vmor %vm608, %vm609
  %v611 = vsel %vm610, %v603, %v607
  %v612 = vand.u32 2147483647, %v475
  %vm613 = vcmp.eq.f32.partialorder %v612, 8.507059e+37
  %v614 = vand.u32 %v475, 2147483648
  %v615 = vor.u32 1.1754944e-38, %v614
  %v616 = vsel %vm613, %v615, %v611
  %v617 = vmul.f32 %v155, %v616
  %v618 = vrcp.pop %v476
  %v619 = vmul.f32 %v476, %v618
  %v620 = vsub.f32 1.0, %v619
  %v621 = vmul.f32 %v618, %v620
  %v622 = vadd.f32 %v618, %v621
  %vm623 = vweird.f32 %v476
  %vm624 = vweird.f32 %v618
  %vm625 = vmor %vm623, %vm624
  %v626 = vsel %vm625, %v618, %v622
  %v627 = vand.u32 2147483647, %v476
  %vm628 = vcmp.eq.f32.partialorder %v627, 8.507059e+37
  %v629 = vand.u32 %v476, 2147483648
  %v630 = vor.u32 1.1754944e-38, %v629
  %v631 = vsel %vm628, %v630, %v626
  %v632 = vmul.f32 %v158, %v631
  %v633 = vrcp.pop %v477
  %v634 = vmul.f32 %v477, %v633
  %v635 = vsub.f32 1.0, %v634
  %v636 = vmul.f32 %v633, %v635
  %v637 = vadd.f32 %v633, %v636
  %vm638 = vweird.f32 %v477
  %vm639 = vweird.f32 %v633
  %vm640 = vmor %vm638, %vm639
  %v641 = vsel %vm640, %v633, %v637
  %v642 = vand.u32 2147483647, %v477
  %vm643 = vcmp.eq.f32.partialorder %v642, 8.507059e+37
  %v644 = vand.u32 %v477, 2147483648
  %v645 = vor.u32 1.1754944e-38, %v644
  %v646 = vsel %vm643, %v645, %v641
  %v647 = vmul.f32 %v161, %v646
  %v648 = vrcp.pop %v478
  %v649 = vmul.f32 %v478, %v648
  %v650 = vsub.f32 1.0, %v649
  %v651 = vmul.f32 %v648, %v650
  %v652 = vadd.f32 %v648, %v651
  %vm653 = vweird.f32 %v478
  %vm654 = vweird.f32 %v648
  %vm655 = vmor %vm653, %vm654
  %v656 = vsel %vm655, %v648, %v652
  %v657 = vand.u32 2147483647, %v478
  %vm658 = vcmp.eq.f32.partialorder %v657, 8.507059e+37
  %v659 = vand.u32 %v478, 2147483648
  %v660 = vor.u32 1.1754944e-38, %v659
  %v661 = vsel %vm658, %v660, %v656
  %v662 = vmul.f32 %v164, %v661
  %v663 = vrcp.pop %v479
  %v664 = vmul.f32 %v479, %v663
  %v665 = vsub.f32 1.0, %v664
  %v666 = vmul.f32 %v663, %v665
  %v667 = vadd.f32 %v663, %v666
  %vm668 = vweird.f32 %v479
  %vm669 = vweird.f32 %v663
  %vm670 = vmor %vm668, %vm669
  %v671 = vsel %vm670, %v663, %v667
  %v672 = vand.u32 2147483647, %v479
  %vm673 = vcmp.eq.f32.partialorder %v672, 8.507059e+37
  %v674 = vand.u32 %v479, 2147483648
  %v675 = vor.u32 1.1754944e-38, %v674
  %v676 = vsel %vm673, %v675, %v671
  %v677 = vmul.f32 %v167, %v676
  %v678 = vrcp.pop %v480
  %v679 = vmul.f32 %v480, %v678
  %v680 = vsub.f32 1.0, %v679
  %v681 = vmul.f32 %v678, %v680
  %v682 = vadd.f32 %v678, %v681
  %vm683 = vweird.f32 %v480
  %vm684 = vweird.f32 %v678
  %vm685 = vmor %vm683, %vm684
  %v686 = vsel %vm685, %v678, %v682
  %v687 = vand.u32 2147483647, %v480
  %vm688 = vcmp.eq.f32.partialorder %v687, 8.507059e+37
  %v689 = vand.u32 %v480, 2147483648
  %v690 = vor.u32 1.1754944e-38, %v689
  %v691 = vsel %vm688, %v690, %v686
  %v692 = vmul.f32 %v170, %v691
  %v693 = vrcp.pop %v481
  %v694 = vmul.f32 %v481, %v693
  %v695 = vsub.f32 1.0, %v694
  %v696 = vmul.f32 %v693, %v695
  %v697 = vadd.f32 %v693, %v696
  %vm698 = vweird.f32 %v481
  %vm699 = vweird.f32 %v693
  %vm700 = vmor %vm698, %vm699
  %v701 = vsel %vm700, %v693, %v697
  %v702 = vand.u32 2147483647, %v481
  %vm703 = vcmp.eq.f32.partialorder %v702, 8.507059e+37
  %v704 = vand.u32 %v481, 2147483648
  %v705 = vor.u32 1.1754944e-38, %v704
  %v706 = vsel %vm703, %v705, %v701
  %v707 = vmul.f32 %v173, %v706
  %v708 = vrcp.pop %v482
  %v709 = vmul.f32 %v482, %v708
  %v710 = vsub.f32 1.0, %v709
  %v711 = vmul.f32 %v708, %v710
  %v712 = vadd.f32 %v708, %v711
  %vm713 = vweird.f32 %v482
  %vm714 = vweird.f32 %v708
  %vm715 = vmor %vm713, %vm714
  %v716 = vsel %vm715, %v708, %v712
  %v717 = vand.u32 2147483647, %v482
  %vm718 = vcmp.eq.f32.partialorder %v717, 8.507059e+37
  %v719 = vand.u32 %v482, 2147483648
  %v720 = vor.u32 1.1754944e-38, %v719
  %v721 = vsel %vm718, %v720, %v716
  %v722 = vmul.f32 %v176, %v721
  %v723 = vld [vmem:[%s4] sm:$0xff]
  %v724 = vld [vmem:[%s4 + $0x8] sm:$0xff]
  %v725 = vld [vmem:[%s4 + $0x10] sm:$0xff]
  %v726 = vld [vmem:[%s4 + $0x18] sm:$0xff]
  %v727 = vld [vmem:[%s5] sm:$0x1]
  %v729 = vperm.slane %v727, 0
  %vm731 = vcmask 261120
  %v733 = vsel %vm731, %v497, 0
  %v736 = vsel %vm731, %v512, 0
  %v739 = vsel %vm731, %v527, 0
  %v742 = vsel %vm731, %v542, 0
  %v745 = vsel %vm731, %v557, 0
  %v748 = vsel %vm731, %v572, 0
  %v751 = vsel %vm731, %v587, 0
  %v754 = vsel %vm731, %v602, 0
  %v757 = vsel %vm731, %v617, 0
  %v760 = vsel %vm731, %v632, 0
  %v763 = vsel %vm731, %v647, 0
  %v766 = vsel %vm731, %v662, 0
  %v769 = vsel %vm731, %v677, 0
  %v772 = vsel %vm731, %v692, 0
  %v775 = vsel %vm731, %v707, 0
  %v778 = vsel %vm731, %v722, 0
  %780 = vmatpush.msra.mxu0 0.0
  %781 = vmatpush.msra.mxu0 0.0
  %782 = vmatpush.msra.mxu0 0.0
  %783 = vmatpush.msra.mxu0 0.0
  %784 = vmatpush.msra.mxu0 0.0
  %785 = vmatpush.msra.mxu0 0.0
  %786 = vmatpush.msra.mxu0 0.0
  %787 = vmatpush.msra.mxu0 0.0
  %788 = vmatpush.msra.mxu0 0.0
  %789 = vmatpush.msra.mxu0 0.0
  %790 = vmatpush.msra.mxu0 0.0
  %791 = vmatpush.msra.mxu0 0.0
  %792 = vmatpush.msra.mxu0 %v726
  %793 = vmatpush.msra.mxu0 %v725
  %794 = vmatpush.msra.mxu0 %v724
  %795 = vmatpush.msra.mxu0 %v723
  %796 = vmatmul.f32.gmra.mxu0 %v733
  %v797 = vpop.f32.mrf.mxu0
  %v798 = vadd.f32 %v729, %v797
  %799 = vmatmul.f32.gmra.mxu0 %v736
  %v800 = vpop.f32.mrf.mxu0
  %v801 = vadd.f32 %v729, %v800
  %802 = vmatmul.f32.gmra.mxu0 %v739
  %v803 = vpop.f32.mrf.mxu0
  %v804 = vadd.f32 %v729, %v803
  %805 = vmatmul.f32.gmra.mxu0 %v742
  %v806 = vpop.f32.mrf.mxu0
  %v807 = vadd.f32 %v729, %v806
  %808 = vmatmul.f32.gmra.mxu0 %v745
  %v809 = vpop.f32.mrf.mxu0
  %v810 = vadd.f32 %v729, %v809
  %811 = vmatmul.f32.gmra.mxu0 %v748
  %v812 = vpop.f32.mrf.mxu0
  %v813 = vadd.f32 %v729, %v812
  %814 = vmatmul.f32.gmra.mxu0 %v751
  %v815 = vpop.f32.mrf.mxu0
  %v816 = vadd.f32 %v729, %v815
  %817 = vmatmul.f32.gmra.mxu0 %v754
  %v818 = vpop.f32.mrf.mxu0
  %v819 = vadd.f32 %v729, %v818
  %820 = vmatmul.f32.gmra.mxu0 %v757
  %v821 = vpop.f32.mrf.mxu0
  %v822 = vadd.f32 %v729, %v821
  %823 = vmatmul.f32.gmra.mxu0 %v760
  %v824 = vpop.f32.mrf.mxu0
  %v825 = vadd.f32 %v729, %v824
  %826 = vmatmul.f32.gmra.mxu0 %v763
  %v827 = vpop.f32.mrf.mxu0
  %v828 = vadd.f32 %v729, %v827
  %829 = vmatmul.f32.gmra.mxu0 %v766
  %v830 = vpop.f32.mrf.mxu0
  %v831 = vadd.f32 %v729, %v830
  %832 = vmatmul.f32.gmra.mxu0 %v769
  %v833 = vpop.f32.mrf.mxu0
  %v834 = vadd.f32 %v729, %v833
  %835 = vmatmul.f32.gmra.mxu0 %v772
  %v836 = vpop.f32.mrf.mxu0
  %v837 = vadd.f32 %v729, %v836
  %838 = vmatmul.f32.gmra.mxu0 %v775
  %v839 = vpop.f32.mrf.mxu0
  %v840 = vadd.f32 %v729, %v839
  %841 = vmatmul.f32.gmra.mxu0 %v778
  %v842 = vpop.f32.mrf.mxu0
  %v843 = vadd.f32 %v729, %v842
  %844 = vdwg.mxu0
  %v845 = vpack.c.bf16 %v512, %v497
  %v846 = vpack.c.bf16 %v542, %v527
  %v847 = vpack.c.bf16 %v572, %v557
  %v848 = vpack.c.bf16 %v602, %v587
  %v849 = vpack.c.bf16 %v632, %v617
  %v850 = vpack.c.bf16 %v662, %v647
  %v851 = vpack.c.bf16 %v692, %v677
  %v852 = vpack.c.bf16 %v722, %v707
  %v853 = vpack.c.bf16 %v801, %v798
  %v854 = vpack.c.bf16 %v807, %v804
  %v855 = vpack.c.bf16 %v813, %v810
  %v856 = vpack.c.bf16 %v819, %v816
  %v857 = vpack.c.bf16 %v825, %v822
  %v858 = vpack.c.bf16 %v831, %v828
  %v859 = vpack.c.bf16 %v837, %v834
  %v860 = vpack.c.bf16 %v843, %v840
  %v862 = vsel %vm731, %v845, 0
  %v865 = vsel %vm731, %v846, 0
  %v868 = vsel %vm731, %v847, 0
  %v871 = vsel %vm731, %v848, 0
  %v874 = vsel %vm731, %v849, 0
  %v877 = vsel %vm731, %v850, 0
  %v880 = vsel %vm731, %v851, 0
  %v883 = vsel %vm731, %v852, 0
  %v886 = vsel %vm731, %v853, 0
  %v889 = vsel %vm731, %v854, 0
  %v892 = vsel %vm731, %v855, 0
  %v895 = vsel %vm731, %v856, 0
  %v898 = vsel %vm731, %v857, 0
  %v901 = vsel %vm731, %v858, 0
  %v904 = vsel %vm731, %v859, 0
  %v907 = vsel %vm731, %v860, 0
  %909 = vmatpush.bf16.xpose.msra.mxu0 %v907
  %910 = vmatpush.bf16.xpose.msra.mxu0 %v904
  %911 = vmatpush.bf16.xpose.msra.mxu0 %v901
  %912 = vmatpush.bf16.xpose.msra.mxu0 %v898
  %913 = vmatpush.bf16.xpose.msra.mxu0 %v895
  %914 = vmatpush.bf16.xpose.msra.mxu0 %v892
  %915 = vmatpush.bf16.xpose.msra.mxu0 %v889
  %916 = vmatpush.bf16.xpose.msra.mxu0 %v886
  %917 = vmatmul.bf16.gmra.mxu0 %v862
  %v918 = vpop.f32.mrf.mxu0
  %v919 = vadd.f32 0.0, %v918
  %v920 = vpop.f32.mrf.mxu0
  %v921 = vadd.f32 0.0, %v920
  %922 = vmatmul.bf16.gmra.mxu0 %v865
  %v923 = vpop.f32.mrf.mxu0
  %v924 = vadd.f32 0.0, %v923
  %v925 = vpop.f32.mrf.mxu0
  %v926 = vadd.f32 0.0, %v925
  %927 = vmatmul.bf16.gmra.mxu0 %v868
  %v928 = vpop.f32.mrf.mxu0
  %v929 = vadd.f32 0.0, %v928
  %v930 = vpop.f32.mrf.mxu0
  %v931 = vadd.f32 0.0, %v930
  %932 = vmatmul.bf16.gmra.mxu0 %v871
  %v933 = vpop.f32.mrf.mxu0
  %v934 = vadd.f32 0.0, %v933
  %v935 = vpop.f32.mrf.mxu0
  %v936 = vadd.f32 0.0, %v935
  %937 = vmatmul.bf16.gmra.mxu0 %v874
  %v938 = vpop.f32.mrf.mxu0
  %v939 = vadd.f32 0.0, %v938
  %v940 = vpop.f32.mrf.mxu0
  %v941 = vadd.f32 0.0, %v940
  %942 = vmatmul.bf16.gmra.mxu0 %v877
  %v943 = vpop.f32.mrf.mxu0
  %v944 = vadd.f32 0.0, %v943
  %v945 = vpop.f32.mrf.mxu0
  %v946 = vadd.f32 0.0, %v945
  %947 = vmatmul.bf16.gmra.mxu0 %v880
  %v948 = vpop.f32.mrf.mxu0
  %v949 = vadd.f32 0.0, %v948
  %v950 = vpop.f32.mrf.mxu0
  %v951 = vadd.f32 0.0, %v950
  %952 = vmatmul.bf16.gmra.mxu0 %v883
  %v953 = vpop.f32.mrf.mxu0
  %v954 = vadd.f32 0.0, %v953
  %v955 = vpop.f32.mrf.mxu0
  %v956 = vadd.f32 0.0, %v955
  %957 = vdwg.mxu0
  %v958 = vld [vmem:[%s6] sm:$0x1]
  %v959 = vld [vmem:[#allocation2] sm:$0x1]
  %961 = vset.pattern.permute.xlu0 0
  %962 = vperm.xlu0 %961, %v959
  %v963 = vpop.permute.xlu0 %962
  %v965 = vperm.slane %v963, 0
  %v967 = vsel %vm731, %v958, 0
  %969 = vmatpush.xpose.msra.mxu0 %v778
  %970 = vmatpush.xpose.msra.mxu0 %v775
  %971 = vmatpush.xpose.msra.mxu0 %v772
  %972 = vmatpush.xpose.msra.mxu0 %v769
  %973 = vmatpush.xpose.msra.mxu0 %v766
  %974 = vmatpush.xpose.msra.mxu0 %v763
  %975 = vmatpush.xpose.msra.mxu0 %v760
  %976 = vmatpush.xpose.msra.mxu0 %v757
  %977 = vmatpush.xpose.msra.mxu0 %v754
  %978 = vmatpush.xpose.msra.mxu0 %v751
  %979 = vmatpush.xpose.msra.mxu0 %v748
  %980 = vmatpush.xpose.msra.mxu0 %v745
  %981 = vmatpush.xpose.msra.mxu0 %v742
  %982 = vmatpush.xpose.msra.mxu0 %v739
  %983 = vmatpush.xpose.msra.mxu0 %v736
  %984 = vmatpush.xpose.msra.mxu0 %v733
  %985 = vmatmul.f32.gmra.mxu0 %v967
  %v986 = vpop.f32.mrf.mxu0
  %v987 = vadd.f32 %v965, %v986
  %988 = vdwg.mxu0
  %v989 = vld [vmem:[%s8] sm:$0xff]
  %v990 = vld [vmem:[%s8 + $0x8] sm:$0xff]
  %v991 = vld [vmem:[%s8 + $0x10] sm:$0xff]
  %v992 = vld [vmem:[%s8 + $0x18] sm:$0xff]
  %v993 = vlaneseq
  %v994 = vshrl.u32 %v993, 7
  %v995 = vadd.s32 %v994, 8
  %v996 = vadd.s32 %v994, 16
  %v997 = vadd.s32 %v994, 24
  %v998 = vadd.s32 %v994, 32
  %v999 = vadd.s32 %v994, 40
  %v1000 = vadd.s32 %v994, 48
  %v1001 = vadd.s32 %v994, 56
  %v1002 = vadd.s32 %v994, 64
  %v1003 = vadd.s32 %v994, 72
  %v1004 = vadd.s32 %v994, 80
  %v1005 = vadd.s32 %v994, 88
  %v1006 = vadd.s32 %v994, 96
  %v1007 = vadd.s32 %v994, 104
  %v1008 = vadd.s32 %v994, 112
  %v1009 = vadd.s32 %v994, 120
  %v1010 = vperm.slane %v989, 0
  %vm1011 = vcmp.eq.s32.totalorder %v994, %v1010
  %vm1012 = vcmp.eq.s32.totalorder %v995, %v1010
  %vm1013 = vcmp.eq.s32.totalorder %v996, %v1010
  %vm1014 = vcmp.eq.s32.totalorder %v997, %v1010
  %vm1015 = vcmp.eq.s32.totalorder %v998, %v1010
  %vm1016 = vcmp.eq.s32.totalorder %v999, %v1010
  %vm1017 = vcmp.eq.s32.totalorder %v1000, %v1010
  %vm1018 = vcmp.eq.s32.totalorder %v1001, %v1010
  %vm1019 = vcmp.eq.s32.totalorder %v1002, %v1010
  %vm1020 = vcmp.eq.s32.totalorder %v1003, %v1010
  %vm1021 = vcmp.eq.s32.totalorder %v1004, %v1010
  %vm1022 = vcmp.eq.s32.totalorder %v1005, %v1010
  %vm1023 = vcmp.eq.s32.totalorder %v1006, %v1010
  %vm1024 = vcmp.eq.s32.totalorder %v1007, %v1010
  %vm1025 = vcmp.eq.s32.totalorder %v1008, %v1010
  %vm1026 = vcmp.eq.s32.totalorder %v1009, %v1010
  %v1027 = vsel %vm1011, %v919, 0.0
  %v1028 = vsel %vm1012, %v921, 0.0
  %v1029 = vsel %vm1013, %v924, 0.0
  %v1030 = vsel %vm1014, %v926, 0.0
  %v1031 = vsel %vm1015, %v929, 0.0
  %v1032 = vsel %vm1016, %v931, 0.0
  %v1033 = vsel %vm1017, %v934, 0.0
  %v1034 = vsel %vm1018, %v936, 0.0
  %v1035 = vsel %vm1019, %v939, 0.0
  %v1036 = vsel %vm1020, %v941, 0.0
  %v1037 = vsel %vm1021, %v944, 0.0
  %v1038 = vsel %vm1022, %v946, 0.0
  %v1039 = vsel %vm1023, %v949, 0.0
  %v1040 = vsel %vm1024, %v951, 0.0
  %v1041 = vsel %vm1025, %v954, 0.0
  %v1042 = vsel %vm1026, %v956, 0.0
  %v1043 = vadd.f32 %v1027, %v1028
  %v1044 = vadd.f32 %v1043, %v1029
  %v1045 = vadd.f32 %v1044, %v1030
  %v1046 = vadd.f32 %v1045, %v1031
  %v1047 = vadd.f32 %v1046, %v1032
  %v1048 = vadd.f32 %v1047, %v1033
  %v1049 = vadd.f32 %v1048, %v1034
  %v1050 = vadd.f32 %v1049, %v1035
  %v1051 = vadd.f32 %v1050, %v1036
  %v1052 = vadd.f32 %v1051, %v1037
  %v1053 = vadd.f32 %v1052, %v1038
  %v1054 = vadd.f32 %v1053, %v1039
  %v1055 = vadd.f32 %v1054, %v1040
  %v1056 = vadd.f32 %v1055, %v1041
  %v1057 = vadd.f32 %v1056, %v1042
  %v1058 = vrot.slane %v1057, 4
  %v1059 = vadd.f32 %v1057, %v1058
  %v1060 = vrot.slane %v1059, 2
  %v1061 = vadd.f32 %v1059, %v1060
  %v1062 = vrot.slane %v1061, 1
  %v1063 = vadd.f32 %v1061, %v1062
  %vm1064 = vcmp.eq.s32.totalorder %v994, 0
  %vm1065 = vcmp.eq.s32.totalorder %v995, 0
  %vm1066 = vcmp.eq.s32.totalorder %v996, 0
  %vm1067 = vcmp.eq.s32.totalorder %v997, 0
  %v1068 = vsel %vm1064, %v1063, 0.0
  %v1069 = vsel %vm1065, %v1063, 0.0
  %v1070 = vsel %vm1066, %v1063, 0.0
  %v1071 = vsel %vm1067, %v1063, 0.0
  %v1072 = vperm.slane %v989, 1
  %vm1073 = vcmp.eq.s32.totalorder %v994, %v1072
  %vm1074 = vcmp.eq.s32.totalorder %v995, %v1072
  %vm1075 = vcmp.eq.s32.totalorder %v996, %v1072
  %vm1076 = vcmp.eq.s32.totalorder %v997, %v1072
  %vm1077 = vcmp.eq.s32.totalorder %v998, %v1072
  %vm1078 = vcmp.eq.s32.totalorder %v999, %v1072
  %vm1079 = vcmp.eq.s32.totalorder %v1000, %v1072
  %vm1080 = vcmp.eq.s32.totalorder %v1001, %v1072
  %vm1081 = vcmp.eq.s32.totalorder %v1002, %v1072
  %vm1082 = vcmp.eq.s32.totalorder %v1003, %v1072
  %vm1083 = vcmp.eq.s32.totalorder %v1004, %v1072
  %vm1084 = vcmp.eq.s32.totalorder %v1005, %v1072
  %vm1085 = vcmp.eq.s32.totalorder %v1006, %v1072
  %vm1086 = vcmp.eq.s32.totalorder %v1007, %v1072
  %vm1087 = vcmp.eq.s32.totalorder %v1008, %v1072
  %vm1088 = vcmp.eq.s32.totalorder %v1009, %v1072
  %v1089 = vsel %vm1073, %v919, 0.0
  %v1090 = vsel %vm1074, %v921, 0.0
  %v1091 = vsel %vm1075, %v924, 0.0
  %v1092 = vsel %vm1076, %v926, 0.0
  %v1093 = vsel %vm1077, %v929, 0.0
  %v1094 = vsel %vm1078, %v931, 0.0
  %v1095 = vsel %vm1079, %v934, 0.0
  %v1096 = vsel %vm1080, %v936, 0.0
  %v1097 = vsel %vm1081, %v939, 0.0
  %v1098 = vsel %vm1082, %v941, 0.0
  %v1099 = vsel %vm1083, %v944, 0.0
  %v1100 = vsel %vm1084, %v946, 0.0
  %v1101 = vsel %vm1085, %v949, 0.0
  %v1102 = vsel %vm1086, %v951, 0.0
  %v1103 = vsel %vm1087, %v954, 0.0
  %v1104 = vsel %vm1088, %v956, 0.0
  %v1105 = vadd.f32 %v1089, %v1090
  %v1106 = vadd.f32 %v1105, %v1091
  %v1107 = vadd.f32 %v1106, %v1092
  %v1108 = vadd.f32 %v1107, %v1093
  %v1109 = vadd.f32 %v1108, %v1094
  %v1110 = vadd.f32 %v1109, %v1095
  %v1111 = vadd.f32 %v1110, %v1096
  %v1112 = vadd.f32 %v1111, %v1097
  %v1113 = vadd.f32 %v1112, %v1098
  %v1114 = vadd.f32 %v1113, %v1099
  %v1115 = vadd.f32 %v1114, %v1100
  %v1116 = vadd.f32 %v1115, %v1101
  %v1117 = vadd.f32 %v1116, %v1102
  %v1118 = vadd.f32 %v1117, %v1103
  %v1119 = vadd.f32 %v1118, %v1104
  %v1120 = vrot.slane %v1119, 4
  %v1121 = vadd.f32 %v1119, %v1120
  %v1122 = vrot.slane %v1121, 2
  %v1123 = vadd.f32 %v1121, %v1122
  %v1124 = vrot.slane %v1123, 1
  %v1125 = vadd.f32 %v1123, %v1124
  %vm1126 = vcmp.eq.s32.totalorder %v994, 1
  %vm1127 = vcmp.eq.s32.totalorder %v995, 1
  %vm1128 = vcmp.eq.s32.totalorder %v996, 1
  %vm1129 = vcmp.eq.s32.totalorder %v997, 1
  %v1130 = vsel %vm1126, %v1125, %v1068
  %v1131 = vsel %vm1127, %v1125, %v1069
  %v1132 = vsel %vm1128, %v1125, %v1070
  %v1133 = vsel %vm1129, %v1125, %v1071
  %v1134 = vperm.slane %v989, 2
  %vm1135 = vcmp.eq.s32.totalorder %v994, %v1134
  %vm1136 = vcmp.eq.s32.totalorder %v995, %v1134
  %vm1137 = vcmp.eq.s32.totalorder %v996, %v1134
  %vm1138 = vcmp.eq.s32.totalorder %v997, %v1134
  %vm1139 = vcmp.eq.s32.totalorder %v998, %v1134
  %vm1140 = vcmp.eq.s32.totalorder %v999, %v1134
  %vm1141 = vcmp.eq.s32.totalorder %v1000, %v1134
  %vm1142 = vcmp.eq.s32.totalorder %v1001, %v1134
  %vm1143 = vcmp.eq.s32.totalorder %v1002, %v1134
  %vm1144 = vcmp.eq.s32.totalorder %v1003, %v1134
  %vm1145 = vcmp.eq.s32.totalorder %v1004, %v1134
  %vm1146 = vcmp.eq.s32.totalorder %v1005, %v1134
  %vm1147 = vcmp.eq.s32.totalorder %v1006, %v1134
  %vm1148 = vcmp.eq.s32.totalorder %v1007, %v1134
  %vm1149 = vcmp.eq.s32.totalorder %v1008, %v1134
  %vm1150 = vcmp.eq.s32.totalorder %v1009, %v1134
  %v1151 = vsel %vm1135, %v919, 0.0
  %v1152 = vsel %vm1136, %v921, 0.0
  %v1153 = vsel %vm1137, %v924, 0.0
  %v1154 = vsel %vm1138, %v926, 0.0
  %v1155 = vsel %vm1139, %v929, 0.0
  %v1156 = vsel %vm1140, %v931, 0.0
  %v1157 = vsel %vm1141, %v934, 0.0
  %v1158 = vsel %vm1142, %v936, 0.0
  %v1159 = vsel %vm1143, %v939, 0.0
  %v1160 = vsel %vm1144, %v941, 0.0
  %v1161 = vsel %vm1145, %v944, 0.0
  %v1162 = vsel %vm1146, %v946, 0.0
  %v1163 = vsel %vm1147, %v949, 0.0
  %v1164 = vsel %vm1148, %v951, 0.0
  %v1165 = vsel %vm1149, %v954, 0.0
  %v1166 = vsel %vm1150, %v956, 0.0
  %v1167 = vadd.f32 %v1151, %v1152
  %v1168 = vadd.f32 %v1167, %v1153
  %v1169 = vadd.f32 %v1168, %v1154
  %v1170 = vadd.f32 %v1169, %v1155
  %v1171 = vadd.f32 %v1170, %v1156
  %v1172 = vadd.f32 %v1171, %v1157
  %v1173 = vadd.f32 %v1172, %v1158
  %v1174 = vadd.f32 %v1173, %v1159
  %v1175 = vadd.f32 %v1174, %v1160
  %v1176 = vadd.f32 %v1175, %v1161
  %v1177 = vadd.f32 %v1176, %v1162
  %v1178 = vadd.f32 %v1177, %v1163
  %v1179 = vadd.f32 %v1178, %v1164
  %v1180 = vadd.f32 %v1179, %v1165
  %v1181 = vadd.f32 %v1180, %v1166
  %v1182 = vrot.slane %v1181, 4
  %v1183 = vadd.f32 %v1181, %v1182
  %v1184 = vrot.slane %v1183, 2
  %v1185 = vadd.f32 %v1183, %v1184
  %v1186 = vrot.slane %v1185, 1
  %v1187 = vadd.f32 %v1185, %v1186
  %vm1188 = vcmp.eq.s32.totalorder %v994, 2
  %vm1189 = vcmp.eq.s32.totalorder %v995, 2
  %vm1190 = vcmp.eq.s32.totalorder %v996, 2
  %vm1191 = vcmp.eq.s32.totalorder %v997, 2
  %v1192 = vsel %vm1188, %v1187, %v1130
  %v1193 = vsel %vm1189, %v1187, %v1131
  %v1194 = vsel %vm1190, %v1187, %v1132
  %v1195 = vsel %vm1191, %v1187, %v1133
  %v1196 = vperm.slane %v989, 3
  %vm1197 = vcmp.eq.s32.totalorder %v994, %v1196
  %vm1198 = vcmp.eq.s32.totalorder %v995, %v1196
  %vm1199 = vcmp.eq.s32.totalorder %v996, %v1196
  %vm1200 = vcmp.eq.s32.totalorder %v997, %v1196
  %vm1201 = vcmp.eq.s32.totalorder %v998, %v1196
  %vm1202 = vcmp.eq.s32.totalorder %v999, %v1196
  %vm1203 = vcmp.eq.s32.totalorder %v1000, %v1196
  %vm1204 = vcmp.eq.s32.totalorder %v1001, %v1196
  %vm1205 = vcmp.eq.s32.totalorder %v1002, %v1196
  %vm1206 = vcmp.eq.s32.totalorder %v1003, %v1196
  %vm1207 = vcmp.eq.s32.totalorder %v1004, %v1196
  %vm1208 = vcmp.eq.s32.totalorder %v1005, %v1196
  %vm1209 = vcmp.eq.s32.totalorder %v1006, %v1196
  %vm1210 = vcmp.eq.s32.totalorder %v1007, %v1196
  %vm1211 = vcmp.eq.s32.totalorder %v1008, %v1196
  %vm1212 = vcmp.eq.s32.totalorder %v1009, %v1196
  %v1213 = vsel %vm1197, %v919, 0.0
  %v1214 = vsel %vm1198, %v921, 0.0
  %v1215 = vsel %vm1199, %v924, 0.0
  %v1216 = vsel %vm1200, %v926, 0.0
  %v1217 = vsel %vm1201, %v929, 0.0
  %v1218 = vsel %vm1202, %v931, 0.0
  %v1219 = vsel %vm1203, %v934, 0.0
  %v1220 = vsel %vm1204, %v936, 0.0
  %v1221 = vsel %vm1205, %v939, 0.0
  %v1222 = vsel %vm1206, %v941, 0.0
  %v1223 = vsel %vm1207, %v944, 0.0
  %v1224 = vsel %vm1208, %v946, 0.0
  %v1225 = vsel %vm1209, %v949, 0.0
  %v1226 = vsel %vm1210, %v951, 0.0
  %v1227 = vsel %vm1211, %v954, 0.0
  %v1228 = vsel %vm1212, %v956, 0.0
  %v1229 = vadd.f32 %v1213, %v1214
  %v1230 = vadd.f32 %v1229, %v1215
  %v1231 = vadd.f32 %v1230, %v1216
  %v1232 = vadd.f32 %v1231, %v1217
  %v1233 = vadd.f32 %v1232, %v1218
  %v1234 = vadd.f32 %v1233, %v1219
  %v1235 = vadd.f32 %v1234, %v1220
  %v1236 = vadd.f32 %v1235, %v1221
  %v1237 = vadd.f32 %v1236, %v1222
  %v1238 = vadd.f32 %v1237, %v1223
  %v1239 = vadd.f32 %v1238, %v1224
  %v1240 = vadd.f32 %v1239, %v1225
  %v1241 = vadd.f32 %v1240, %v1226
  %v1242 = vadd.f32 %v1241, %v1227
  %v1243 = vadd.f32 %v1242, %v1228
  %v1244 = vrot.slane %v1243, 4
  %v1245 = vadd.f32 %v1243, %v1244
  %v1246 = vrot.slane %v1245, 2
  %v1247 = vadd.f32 %v1245, %v1246
  %v1248 = vrot.slane %v1247, 1
  %v1249 = vadd.f32 %v1247, %v1248
  %vm1250 = vcmp.eq.s32.totalorder %v994, 3
  %vm1251 = vcmp.eq.s32.totalorder %v995, 3
  %vm1252 = vcmp.eq.s32.totalorder %v996, 3
  %vm1253 = vcmp.eq.s32.totalorder %v997, 3
  %v1254 = vsel %vm1250, %v1249, %v1192
  %v1255 = vsel %vm1251, %v1249, %v1193
  %v1256 = vsel %vm1252, %v1249, %v1194
  %v1257 = vsel %vm1253, %v1249, %v1195
  %v1258 = vperm.slane %v989, 4
  %vm1259 = vcmp.eq.s32.totalorder %v994, %v1258
  %vm1260 = vcmp.eq.s32.totalorder %v995, %v1258
  %vm1261 = vcmp.eq.s32.totalorder %v996, %v1258
  %vm1262 = vcmp.eq.s32.totalorder %v997, %v1258
  %vm1263 = vcmp.eq.s32.totalorder %v998, %v1258
  %vm1264 = vcmp.eq.s32.totalorder %v999, %v1258
  %vm1265 = vcmp.eq.s32.totalorder %v1000, %v1258
  %vm1266 = vcmp.eq.s32.totalorder %v1001, %v1258
  %vm1267 = vcmp.eq.s32.totalorder %v1002, %v1258
  %vm1268 = vcmp.eq.s32.totalorder %v1003, %v1258
  %vm1269 = vcmp.eq.s32.totalorder %v1004, %v1258
  %vm1270 = vcmp.eq.s32.totalorder %v1005, %v1258
  %vm1271 = vcmp.eq.s32.totalorder %v1006, %v1258
  %vm1272 = vcmp.eq.s32.totalorder %v1007, %v1258
  %vm1273 = vcmp.eq.s32.totalorder %v1008, %v1258
  %vm1274 = vcmp.eq.s32.totalorder %v1009, %v1258
  %v1275 = vsel %vm1259, %v919, 0.0
  %v1276 = vsel %vm1260, %v921, 0.0
  %v1277 = vsel %vm1261, %v924, 0.0
  %v1278 = vsel %vm1262, %v926, 0.0
  %v1279 = vsel %vm1263, %v929, 0.0
  %v1280 = vsel %vm1264, %v931, 0.0
  %v1281 = vsel %vm1265, %v934, 0.0
  %v1282 = vsel %vm1266, %v936, 0.0
  %v1283 = vsel %vm1267, %v939, 0.0
  %v1284 = vsel %vm1268, %v941, 0.0
  %v1285 = vsel %vm1269, %v944, 0.0
  %v1286 = vsel %vm1270, %v946, 0.0
  %v1287 = vsel %vm1271, %v949, 0.0
  %v1288 = vsel %vm1272, %v951, 0.0
  %v1289 = vsel %vm1273, %v954, 0.0
  %v1290 = vsel %vm1274, %v956, 0.0
  %v1291 = vadd.f32 %v1275, %v1276
  %v1292 = vadd.f32 %v1291, %v1277
  %v1293 = vadd.f32 %v1292, %v1278
  %v1294 = vadd.f32 %v1293, %v1279
  %v1295 = vadd.f32 %v1294, %v1280
  %v1296 = vadd.f32 %v1295, %v1281
  %v1297 = vadd.f32 %v1296, %v1282
  %v1298 = vadd.f32 %v1297, %v1283
  %v1299 = vadd.f32 %v1298, %v1284
  %v1300 = vadd.f32 %v1299, %v1285
  %v1301 = vadd.f32 %v1300, %v1286
  %v1302 = vadd.f32 %v1301, %v1287
  %v1303 = vadd.f32 %v1302, %v1288
  %v1304 = vadd.f32 %v1303, %v1289
  %v1305 = vadd.f32 %v1304, %v1290
  %v1306 = vrot.slane %v1305, 4
  %v1307 = vadd.f32 %v1305, %v1306
  %v1308 = vrot.slane %v1307, 2
  %v1309 = vadd.f32 %v1307, %v1308
  %v1310 = vrot.slane %v1309, 1
  %v1311 = vadd.f32 %v1309, %v1310
  %vm1312 = vcmp.eq.s32.totalorder %v994, 4
  %vm1313 = vcmp.eq.s32.totalorder %v995, 4
  %vm1314 = vcmp.eq.s32.totalorder %v996, 4
  %vm1315 = vcmp.eq.s32.totalorder %v997, 4
  %v1316 = vsel %vm1312, %v1311, %v1254
  %v1317 = vsel %vm1313, %v1311, %v1255
  %v1318 = vsel %vm1314, %v1311, %v1256
  %v1319 = vsel %vm1315, %v1311, %v1257
  %v1320 = vperm.slane %v989, 5
  %vm1321 = vcmp.eq.s32.totalorder %v994, %v1320
  %vm1322 = vcmp.eq.s32.totalorder %v995, %v1320
  %vm1323 = vcmp.eq.s32.totalorder %v996, %v1320
  %vm1324 = vcmp.eq.s32.totalorder %v997, %v1320
  %vm1325 = vcmp.eq.s32.totalorder %v998, %v1320
  %vm1326 = vcmp.eq.s32.totalorder %v999, %v1320
  %vm1327 = vcmp.eq.s32.totalorder %v1000, %v1320
  %vm1328 = vcmp.eq.s32.totalorder %v1001, %v1320
  %vm1329 = vcmp.eq.s32.totalorder %v1002, %v1320
  %vm1330 = vcmp.eq.s32.totalorder %v1003, %v1320
  %vm1331 = vcmp.eq.s32.totalorder %v1004, %v1320
  %vm1332 = vcmp.eq.s32.totalorder %v1005, %v1320
  %vm1333 = vcmp.eq.s32.totalorder %v1006, %v1320
  %vm1334 = vcmp.eq.s32.totalorder %v1007, %v1320
  %vm1335 = vcmp.eq.s32.totalorder %v1008, %v1320
  %vm1336 = vcmp.eq.s32.totalorder %v1009, %v1320
  %v1337 = vsel %vm1321, %v919, 0.0
  %v1338 = vsel %vm1322, %v921, 0.0
  %v1339 = vsel %vm1323, %v924, 0.0
  %v1340 = vsel %vm1324, %v926, 0.0
  %v1341 = vsel %vm1325, %v929, 0.0
  %v1342 = vsel %vm1326, %v931, 0.0
  %v1343 = vsel %vm1327, %v934, 0.0
  %v1344 = vsel %vm1328, %v936, 0.0
  %v1345 = vsel %vm1329, %v939, 0.0
  %v1346 = vsel %vm1330, %v941, 0.0
  %v1347 = vsel %vm1331, %v944, 0.0
  %v1348 = vsel %vm1332, %v946, 0.0
  %v1349 = vsel %vm1333, %v949, 0.0
  %v1350 = vsel %vm1334, %v951, 0.0
  %v1351 = vsel %vm1335, %v954, 0.0
  %v1352 = vsel %vm1336, %v956, 0.0
  %v1353 = vadd.f32 %v1337, %v1338
  %v1354 = vadd.f32 %v1353, %v1339
  %v1355 = vadd.f32 %v1354, %v1340
  %v1356 = vadd.f32 %v1355, %v1341
  %v1357 = vadd.f32 %v1356, %v1342
  %v1358 = vadd.f32 %v1357, %v1343
  %v1359 = vadd.f32 %v1358, %v1344
  %v1360 = vadd.f32 %v1359, %v1345
  %v1361 = vadd.f32 %v1360, %v1346
  %v1362 = vadd.f32 %v1361, %v1347
  %v1363 = vadd.f32 %v1362, %v1348
  %v1364 = vadd.f32 %v1363, %v1349
  %v1365 = vadd.f32 %v1364, %v1350
  %v1366 = vadd.f32 %v1365, %v1351
  %v1367 = vadd.f32 %v1366, %v1352
  %v1368 = vrot.slane %v1367, 4
  %v1369 = vadd.f32 %v1367, %v1368
  %v1370 = vrot.slane %v1369, 2
  %v1371 = vadd.f32 %v1369, %v1370
  %v1372 = vrot.slane %v1371, 1
  %v1373 = vadd.f32 %v1371, %v1372
  %vm1374 = vcmp.eq.s32.totalorder %v994, 5
  %vm1375 = vcmp.eq.s32.totalorder %v995, 5
  %vm1376 = vcmp.eq.s32.totalorder %v996, 5
  %vm1377 = vcmp.eq.s32.totalorder %v997, 5
  %v1378 = vsel %vm1374, %v1373, %v1316
  %v1379 = vsel %vm1375, %v1373, %v1317
  %v1380 = vsel %vm1376, %v1373, %v1318
  %v1381 = vsel %vm1377, %v1373, %v1319
  %v1382 = vperm.slane %v989, 6
  %vm1383 = vcmp.eq.s32.totalorder %v994, %v1382
  %vm1384 = vcmp.eq.s32.totalorder %v995, %v1382
  %vm1385 = vcmp.eq.s32.totalorder %v996, %v1382
  %vm1386 = vcmp.eq.s32.totalorder %v997, %v1382
  %vm1387 = vcmp.eq.s32.totalorder %v998, %v1382
  %vm1388 = vcmp.eq.s32.totalorder %v999, %v1382
  %vm1389 = vcmp.eq.s32.totalorder %v1000, %v1382
  %vm1390 = vcmp.eq.s32.totalorder %v1001, %v1382
  %vm1391 = vcmp.eq.s32.totalorder %v1002, %v1382
  %vm1392 = vcmp.eq.s32.totalorder %v1003, %v1382
  %vm1393 = vcmp.eq.s32.totalorder %v1004, %v1382
  %vm1394 = vcmp.eq.s32.totalorder %v1005, %v1382
  %vm1395 = vcmp.eq.s32.totalorder %v1006, %v1382
  %vm1396 = vcmp.eq.s32.totalorder %v1007, %v1382
  %vm1397 = vcmp.eq.s32.totalorder %v1008, %v1382
  %vm1398 = vcmp.eq.s32.totalorder %v1009, %v1382
  %v1399 = vsel %vm1383, %v919, 0.0
  %v1400 = vsel %vm1384, %v921, 0.0
  %v1401 = vsel %vm1385, %v924, 0.0
  %v1402 = vsel %vm1386, %v926, 0.0
  %v1403 = vsel %vm1387, %v929, 0.0
  %v1404 = vsel %vm1388, %v931, 0.0
  %v1405 = vsel %vm1389, %v934, 0.0
  %v1406 = vsel %vm1390, %v936, 0.0
  %v1407 = vsel %vm1391, %v939, 0.0
  %v1408 = vsel %vm1392, %v941, 0.0
  %v1409 = vsel %vm1393, %v944, 0.0
  %v1410 = vsel %vm1394, %v946, 0.0
  %v1411 = vsel %vm1395, %v949, 0.0
  %v1412 = vsel %vm1396, %v951, 0.0
  %v1413 = vsel %vm1397, %v954, 0.0
  %v1414 = vsel %vm1398, %v956, 0.0
  %v1415 = vadd.f32 %v1399, %v1400
  %v1416 = vadd.f32 %v1415, %v1401
  %v1417 = vadd.f32 %v1416, %v1402
  %v1418 = vadd.f32 %v1417, %v1403
  %v1419 = vadd.f32 %v1418, %v1404
  %v1420 = vadd.f32 %v1419, %v1405
  %v1421 = vadd.f32 %v1420, %v1406
  %v1422 = vadd.f32 %v1421, %v1407
  %v1423 = vadd.f32 %v1422, %v1408
  %v1424 = vadd.f32 %v1423, %v1409
  %v1425 = vadd.f32 %v1424, %v1410
  %v1426 = vadd.f32 %v1425, %v1411
  %v1427 = vadd.f32 %v1426, %v1412
  %v1428 = vadd.f32 %v1427, %v1413
  %v1429 = vadd.f32 %v1428, %v1414
  %v1430 = vrot.slane %v1429, 4
  %v1431 = vadd.f32 %v1429, %v1430
  %v1432 = vrot.slane %v1431, 2
  %v1433 = vadd.f32 %v1431, %v1432
  %v1434 = vrot.slane %v1433, 1
  %v1435 = vadd.f32 %v1433, %v1434
  %vm1436 = vcmp.eq.s32.totalorder %v994, 6
  %vm1437 = vcmp.eq.s32.totalorder %v995, 6
  %vm1438 = vcmp.eq.s32.totalorder %v996, 6
  %vm1439 = vcmp.eq.s32.totalorder %v997, 6
  %v1440 = vsel %vm1436, %v1435, %v1378
  %v1441 = vsel %vm1437, %v1435, %v1379
  %v1442 = vsel %vm1438, %v1435, %v1380
  %v1443 = vsel %vm1439, %v1435, %v1381
  %v1444 = vperm.slane %v989, 7
  %vm1445 = vcmp.eq.s32.totalorder %v994, %v1444
  %vm1446 = vcmp.eq.s32.totalorder %v995, %v1444
  %vm1447 = vcmp.eq.s32.totalorder %v996, %v1444
  %vm1448 = vcmp.eq.s32.totalorder %v997, %v1444
  %vm1449 = vcmp.eq.s32.totalorder %v998, %v1444
  %vm1450 = vcmp.eq.s32.totalorder %v999, %v1444
  %vm1451 = vcmp.eq.s32.totalorder %v1000, %v1444
  %vm1452 = vcmp.eq.s32.totalorder %v1001, %v1444
  %vm1453 = vcmp.eq.s32.totalorder %v1002, %v1444
  %vm1454 = vcmp.eq.s32.totalorder %v1003, %v1444
  %vm1455 = vcmp.eq.s32.totalorder %v1004, %v1444
  %vm1456 = vcmp.eq.s32.totalorder %v1005, %v1444
  %vm1457 = vcmp.eq.s32.totalorder %v1006, %v1444
  %vm1458 = vcmp.eq.s32.totalorder %v1007, %v1444
  %vm1459 = vcmp.eq.s32.totalorder %v1008, %v1444
  %vm1460 = vcmp.eq.s32.totalorder %v1009, %v1444
  %v1461 = vsel %vm1445, %v919, 0.0
  %v1462 = vsel %vm1446, %v921, 0.0
  %v1463 = vsel %vm1447, %v924, 0.0
  %v1464 = vsel %vm1448, %v926, 0.0
  %v1465 = vsel %vm1449, %v929, 0.0
  %v1466 = vsel %vm1450, %v931, 0.0
  %v1467 = vsel %vm1451, %v934, 0.0
  %v1468 = vsel %vm1452, %v936, 0.0
  %v1469 = vsel %vm1453, %v939, 0.0
  %v1470 = vsel %vm1454, %v941, 0.0
  %v1471 = vsel %vm1455, %v944, 0.0
  %v1472 = vsel %vm1456, %v946, 0.0
  %v1473 = vsel %vm1457, %v949, 0.0
  %v1474 = vsel %vm1458, %v951, 0.0
  %v1475 = vsel %vm1459, %v954, 0.0
  %v1476 = vsel %vm1460, %v956, 0.0
  %v1477 = vadd.f32 %v1461, %v1462
  %v1478 = vadd.f32 %v1477, %v1463
  %v1479 = vadd.f32 %v1478, %v1464
  %v1480 = vadd.f32 %v1479, %v1465
  %v1481 = vadd.f32 %v1480, %v1466
  %v1482 = vadd.f32 %v1481, %v1467
  %v1483 = vadd.f32 %v1482, %v1468
  %v1484 = vadd.f32 %v1483, %v1469
  %v1485 = vadd.f32 %v1484, %v1470
  %v1486 = vadd.f32 %v1485, %v1471
  %v1487 = vadd.f32 %v1486, %v1472
  %v1488 = vadd.f32 %v1487, %v1473
  %v1489 = vadd.f32 %v1488, %v1474
  %v1490 = vadd.f32 %v1489, %v1475
  %v1491 = vadd.f32 %v1490, %v1476
  %v1492 = vrot.slane %v1491, 4
  %v1493 = vadd.f32 %v1491, %v1492
  %v1494 = vrot.slane %v1493, 2
  %v1495 = vadd.f32 %v1493, %v1494
  %v1496 = vrot.slane %v1495, 1
  %v1497 = vadd.f32 %v1495, %v1496
  %vm1498 = vcmp.eq.s32.totalorder %v994, 7
  %vm1499 = vcmp.eq.s32.totalorder %v995, 7
  %vm1500 = vcmp.eq.s32.totalorder %v996, 7
  %vm1501 = vcmp.eq.s32.totalorder %v997, 7
  %v1502 = vsel %vm1498, %v1497, %v1440
  %v1503 = vsel %vm1499, %v1497, %v1441
  %v1504 = vsel %vm1500, %v1497, %v1442
  %v1505 = vsel %vm1501, %v1497, %v1443
  %v1506 = vperm.slane %v990, 0
  %vm1507 = vcmp.eq.s32.totalorder %v994, %v1506
  %vm1508 = vcmp.eq.s32.totalorder %v995, %v1506
  %vm1509 = vcmp.eq.s32.totalorder %v996, %v1506
  %vm1510 = vcmp.eq.s32.totalorder %v997, %v1506
  %vm1511 = vcmp.eq.s32.totalorder %v998, %v1506
  %vm1512 = vcmp.eq.s32.totalorder %v999, %v1506
  %vm1513 = vcmp.eq.s32.totalorder %v1000, %v1506
  %vm1514 = vcmp.eq.s32.totalorder %v1001, %v1506
  %vm1515 = vcmp.eq.s32.totalorder %v1002, %v1506
  %vm1516 = vcmp.eq.s32.totalorder %v1003, %v1506
  %vm1517 = vcmp.eq.s32.totalorder %v1004, %v1506
  %vm1518 = vcmp.eq.s32.totalorder %v1005, %v1506
  %vm1519 = vcmp.eq.s32.totalorder %v1006, %v1506
  %vm1520 = vcmp.eq.s32.totalorder %v1007, %v1506
  %vm1521 = vcmp.eq.s32.totalorder %v1008, %v1506
  %vm1522 = vcmp.eq.s32.totalorder %v1009, %v1506
  %v1523 = vsel %vm1507, %v919, 0.0
  %v1524 = vsel %vm1508, %v921, 0.0
  %v1525 = vsel %vm1509, %v924, 0.0
  %v1526 = vsel %vm1510, %v926, 0.0
  %v1527 = vsel %vm1511, %v929, 0.0
  %v1528 = vsel %vm1512, %v931, 0.0
  %v1529 = vsel %vm1513, %v934, 0.0
  %v1530 = vsel %vm1514, %v936, 0.0
  %v1531 = vsel %vm1515, %v939, 0.0
  %v1532 = vsel %vm1516, %v941, 0.0
  %v1533 = vsel %vm1517, %v944, 0.0
  %v1534 = vsel %vm1518, %v946, 0.0
  %v1535 = vsel %vm1519, %v949, 0.0
  %v1536 = vsel %vm1520, %v951, 0.0
  %v1537 = vsel %vm1521, %v954, 0.0
  %v1538 = vsel %vm1522, %v956, 0.0
  %v1539 = vadd.f32 %v1523, %v1524
  %v1540 = vadd.f32 %v1539, %v1525
  %v1541 = vadd.f32 %v1540, %v1526
  %v1542 = vadd.f32 %v1541, %v1527
  %v1543 = vadd.f32 %v1542, %v1528
  %v1544 = vadd.f32 %v1543, %v1529
  %v1545 = vadd.f32 %v1544, %v1530
  %v1546 = vadd.f32 %v1545, %v1531
  %v1547 = vadd.f32 %v1546, %v1532
  %v1548 = vadd.f32 %v1547, %v1533
  %v1549 = vadd.f32 %v1548, %v1534
  %v1550 = vadd.f32 %v1549, %v1535
  %v1551 = vadd.f32 %v1550, %v1536
  %v1552 = vadd.f32 %v1551, %v1537
  %v1553 = vadd.f32 %v1552, %v1538
  %v1554 = vrot.slane %v1553, 4
  %v1555 = vadd.f32 %v1553, %v1554
  %v1556 = vrot.slane %v1555, 2
  %v1557 = vadd.f32 %v1555, %v1556
  %v1558 = vrot.slane %v1557, 1
  %v1559 = vadd.f32 %v1557, %v1558
  %vm1560 = vcmp.eq.s32.totalorder %v994, 8
  %vm1561 = vcmp.eq.s32.totalorder %v995, 8
  %vm1562 = vcmp.eq.s32.totalorder %v996, 8
  %vm1563 = vcmp.eq.s32.totalorder %v997, 8
  %v1564 = vsel %vm1560, %v1559, %v1502
  %v1565 = vsel %vm1561, %v1559, %v1503
  %v1566 = vsel %vm1562, %v1559, %v1504
  %v1567 = vsel %vm1563, %v1559, %v1505
  %v1568 = vperm.slane %v990, 1
  %vm1569 = vcmp.eq.s32.totalorder %v994, %v1568
  %vm1570 = vcmp.eq.s32.totalorder %v995, %v1568
  %vm1571 = vcmp.eq.s32.totalorder %v996, %v1568
  %vm1572 = vcmp.eq.s32.totalorder %v997, %v1568
  %vm1573 = vcmp.eq.s32.totalorder %v998, %v1568
  %vm1574 = vcmp.eq.s32.totalorder %v999, %v1568
  %vm1575 = vcmp.eq.s32.totalorder %v1000, %v1568
  %vm1576 = vcmp.eq.s32.totalorder %v1001, %v1568
  %vm1577 = vcmp.eq.s32.totalorder %v1002, %v1568
  %vm1578 = vcmp.eq.s32.totalorder %v1003, %v1568
  %vm1579 = vcmp.eq.s32.totalorder %v1004, %v1568
  %vm1580 = vcmp.eq.s32.totalorder %v1005, %v1568
  %vm1581 = vcmp.eq.s32.totalorder %v1006, %v1568
  %vm1582 = vcmp.eq.s32.totalorder %v1007, %v1568
  %vm1583 = vcmp.eq.s32.totalorder %v1008, %v1568
  %vm1584 = vcmp.eq.s32.totalorder %v1009, %v1568
  %v1585 = vsel %vm1569, %v919, 0.0
  %v1586 = vsel %vm1570, %v921, 0.0
  %v1587 = vsel %vm1571, %v924, 0.0
  %v1588 = vsel %vm1572, %v926, 0.0
  %v1589 = vsel %vm1573, %v929, 0.0
  %v1590 = vsel %vm1574, %v931, 0.0
  %v1591 = vsel %vm1575, %v934, 0.0
  %v1592 = vsel %vm1576, %v936, 0.0
  %v1593 = vsel %vm1577, %v939, 0.0
  %v1594 = vsel %vm1578, %v941, 0.0
  %v1595 = vsel %vm1579, %v944, 0.0
  %v1596 = vsel %vm1580, %v946, 0.0
  %v1597 = vsel %vm1581, %v949, 0.0
  %v1598 = vsel %vm1582, %v951, 0.0
  %v1599 = vsel %vm1583, %v954, 0.0
  %v1600 = vsel %vm1584, %v956, 0.0
  %v1601 = vadd.f32 %v1585, %v1586
  %v1602 = vadd.f32 %v1601, %v1587
  %v1603 = vadd.f32 %v1602, %v1588
  %v1604 = vadd.f32 %v1603, %v1589
  %v1605 = vadd.f32 %v1604, %v1590
  %v1606 = vadd.f32 %v1605, %v1591
  %v1607 = vadd.f32 %v1606, %v1592
  %v1608 = vadd.f32 %v1607, %v1593
  %v1609 = vadd.f32 %v1608, %v1594
  %v1610 = vadd.f32 %v1609, %v1595
  %v1611 = vadd.f32 %v1610, %v1596
  %v1612 = vadd.f32 %v1611, %v1597
  %v1613 = vadd.f32 %v1612, %v1598
  %v1614 = vadd.f32 %v1613, %v1599
  %v1615 = vadd.f32 %v1614, %v1600
  %v1616 = vrot.slane %v1615, 4
  %v1617 = vadd.f32 %v1615, %v1616
  %v1618 = vrot.slane %v1617, 2
  %v1619 = vadd.f32 %v1617, %v1618
  %v1620 = vrot.slane %v1619, 1
  %v1621 = vadd.f32 %v1619, %v1620
  %vm1622 = vcmp.eq.s32.totalorder %v994, 9
  %vm1623 = vcmp.eq.s32.totalorder %v995, 9
  %vm1624 = vcmp.eq.s32.totalorder %v996, 9
  %vm1625 = vcmp.eq.s32.totalorder %v997, 9
  %v1626 = vsel %vm1622, %v1621, %v1564
  %v1627 = vsel %vm1623, %v1621, %v1565
  %v1628 = vsel %vm1624, %v1621, %v1566
  %v1629 = vsel %vm1625, %v1621, %v1567
  %v1630 = vperm.slane %v990, 2
  %vm1631 = vcmp.eq.s32.totalorder %v994, %v1630
  %vm1632 = vcmp.eq.s32.totalorder %v995, %v1630
  %vm1633 = vcmp.eq.s32.totalorder %v996, %v1630
  %vm1634 = vcmp.eq.s32.totalorder %v997, %v1630
  %vm1635 = vcmp.eq.s32.totalorder %v998, %v1630
  %vm1636 = vcmp.eq.s32.totalorder %v999, %v1630
  %vm1637 = vcmp.eq.s32.totalorder %v1000, %v1630
  %vm1638 = vcmp.eq.s32.totalorder %v1001, %v1630
  %vm1639 = vcmp.eq.s32.totalorder %v1002, %v1630
  %vm1640 = vcmp.eq.s32.totalorder %v1003, %v1630
  %vm1641 = vcmp.eq.s32.totalorder %v1004, %v1630
  %vm1642 = vcmp.eq.s32.totalorder %v1005, %v1630
  %vm1643 = vcmp.eq.s32.totalorder %v1006, %v1630
  %vm1644 = vcmp.eq.s32.totalorder %v1007, %v1630
  %vm1645 = vcmp.eq.s32.totalorder %v1008, %v1630
  %vm1646 = vcmp.eq.s32.totalorder %v1009, %v1630
  %v1647 = vsel %vm1631, %v919, 0.0
  %v1648 = vsel %vm1632, %v921, 0.0
  %v1649 = vsel %vm1633, %v924, 0.0
  %v1650 = vsel %vm1634, %v926, 0.0
  %v1651 = vsel %vm1635, %v929, 0.0
  %v1652 = vsel %vm1636, %v931, 0.0
  %v1653 = vsel %vm1637, %v934, 0.0
  %v1654 = vsel %vm1638, %v936, 0.0
  %v1655 = vsel %vm1639, %v939, 0.0
  %v1656 = vsel %vm1640, %v941, 0.0
  %v1657 = vsel %vm1641, %v944, 0.0
  %v1658 = vsel %vm1642, %v946, 0.0
  %v1659 = vsel %vm1643, %v949, 0.0
  %v1660 = vsel %vm1644, %v951, 0.0
  %v1661 = vsel %vm1645, %v954, 0.0
  %v1662 = vsel %vm1646, %v956, 0.0
  %v1663 = vadd.f32 %v1647, %v1648
  %v1664 = vadd.f32 %v1663, %v1649
  %v1665 = vadd.f32 %v1664, %v1650
  %v1666 = vadd.f32 %v1665, %v1651
  %v1667 = vadd.f32 %v1666, %v1652
  %v1668 = vadd.f32 %v1667, %v1653
  %v1669 = vadd.f32 %v1668, %v1654
  %v1670 = vadd.f32 %v1669, %v1655
  %v1671 = vadd.f32 %v1670, %v1656
  %v1672 = vadd.f32 %v1671, %v1657
  %v1673 = vadd.f32 %v1672, %v1658
  %v1674 = vadd.f32 %v1673, %v1659
  %v1675 = vadd.f32 %v1674, %v1660
  %v1676 = vadd.f32 %v1675, %v1661
  %v1677 = vadd.f32 %v1676, %v1662
  %v1678 = vrot.slane %v1677, 4
  %v1679 = vadd.f32 %v1677, %v1678
  %v1680 = vrot.slane %v1679, 2
  %v1681 = vadd.f32 %v1679, %v1680
  %v1682 = vrot.slane %v1681, 1
  %v1683 = vadd.f32 %v1681, %v1682
  %vm1684 = vcmp.eq.s32.totalorder %v994, 10
  %vm1685 = vcmp.eq.s32.totalorder %v995, 10
  %vm1686 = vcmp.eq.s32.totalorder %v996, 10
  %vm1687 = vcmp.eq.s32.totalorder %v997, 10
  %v1688 = vsel %vm1684, %v1683, %v1626
  %v1689 = vsel %vm1685, %v1683, %v1627
  %v1690 = vsel %vm1686, %v1683, %v1628
  %v1691 = vsel %vm1687, %v1683, %v1629
  %v1692 = vperm.slane %v990, 3
  %vm1693 = vcmp.eq.s32.totalorder %v994, %v1692
  %vm1694 = vcmp.eq.s32.totalorder %v995, %v1692
  %vm1695 = vcmp.eq.s32.totalorder %v996, %v1692
  %vm1696 = vcmp.eq.s32.totalorder %v997, %v1692
  %vm1697 = vcmp.eq.s32.totalorder %v998, %v1692
  %vm1698 = vcmp.eq.s32.totalorder %v999, %v1692
  %vm1699 = vcmp.eq.s32.totalorder %v1000, %v1692
  %vm1700 = vcmp.eq.s32.totalorder %v1001, %v1692
  %vm1701 = vcmp.eq.s32.totalorder %v1002, %v1692
  %vm1702 = vcmp.eq.s32.totalorder %v1003, %v1692
  %vm1703 = vcmp.eq.s32.totalorder %v1004, %v1692
  %vm1704 = vcmp.eq.s32.totalorder %v1005, %v1692
  %vm1705 = vcmp.eq.s32.totalorder %v1006, %v1692
  %vm1706 = vcmp.eq.s32.totalorder %v1007, %v1692
  %vm1707 = vcmp.eq.s32.totalorder %v1008, %v1692
  %vm1708 = vcmp.eq.s32.totalorder %v1009, %v1692
  %v1709 = vsel %vm1693, %v919, 0.0
  %v1710 = vsel %vm1694, %v921, 0.0
  %v1711 = vsel %vm1695, %v924, 0.0
  %v1712 = vsel %vm1696, %v926, 0.0
  %v1713 = vsel %vm1697, %v929, 0.0
  %v1714 = vsel %vm1698, %v931, 0.0
  %v1715 = vsel %vm1699, %v934, 0.0
  %v1716 = vsel %vm1700, %v936, 0.0
  %v1717 = vsel %vm1701, %v939, 0.0
  %v1718 = vsel %vm1702, %v941, 0.0
  %v1719 = vsel %vm1703, %v944, 0.0
  %v1720 = vsel %vm1704, %v946, 0.0
  %v1721 = vsel %vm1705, %v949, 0.0
  %v1722 = vsel %vm1706, %v951, 0.0
  %v1723 = vsel %vm1707, %v954, 0.0
  %v1724 = vsel %vm1708, %v956, 0.0
  %v1725 = vadd.f32 %v1709, %v1710
  %v1726 = vadd.f32 %v1725, %v1711
  %v1727 = vadd.f32 %v1726, %v1712
  %v1728 = vadd.f32 %v1727, %v1713
  %v1729 = vadd.f32 %v1728, %v1714
  %v1730 = vadd.f32 %v1729, %v1715
  %v1731 = vadd.f32 %v1730, %v1716
  %v1732 = vadd.f32 %v1731, %v1717
  %v1733 = vadd.f32 %v1732, %v1718
  %v1734 = vadd.f32 %v1733, %v1719
  %v1735 = vadd.f32 %v1734, %v1720
  %v1736 = vadd.f32 %v1735, %v1721
  %v1737 = vadd.f32 %v1736, %v1722
  %v1738 = vadd.f32 %v1737, %v1723
  %v1739 = vadd.f32 %v1738, %v1724
  %v1740 = vrot.slane %v1739, 4
  %v1741 = vadd.f32 %v1739, %v1740
  %v1742 = vrot.slane %v1741, 2
  %v1743 = vadd.f32 %v1741, %v1742
  %v1744 = vrot.slane %v1743, 1
  %v1745 = vadd.f32 %v1743, %v1744
  %vm1746 = vcmp.eq.s32.totalorder %v994, 11
  %vm1747 = vcmp.eq.s32.totalorder %v995, 11
  %vm1748 = vcmp.eq.s32.totalorder %v996, 11
  %vm1749 = vcmp.eq.s32.totalorder %v997, 11
  %v1750 = vsel %vm1746, %v1745, %v1688
  %v1751 = vsel %vm1747, %v1745, %v1689
  %v1752 = vsel %vm1748, %v1745, %v1690
  %v1753 = vsel %vm1749, %v1745, %v1691
  %v1754 = vperm.slane %v990, 4
  %vm1755 = vcmp.eq.s32.totalorder %v994, %v1754
  %vm1756 = vcmp.eq.s32.totalorder %v995, %v1754
  %vm1757 = vcmp.eq.s32.totalorder %v996, %v1754
  %vm1758 = vcmp.eq.s32.totalorder %v997, %v1754
  %vm1759 = vcmp.eq.s32.totalorder %v998, %v1754
  %vm1760 = vcmp.eq.s32.totalorder %v999, %v1754
  %vm1761 = vcmp.eq.s32.totalorder %v1000, %v1754
  %vm1762 = vcmp.eq.s32.totalorder %v1001, %v1754
  %vm1763 = vcmp.eq.s32.totalorder %v1002, %v1754
  %vm1764 = vcmp.eq.s32.totalorder %v1003, %v1754
  %vm1765 = vcmp.eq.s32.totalorder %v1004, %v1754
  %vm1766 = vcmp.eq.s32.totalorder %v1005, %v1754
  %vm1767 = vcmp.eq.s32.totalorder %v1006, %v1754
  %vm1768 = vcmp.eq.s32.totalorder %v1007, %v1754
  %vm1769 = vcmp.eq.s32.totalorder %v1008, %v1754
  %vm1770 = vcmp.eq.s32.totalorder %v1009, %v1754
  %v1771 = vsel %vm1755, %v919, 0.0
  %v1772 = vsel %vm1756, %v921, 0.0
  %v1773 = vsel %vm1757, %v924, 0.0
  %v1774 = vsel %vm1758, %v926, 0.0
  %v1775 = vsel %vm1759, %v929, 0.0
  %v1776 = vsel %vm1760, %v931, 0.0
  %v1777 = vsel %vm1761, %v934, 0.0
  %v1778 = vsel %vm1762, %v936, 0.0
  %v1779 = vsel %vm1763, %v939, 0.0
  %v1780 = vsel %vm1764, %v941, 0.0
  %v1781 = vsel %vm1765, %v944, 0.0
  %v1782 = vsel %vm1766, %v946, 0.0
  %v1783 = vsel %vm1767, %v949, 0.0
  %v1784 = vsel %vm1768, %v951, 0.0
  %v1785 = vsel %vm1769, %v954, 0.0
  %v1786 = vsel %vm1770, %v956, 0.0
  %v1787 = vadd.f32 %v1771, %v1772
  %v1788 = vadd.f32 %v1787, %v1773
  %v1789 = vadd.f32 %v1788, %v1774
  %v1790 = vadd.f32 %v1789, %v1775
  %v1791 = vadd.f32 %v1790, %v1776
  %v1792 = vadd.f32 %v1791, %v1777
  %v1793 = vadd.f32 %v1792, %v1778
  %v1794 = vadd.f32 %v1793, %v1779
  %v1795 = vadd.f32 %v1794, %v1780
  %v1796 = vadd.f32 %v1795, %v1781
  %v1797 = vadd.f32 %v1796, %v1782
  %v1798 = vadd.f32 %v1797, %v1783
  %v1799 = vadd.f32 %v1798, %v1784
  %v1800 = vadd.f32 %v1799, %v1785
  %v1801 = vadd.f32 %v1800, %v1786
  %v1802 = vrot.slane %v1801, 4
  %v1803 = vadd.f32 %v1801, %v1802
  %v1804 = vrot.slane %v1803, 2
  %v1805 = vadd.f32 %v1803, %v1804
  %v1806 = vrot.slane %v1805, 1
  %v1807 = vadd.f32 %v1805, %v1806
  %vm1808 = vcmp.eq.s32.totalorder %v994, 12
  %vm1809 = vcmp.eq.s32.totalorder %v995, 12
  %vm1810 = vcmp.eq.s32.totalorder %v996, 12
  %vm1811 = vcmp.eq.s32.totalorder %v997, 12
  %v1812 = vsel %vm1808, %v1807, %v1750
  %v1813 = vsel %vm1809, %v1807, %v1751
  %v1814 = vsel %vm1810, %v1807, %v1752
  %v1815 = vsel %vm1811, %v1807, %v1753
  %v1816 = vperm.slane %v990, 5
  %vm1817 = vcmp.eq.s32.totalorder %v994, %v1816
  %vm1818 = vcmp.eq.s32.totalorder %v995, %v1816
  %vm1819 = vcmp.eq.s32.totalorder %v996, %v1816
  %vm1820 = vcmp.eq.s32.totalorder %v997, %v1816
  %vm1821 = vcmp.eq.s32.totalorder %v998, %v1816
  %vm1822 = vcmp.eq.s32.totalorder %v999, %v1816
  %vm1823 = vcmp.eq.s32.totalorder %v1000, %v1816
  %vm1824 = vcmp.eq.s32.totalorder %v1001, %v1816
  %vm1825 = vcmp.eq.s32.totalorder %v1002, %v1816
  %vm1826 = vcmp.eq.s32.totalorder %v1003, %v1816
  %vm1827 = vcmp.eq.s32.totalorder %v1004, %v1816
  %vm1828 = vcmp.eq.s32.totalorder %v1005, %v1816
  %vm1829 = vcmp.eq.s32.totalorder %v1006, %v1816
  %vm1830 = vcmp.eq.s32.totalorder %v1007, %v1816
  %vm1831 = vcmp.eq.s32.totalorder %v1008, %v1816
  %vm1832 = vcmp.eq.s32.totalorder %v1009, %v1816
  %v1833 = vsel %vm1817, %v919, 0.0
  %v1834 = vsel %vm1818, %v921, 0.0
  %v1835 = vsel %vm1819, %v924, 0.0
  %v1836 = vsel %vm1820, %v926, 0.0
  %v1837 = vsel %vm1821, %v929, 0.0
  %v1838 = vsel %vm1822, %v931, 0.0
  %v1839 = vsel %vm1823, %v934, 0.0
  %v1840 = vsel %vm1824, %v936, 0.0
  %v1841 = vsel %vm1825, %v939, 0.0
  %v1842 = vsel %vm1826, %v941, 0.0
  %v1843 = vsel %vm1827, %v944, 0.0
  %v1844 = vsel %vm1828, %v946, 0.0
  %v1845 = vsel %vm1829, %v949, 0.0
  %v1846 = vsel %vm1830, %v951, 0.0
  %v1847 = vsel %vm1831, %v954, 0.0
  %v1848 = vsel %vm1832, %v956, 0.0
  %v1849 = vadd.f32 %v1833, %v1834
  %v1850 = vadd.f32 %v1849, %v1835
  %v1851 = vadd.f32 %v1850, %v1836
  %v1852 = vadd.f32 %v1851, %v1837
  %v1853 = vadd.f32 %v1852, %v1838
  %v1854 = vadd.f32 %v1853, %v1839
  %v1855 = vadd.f32 %v1854, %v1840
  %v1856 = vadd.f32 %v1855, %v1841
  %v1857 = vadd.f32 %v1856, %v1842
  %v1858 = vadd.f32 %v1857, %v1843
  %v1859 = vadd.f32 %v1858, %v1844
  %v1860 = vadd.f32 %v1859, %v1845
  %v1861 = vadd.f32 %v1860, %v1846
  %v1862 = vadd.f32 %v1861, %v1847
  %v1863 = vadd.f32 %v1862, %v1848
  %v1864 = vrot.slane %v1863, 4
  %v1865 = vadd.f32 %v1863, %v1864
  %v1866 = vrot.slane %v1865, 2
  %v1867 = vadd.f32 %v1865, %v1866
  %v1868 = vrot.slane %v1867, 1
  %v1869 = vadd.f32 %v1867, %v1868
  %vm1870 = vcmp.eq.s32.totalorder %v994, 13
  %vm1871 = vcmp.eq.s32.totalorder %v995, 13
  %vm1872 = vcmp.eq.s32.totalorder %v996, 13
  %vm1873 = vcmp.eq.s32.totalorder %v997, 13
  %v1874 = vsel %vm1870, %v1869, %v1812
  %v1875 = vsel %vm1871, %v1869, %v1813
  %v1876 = vsel %vm1872, %v1869, %v1814
  %v1877 = vsel %vm1873, %v1869, %v1815
  %v1878 = vperm.slane %v990, 6
  %vm1879 = vcmp.eq.s32.totalorder %v994, %v1878
  %vm1880 = vcmp.eq.s32.totalorder %v995, %v1878
  %vm1881 = vcmp.eq.s32.totalorder %v996, %v1878
  %vm1882 = vcmp.eq.s32.totalorder %v997, %v1878
  %vm1883 = vcmp.eq.s32.totalorder %v998, %v1878
  %vm1884 = vcmp.eq.s32.totalorder %v999, %v1878
  %vm1885 = vcmp.eq.s32.totalorder %v1000, %v1878
  %vm1886 = vcmp.eq.s32.totalorder %v1001, %v1878
  %vm1887 = vcmp.eq.s32.totalorder %v1002, %v1878
  %vm1888 = vcmp.eq.s32.totalorder %v1003, %v1878
  %vm1889 = vcmp.eq.s32.totalorder %v1004, %v1878
  %vm1890 = vcmp.eq.s32.totalorder %v1005, %v1878
  %vm1891 = vcmp.eq.s32.totalorder %v1006, %v1878
  %vm1892 = vcmp.eq.s32.totalorder %v1007, %v1878
  %vm1893 = vcmp.eq.s32.totalorder %v1008, %v1878
  %vm1894 = vcmp.eq.s32.totalorder %v1009, %v1878
  %v1895 = vsel %vm1879, %v919, 0.0
  %v1896 = vsel %vm1880, %v921, 0.0
  %v1897 = vsel %vm1881, %v924, 0.0
  %v1898 = vsel %vm1882, %v926, 0.0
  %v1899 = vsel %vm1883, %v929, 0.0
  %v1900 = vsel %vm1884, %v931, 0.0
  %v1901 = vsel %vm1885, %v934, 0.0
  %v1902 = vsel %vm1886, %v936, 0.0
  %v1903 = vsel %vm1887, %v939, 0.0
  %v1904 = vsel %vm1888, %v941, 0.0
  %v1905 = vsel %vm1889, %v944, 0.0
  %v1906 = vsel %vm1890, %v946, 0.0
  %v1907 = vsel %vm1891, %v949, 0.0
  %v1908 = vsel %vm1892, %v951, 0.0
  %v1909 = vsel %vm1893, %v954, 0.0
  %v1910 = vsel %vm1894, %v956, 0.0
  %v1911 = vadd.f32 %v1895, %v1896
  %v1912 = vadd.f32 %v1911, %v1897
  %v1913 = vadd.f32 %v1912, %v1898
  %v1914 = vadd.f32 %v1913, %v1899
  %v1915 = vadd.f32 %v1914, %v1900
  %v1916 = vadd.f32 %v1915, %v1901
  %v1917 = vadd.f32 %v1916, %v1902
  %v1918 = vadd.f32 %v1917, %v1903
  %v1919 = vadd.f32 %v1918, %v1904
  %v1920 = vadd.f32 %v1919, %v1905
  %v1921 = vadd.f32 %v1920, %v1906
  %v1922 = vadd.f32 %v1921, %v1907
  %v1923 = vadd.f32 %v1922, %v1908
  %v1924 = vadd.f32 %v1923, %v1909
  %v1925 = vadd.f32 %v1924, %v1910
  %v1926 = vrot.slane %v1925, 4
  %v1927 = vadd.f32 %v1925, %v1926
  %v1928 = vrot.slane %v1927, 2
  %v1929 = vadd.f32 %v1927, %v1928
  %v1930 = vrot.slane %v1929, 1
  %v1931 = vadd.f32 %v1929, %v1930
  %vm1932 = vcmp.eq.s32.totalorder %v994, 14
  %vm1933 = vcmp.eq.s32.totalorder %v995, 14
  %vm1934 = vcmp.eq.s32.totalorder %v996, 14
  %vm1935 = vcmp.eq.s32.totalorder %v997, 14
  %v1936 = vsel %vm1932, %v1931, %v1874
  %v1937 = vsel %vm1933, %v1931, %v1875
  %v1938 = vsel %vm1934, %v1931, %v1876
  %v1939 = vsel %vm1935, %v1931, %v1877
  %v1940 = vperm.slane %v990, 7
  %vm1941 = vcmp.eq.s32.totalorder %v994, %v1940
  %vm1942 = vcmp.eq.s32.totalorder %v995, %v1940
  %vm1943 = vcmp.eq.s32.totalorder %v996, %v1940
  %vm1944 = vcmp.eq.s32.totalorder %v997, %v1940
  %vm1945 = vcmp.eq.s32.totalorder %v998, %v1940
  %vm1946 = vcmp.eq.s32.totalorder %v999, %v1940
  %vm1947 = vcmp.eq.s32.totalorder %v1000, %v1940
  %vm1948 = vcmp.eq.s32.totalorder %v1001, %v1940
  %vm1949 = vcmp.eq.s32.totalorder %v1002, %v1940
  %vm1950 = vcmp.eq.s32.totalorder %v1003, %v1940
  %vm1951 = vcmp.eq.s32.totalorder %v1004, %v1940
  %vm1952 = vcmp.eq.s32.totalorder %v1005, %v1940
  %vm1953 = vcmp.eq.s32.totalorder %v1006, %v1940
  %vm1954 = vcmp.eq.s32.totalorder %v1007, %v1940
  %vm1955 = vcmp.eq.s32.totalorder %v1008, %v1940
  %vm1956 = vcmp.eq.s32.totalorder %v1009, %v1940
  %v1957 = vsel %vm1941, %v919, 0.0
  %v1958 = vsel %vm1942, %v921, 0.0
  %v1959 = vsel %vm1943, %v924, 0.0
  %v1960 = vsel %vm1944, %v926, 0.0
  %v1961 = vsel %vm1945, %v929, 0.0
  %v1962 = vsel %vm1946, %v931, 0.0
  %v1963 = vsel %vm1947, %v934, 0.0
  %v1964 = vsel %vm1948, %v936, 0.0
  %v1965 = vsel %vm1949, %v939, 0.0
  %v1966 = vsel %vm1950, %v941, 0.0
  %v1967 = vsel %vm1951, %v944, 0.0
  %v1968 = vsel %vm1952, %v946, 0.0
  %v1969 = vsel %vm1953, %v949, 0.0
  %v1970 = vsel %vm1954, %v951, 0.0
  %v1971 = vsel %vm1955, %v954, 0.0
  %v1972 = vsel %vm1956, %v956, 0.0
  %v1973 = vadd.f32 %v1957, %v1958
  %v1974 = vadd.f32 %v1973, %v1959
  %v1975 = vadd.f32 %v1974, %v1960
  %v1976 = vadd.f32 %v1975, %v1961
  %v1977 = vadd.f32 %v1976, %v1962
  %v1978 = vadd.f32 %v1977, %v1963
  %v1979 = vadd.f32 %v1978, %v1964
  %v1980 = vadd.f32 %v1979, %v1965
  %v1981 = vadd.f32 %v1980, %v1966
  %v1982 = vadd.f32 %v1981, %v1967
  %v1983 = vadd.f32 %v1982, %v1968
  %v1984 = vadd.f32 %v1983, %v1969
  %v1985 = vadd.f32 %v1984, %v1970
  %v1986 = vadd.f32 %v1985, %v1971
  %v1987 = vadd.f32 %v1986, %v1972
  %v1988 = vrot.slane %v1987, 4
  %v1989 = vadd.f32 %v1987, %v1988
  %v1990 = vrot.slane %v1989, 2
  %v1991 = vadd.f32 %v1989, %v1990
  %v1992 = vrot.slane %v1991, 1
  %v1993 = vadd.f32 %v1991, %v1992
  %vm1994 = vcmp.eq.s32.totalorder %v994, 15
  %vm1995 = vcmp.eq.s32.totalorder %v995, 15
  %vm1996 = vcmp.eq.s32.totalorder %v996, 15
  %vm1997 = vcmp.eq.s32.totalorder %v997, 15
  %v1998 = vsel %vm1994, %v1993, %v1936
  %v1999 = vsel %vm1995, %v1993, %v1937
  %v2000 = vsel %vm1996, %v1993, %v1938
  %v2001 = vsel %vm1997, %v1993, %v1939
  %v2002 = vperm.slane %v991, 0
  %vm2003 = vcmp.eq.s32.totalorder %v994, %v2002
  %vm2004 = vcmp.eq.s32.totalorder %v995, %v2002
  %vm2005 = vcmp.eq.s32.totalorder %v996, %v2002
  %vm2006 = vcmp.eq.s32.totalorder %v997, %v2002
  %vm2007 = vcmp.eq.s32.totalorder %v998, %v2002
  %vm2008 = vcmp.eq.s32.totalorder %v999, %v2002
  %vm2009 = vcmp.eq.s32.totalorder %v1000, %v2002
  %vm2010 = vcmp.eq.s32.totalorder %v1001, %v2002
  %vm2011 = vcmp.eq.s32.totalorder %v1002, %v2002
  %vm2012 = vcmp.eq.s32.totalorder %v1003, %v2002
  %vm2013 = vcmp.eq.s32.totalorder %v1004, %v2002
  %vm2014 = vcmp.eq.s32.totalorder %v1005, %v2002
  %vm2015 = vcmp.eq.s32.totalorder %v1006, %v2002
  %vm2016 = vcmp.eq.s32.totalorder %v1007, %v2002
  %vm2017 = vcmp.eq.s32.totalorder %v1008, %v2002
  %vm2018 = vcmp.eq.s32.totalorder %v1009, %v2002
  %v2019 = vsel %vm2003, %v919, 0.0
  %v2020 = vsel %vm2004, %v921, 0.0
  %v2021 = vsel %vm2005, %v924, 0.0
  %v2022 = vsel %vm2006, %v926, 0.0
  %v2023 = vsel %vm2007, %v929, 0.0
  %v2024 = vsel %vm2008, %v931, 0.0
  %v2025 = vsel %vm2009, %v934, 0.0
  %v2026 = vsel %vm2010, %v936, 0.0
  %v2027 = vsel %vm2011, %v939, 0.0
  %v2028 = vsel %vm2012, %v941, 0.0
  %v2029 = vsel %vm2013, %v944, 0.0
  %v2030 = vsel %vm2014, %v946, 0.0
  %v2031 = vsel %vm2015, %v949, 0.0
  %v2032 = vsel %vm2016, %v951, 0.0
  %v2033 = vsel %vm2017, %v954, 0.0
  %v2034 = vsel %vm2018, %v956, 0.0
  %v2035 = vadd.f32 %v2019, %v2020
  %v2036 = vadd.f32 %v2035, %v2021
  %v2037 = vadd.f32 %v2036, %v2022
  %v2038 = vadd.f32 %v2037, %v2023
  %v2039 = vadd.f32 %v2038, %v2024
  %v2040 = vadd.f32 %v2039, %v2025
  %v2041 = vadd.f32 %v2040, %v2026
  %v2042 = vadd.f32 %v2041, %v2027
  %v2043 = vadd.f32 %v2042, %v2028
  %v2044 = vadd.f32 %v2043, %v2029
  %v2045 = vadd.f32 %v2044, %v2030
  %v2046 = vadd.f32 %v2045, %v2031
  %v2047 = vadd.f32 %v2046, %v2032
  %v2048 = vadd.f32 %v2047, %v2033
  %v2049 = vadd.f32 %v2048, %v2034
  %v2050 = vrot.slane %v2049, 4
  %v2051 = vadd.f32 %v2049, %v2050
  %v2052 = vrot.slane %v2051, 2
  %v2053 = vadd.f32 %v2051, %v2052
  %v2054 = vrot.slane %v2053, 1
  %v2055 = vadd.f32 %v2053, %v2054
  %vm2056 = vcmp.eq.s32.totalorder %v994, 16
  %vm2057 = vcmp.eq.s32.totalorder %v995, 16
  %vm2058 = vcmp.eq.s32.totalorder %v996, 16
  %vm2059 = vcmp.eq.s32.totalorder %v997, 16
  %v2060 = vsel %vm2056, %v2055, %v1998
  %v2061 = vsel %vm2057, %v2055, %v1999
  %v2062 = vsel %vm2058, %v2055, %v2000
  %v2063 = vsel %vm2059, %v2055, %v2001
  %v2064 = vperm.slane %v991, 1
  %vm2065 = vcmp.eq.s32.totalorder %v994, %v2064
  %vm2066 = vcmp.eq.s32.totalorder %v995, %v2064
  %vm2067 = vcmp.eq.s32.totalorder %v996, %v2064
  %vm2068 = vcmp.eq.s32.totalorder %v997, %v2064
  %vm2069 = vcmp.eq.s32.totalorder %v998, %v2064
  %vm2070 = vcmp.eq.s32.totalorder %v999, %v2064
  %vm2071 = vcmp.eq.s32.totalorder %v1000, %v2064
  %vm2072 = vcmp.eq.s32.totalorder %v1001, %v2064
  %vm2073 = vcmp.eq.s32.totalorder %v1002, %v2064
  %vm2074 = vcmp.eq.s32.totalorder %v1003, %v2064
  %vm2075 = vcmp.eq.s32.totalorder %v1004, %v2064
  %vm2076 = vcmp.eq.s32.totalorder %v1005, %v2064
  %vm2077 = vcmp.eq.s32.totalorder %v1006, %v2064
  %vm2078 = vcmp.eq.s32.totalorder %v1007, %v2064
  %vm2079 = vcmp.eq.s32.totalorder %v1008, %v2064
  %vm2080 = vcmp.eq.s32.totalorder %v1009, %v2064
  %v2081 = vsel %vm2065, %v919, 0.0
  %v2082 = vsel %vm2066, %v921, 0.0
  %v2083 = vsel %vm2067, %v924, 0.0
  %v2084 = vsel %vm2068, %v926, 0.0
  %v2085 = vsel %vm2069, %v929, 0.0
  %v2086 = vsel %vm2070, %v931, 0.0
  %v2087 = vsel %vm2071, %v934, 0.0
  %v2088 = vsel %vm2072, %v936, 0.0
  %v2089 = vsel %vm2073, %v939, 0.0
  %v2090 = vsel %vm2074, %v941, 0.0
  %v2091 = vsel %vm2075, %v944, 0.0
  %v2092 = vsel %vm2076, %v946, 0.0
  %v2093 = vsel %vm2077, %v949, 0.0
  %v2094 = vsel %vm2078, %v951, 0.0
  %v2095 = vsel %vm2079, %v954, 0.0
  %v2096 = vsel %vm2080, %v956, 0.0
  %v2097 = vadd.f32 %v2081, %v2082
  %v2098 = vadd.f32 %v2097, %v2083
  %v2099 = vadd.f32 %v2098, %v2084
  %v2100 = vadd.f32 %v2099, %v2085
  %v2101 = vadd.f32 %v2100, %v2086
  %v2102 = vadd.f32 %v2101, %v2087
  %v2103 = vadd.f32 %v2102, %v2088
  %v2104 = vadd.f32 %v2103, %v2089
  %v2105 = vadd.f32 %v2104, %v2090
  %v2106 = vadd.f32 %v2105, %v2091
  %v2107 = vadd.f32 %v2106, %v2092
  %v2108 = vadd.f32 %v2107, %v2093
  %v2109 = vadd.f32 %v2108, %v2094
  %v2110 = vadd.f32 %v2109, %v2095
  %v2111 = vadd.f32 %v2110, %v2096
  %v2112 = vrot.slane %v2111, 4
  %v2113 = vadd.f32 %v2111, %v2112
  %v2114 = vrot.slane %v2113, 2
  %v2115 = vadd.f32 %v2113, %v2114
  %v2116 = vrot.slane %v2115, 1
  %v2117 = vadd.f32 %v2115, %v2116
  %vm2118 = vcmp.eq.s32.totalorder %v994, 17
  %vm2119 = vcmp.eq.s32.totalorder %v995, 17
  %vm2120 = vcmp.eq.s32.totalorder %v996, 17
  %vm2121 = vcmp.eq.s32.totalorder %v997, 17
  %v2122 = vsel %vm2118, %v2117, %v2060
  %v2123 = vsel %vm2119, %v2117, %v2061
  %v2124 = vsel %vm2120, %v2117, %v2062
  %v2125 = vsel %vm2121, %v2117, %v2063
  %v2126 = vperm.slane %v991, 2
  %vm2127 = vcmp.eq.s32.totalorder %v994, %v2126
  %vm2128 = vcmp.eq.s32.totalorder %v995, %v2126
  %vm2129 = vcmp.eq.s32.totalorder %v996, %v2126
  %vm2130 = vcmp.eq.s32.totalorder %v997, %v2126
  %vm2131 = vcmp.eq.s32.totalorder %v998, %v2126
  %vm2132 = vcmp.eq.s32.totalorder %v999, %v2126
  %vm2133 = vcmp.eq.s32.totalorder %v1000, %v2126
  %vm2134 = vcmp.eq.s32.totalorder %v1001, %v2126
  %vm2135 = vcmp.eq.s32.totalorder %v1002, %v2126
  %vm2136 = vcmp.eq.s32.totalorder %v1003, %v2126
  %vm2137 = vcmp.eq.s32.totalorder %v1004, %v2126
  %vm2138 = vcmp.eq.s32.totalorder %v1005, %v2126
  %vm2139 = vcmp.eq.s32.totalorder %v1006, %v2126
  %vm2140 = vcmp.eq.s32.totalorder %v1007, %v2126
  %vm2141 = vcmp.eq.s32.totalorder %v1008, %v2126
  %vm2142 = vcmp.eq.s32.totalorder %v1009, %v2126
  %v2143 = vsel %vm2127, %v919, 0.0
  %v2144 = vsel %vm2128, %v921, 0.0
  %v2145 = vsel %vm2129, %v924, 0.0
  %v2146 = vsel %vm2130, %v926, 0.0
  %v2147 = vsel %vm2131, %v929, 0.0
  %v2148 = vsel %vm2132, %v931, 0.0
  %v2149 = vsel %vm2133, %v934, 0.0
  %v2150 = vsel %vm2134, %v936, 0.0
  %v2151 = vsel %vm2135, %v939, 0.0
  %v2152 = vsel %vm2136, %v941, 0.0
  %v2153 = vsel %vm2137, %v944, 0.0
  %v2154 = vsel %vm2138, %v946, 0.0
  %v2155 = vsel %vm2139, %v949, 0.0
  %v2156 = vsel %vm2140, %v951, 0.0
  %v2157 = vsel %vm2141, %v954, 0.0
  %v2158 = vsel %vm2142, %v956, 0.0
  %v2159 = vadd.f32 %v2143, %v2144
  %v2160 = vadd.f32 %v2159, %v2145
  %v2161 = vadd.f32 %v2160, %v2146
  %v2162 = vadd.f32 %v2161, %v2147
  %v2163 = vadd.f32 %v2162, %v2148
  %v2164 = vadd.f32 %v2163, %v2149
  %v2165 = vadd.f32 %v2164, %v2150
  %v2166 = vadd.f32 %v2165, %v2151
  %v2167 = vadd.f32 %v2166, %v2152
  %v2168 = vadd.f32 %v2167, %v2153
  %v2169 = vadd.f32 %v2168, %v2154
  %v2170 = vadd.f32 %v2169, %v2155
  %v2171 = vadd.f32 %v2170, %v2156
  %v2172 = vadd.f32 %v2171, %v2157
  %v2173 = vadd.f32 %v2172, %v2158
  %v2174 = vrot.slane %v2173, 4
  %v2175 = vadd.f32 %v2173, %v2174
  %v2176 = vrot.slane %v2175, 2
  %v2177 = vadd.f32 %v2175, %v2176
  %v2178 = vrot.slane %v2177, 1
  %v2179 = vadd.f32 %v2177, %v2178
  %vm2180 = vcmp.eq.s32.totalorder %v994, 18
  %vm2181 = vcmp.eq.s32.totalorder %v995, 18
  %vm2182 = vcmp.eq.s32.totalorder %v996, 18
  %vm2183 = vcmp.eq.s32.totalorder %v997, 18
  %v2184 = vsel %vm2180, %v2179, %v2122
  %v2185 = vsel %vm2181, %v2179, %v2123
  %v2186 = vsel %vm2182, %v2179, %v2124
  %v2187 = vsel %vm2183, %v2179, %v2125
  %v2188 = vperm.slane %v991, 3
  %vm2189 = vcmp.eq.s32.totalorder %v994, %v2188
  %vm2190 = vcmp.eq.s32.totalorder %v995, %v2188
  %vm2191 = vcmp.eq.s32.totalorder %v996, %v2188
  %vm2192 = vcmp.eq.s32.totalorder %v997, %v2188
  %vm2193 = vcmp.eq.s32.totalorder %v998, %v2188
  %vm2194 = vcmp.eq.s32.totalorder %v999, %v2188
  %vm2195 = vcmp.eq.s32.totalorder %v1000, %v2188
  %vm2196 = vcmp.eq.s32.totalorder %v1001, %v2188
  %vm2197 = vcmp.eq.s32.totalorder %v1002, %v2188
  %vm2198 = vcmp.eq.s32.totalorder %v1003, %v2188
  %vm2199 = vcmp.eq.s32.totalorder %v1004, %v2188
  %vm2200 = vcmp.eq.s32.totalorder %v1005, %v2188
  %vm2201 = vcmp.eq.s32.totalorder %v1006, %v2188
  %vm2202 = vcmp.eq.s32.totalorder %v1007, %v2188
  %vm2203 = vcmp.eq.s32.totalorder %v1008, %v2188
  %vm2204 = vcmp.eq.s32.totalorder %v1009, %v2188
  %v2205 = vsel %vm2189, %v919, 0.0
  %v2206 = vsel %vm2190, %v921, 0.0
  %v2207 = vsel %vm2191, %v924, 0.0
  %v2208 = vsel %vm2192, %v926, 0.0
  %v2209 = vsel %vm2193, %v929, 0.0
  %v2210 = vsel %vm2194, %v931, 0.0
  %v2211 = vsel %vm2195, %v934, 0.0
  %v2212 = vsel %vm2196, %v936, 0.0
  %v2213 = vsel %vm2197, %v939, 0.0
  %v2214 = vsel %vm2198, %v941, 0.0
  %v2215 = vsel %vm2199, %v944, 0.0
  %v2216 = vsel %vm2200, %v946, 0.0
  %v2217 = vsel %vm2201, %v949, 0.0
  %v2218 = vsel %vm2202, %v951, 0.0
  %v2219 = vsel %vm2203, %v954, 0.0
  %v2220 = vsel %vm2204, %v956, 0.0
  %v2221 = vadd.f32 %v2205, %v2206
  %v2222 = vadd.f32 %v2221, %v2207
  %v2223 = vadd.f32 %v2222, %v2208
  %v2224 = vadd.f32 %v2223, %v2209
  %v2225 = vadd.f32 %v2224, %v2210
  %v2226 = vadd.f32 %v2225, %v2211
  %v2227 = vadd.f32 %v2226, %v2212
  %v2228 = vadd.f32 %v2227, %v2213
  %v2229 = vadd.f32 %v2228, %v2214
  %v2230 = vadd.f32 %v2229, %v2215
  %v2231 = vadd.f32 %v2230, %v2216
  %v2232 = vadd.f32 %v2231, %v2217
  %v2233 = vadd.f32 %v2232, %v2218
  %v2234 = vadd.f32 %v2233, %v2219
  %v2235 = vadd.f32 %v2234, %v2220
  %v2236 = vrot.slane %v2235, 4
  %v2237 = vadd.f32 %v2235, %v2236
  %v2238 = vrot.slane %v2237, 2
  %v2239 = vadd.f32 %v2237, %v2238
  %v2240 = vrot.slane %v2239, 1
  %v2241 = vadd.f32 %v2239, %v2240
  %vm2242 = vcmp.eq.s32.totalorder %v994, 19
  %vm2243 = vcmp.eq.s32.totalorder %v995, 19
  %vm2244 = vcmp.eq.s32.totalorder %v996, 19
  %vm2245 = vcmp.eq.s32.totalorder %v997, 19
  %v2246 = vsel %vm2242, %v2241, %v2184
  %v2247 = vsel %vm2243, %v2241, %v2185
  %v2248 = vsel %vm2244, %v2241, %v2186
  %v2249 = vsel %vm2245, %v2241, %v2187
  %v2250 = vperm.slane %v991, 4
  %vm2251 = vcmp.eq.s32.totalorder %v994, %v2250
  %vm2252 = vcmp.eq.s32.totalorder %v995, %v2250
  %vm2253 = vcmp.eq.s32.totalorder %v996, %v2250
  %vm2254 = vcmp.eq.s32.totalorder %v997, %v2250
  %vm2255 = vcmp.eq.s32.totalorder %v998, %v2250
  %vm2256 = vcmp.eq.s32.totalorder %v999, %v2250
  %vm2257 = vcmp.eq.s32.totalorder %v1000, %v2250
  %vm2258 = vcmp.eq.s32.totalorder %v1001, %v2250
  %vm2259 = vcmp.eq.s32.totalorder %v1002, %v2250
  %vm2260 = vcmp.eq.s32.totalorder %v1003, %v2250
  %vm2261 = vcmp.eq.s32.totalorder %v1004, %v2250
  %vm2262 = vcmp.eq.s32.totalorder %v1005, %v2250
  %vm2263 = vcmp.eq.s32.totalorder %v1006, %v2250
  %vm2264 = vcmp.eq.s32.totalorder %v1007, %v2250
  %vm2265 = vcmp.eq.s32.totalorder %v1008, %v2250
  %vm2266 = vcmp.eq.s32.totalorder %v1009, %v2250
  %v2267 = vsel %vm2251, %v919, 0.0
  %v2268 = vsel %vm2252, %v921, 0.0
  %v2269 = vsel %vm2253, %v924, 0.0
  %v2270 = vsel %vm2254, %v926, 0.0
  %v2271 = vsel %vm2255, %v929, 0.0
  %v2272 = vsel %vm2256, %v931, 0.0
  %v2273 = vsel %vm2257, %v934, 0.0
  %v2274 = vsel %vm2258, %v936, 0.0
  %v2275 = vsel %vm2259, %v939, 0.0
  %v2276 = vsel %vm2260, %v941, 0.0
  %v2277 = vsel %vm2261, %v944, 0.0
  %v2278 = vsel %vm2262, %v946, 0.0
  %v2279 = vsel %vm2263, %v949, 0.0
  %v2280 = vsel %vm2264, %v951, 0.0
  %v2281 = vsel %vm2265, %v954, 0.0
  %v2282 = vsel %vm2266, %v956, 0.0
  %v2283 = vadd.f32 %v2267, %v2268
  %v2284 = vadd.f32 %v2283, %v2269
  %v2285 = vadd.f32 %v2284, %v2270
  %v2286 = vadd.f32 %v2285, %v2271
  %v2287 = vadd.f32 %v2286, %v2272
  %v2288 = vadd.f32 %v2287, %v2273
  %v2289 = vadd.f32 %v2288, %v2274
  %v2290 = vadd.f32 %v2289, %v2275
  %v2291 = vadd.f32 %v2290, %v2276
  %v2292 = vadd.f32 %v2291, %v2277
  %v2293 = vadd.f32 %v2292, %v2278
  %v2294 = vadd.f32 %v2293, %v2279
  %v2295 = vadd.f32 %v2294, %v2280
  %v2296 = vadd.f32 %v2295, %v2281
  %v2297 = vadd.f32 %v2296, %v2282
  %v2298 = vrot.slane %v2297, 4
  %v2299 = vadd.f32 %v2297, %v2298
  %v2300 = vrot.slane %v2299, 2
  %v2301 = vadd.f32 %v2299, %v2300
  %v2302 = vrot.slane %v2301, 1
  %v2303 = vadd.f32 %v2301, %v2302
  %vm2304 = vcmp.eq.s32.totalorder %v994, 20
  %vm2305 = vcmp.eq.s32.totalorder %v995, 20
  %vm2306 = vcmp.eq.s32.totalorder %v996, 20
  %vm2307 = vcmp.eq.s32.totalorder %v997, 20
  %v2308 = vsel %vm2304, %v2303, %v2246
  %v2309 = vsel %vm2305, %v2303, %v2247
  %v2310 = vsel %vm2306, %v2303, %v2248
  %v2311 = vsel %vm2307, %v2303, %v2249
  %v2312 = vperm.slane %v991, 5
  %vm2313 = vcmp.eq.s32.totalorder %v994, %v2312
  %vm2314 = vcmp.eq.s32.totalorder %v995, %v2312
  %vm2315 = vcmp.eq.s32.totalorder %v996, %v2312
  %vm2316 = vcmp.eq.s32.totalorder %v997, %v2312
  %vm2317 = vcmp.eq.s32.totalorder %v998, %v2312
  %vm2318 = vcmp.eq.s32.totalorder %v999, %v2312
  %vm2319 = vcmp.eq.s32.totalorder %v1000, %v2312
  %vm2320 = vcmp.eq.s32.totalorder %v1001, %v2312
  %vm2321 = vcmp.eq.s32.totalorder %v1002, %v2312
  %vm2322 = vcmp.eq.s32.totalorder %v1003, %v2312
  %vm2323 = vcmp.eq.s32.totalorder %v1004, %v2312
  %vm2324 = vcmp.eq.s32.totalorder %v1005, %v2312
  %vm2325 = vcmp.eq.s32.totalorder %v1006, %v2312
  %vm2326 = vcmp.eq.s32.totalorder %v1007, %v2312
  %vm2327 = vcmp.eq.s32.totalorder %v1008, %v2312
  %vm2328 = vcmp.eq.s32.totalorder %v1009, %v2312
  %v2329 = vsel %vm2313, %v919, 0.0
  %v2330 = vsel %vm2314, %v921, 0.0
  %v2331 = vsel %vm2315, %v924, 0.0
  %v2332 = vsel %vm2316, %v926, 0.0
  %v2333 = vsel %vm2317, %v929, 0.0
  %v2334 = vsel %vm2318, %v931, 0.0
  %v2335 = vsel %vm2319, %v934, 0.0
  %v2336 = vsel %vm2320, %v936, 0.0
  %v2337 = vsel %vm2321, %v939, 0.0
  %v2338 = vsel %vm2322, %v941, 0.0
  %v2339 = vsel %vm2323, %v944, 0.0
  %v2340 = vsel %vm2324, %v946, 0.0
  %v2341 = vsel %vm2325, %v949, 0.0
  %v2342 = vsel %vm2326, %v951, 0.0
  %v2343 = vsel %vm2327, %v954, 0.0
  %v2344 = vsel %vm2328, %v956, 0.0
  %v2345 = vadd.f32 %v2329, %v2330
  %v2346 = vadd.f32 %v2345, %v2331
  %v2347 = vadd.f32 %v2346, %v2332
  %v2348 = vadd.f32 %v2347, %v2333
  %v2349 = vadd.f32 %v2348, %v2334
  %v2350 = vadd.f32 %v2349, %v2335
  %v2351 = vadd.f32 %v2350, %v2336
  %v2352 = vadd.f32 %v2351, %v2337
  %v2353 = vadd.f32 %v2352, %v2338
  %v2354 = vadd.f32 %v2353, %v2339
  %v2355 = vadd.f32 %v2354, %v2340
  %v2356 = vadd.f32 %v2355, %v2341
  %v2357 = vadd.f32 %v2356, %v2342
  %v2358 = vadd.f32 %v2357, %v2343
  %v2359 = vadd.f32 %v2358, %v2344
  %v2360 = vrot.slane %v2359, 4
  %v2361 = vadd.f32 %v2359, %v2360
  %v2362 = vrot.slane %v2361, 2
  %v2363 = vadd.f32 %v2361, %v2362
  %v2364 = vrot.slane %v2363, 1
  %v2365 = vadd.f32 %v2363, %v2364
  %vm2366 = vcmp.eq.s32.totalorder %v994, 21
  %vm2367 = vcmp.eq.s32.totalorder %v995, 21
  %vm2368 = vcmp.eq.s32.totalorder %v996, 21
  %vm2369 = vcmp.eq.s32.totalorder %v997, 21
  %v2370 = vsel %vm2366, %v2365, %v2308
  %v2371 = vsel %vm2367, %v2365, %v2309
  %v2372 = vsel %vm2368, %v2365, %v2310
  %v2373 = vsel %vm2369, %v2365, %v2311
  %v2374 = vperm.slane %v991, 6
  %vm2375 = vcmp.eq.s32.totalorder %v994, %v2374
  %vm2376 = vcmp.eq.s32.totalorder %v995, %v2374
  %vm2377 = vcmp.eq.s32.totalorder %v996, %v2374
  %vm2378 = vcmp.eq.s32.totalorder %v997, %v2374
  %vm2379 = vcmp.eq.s32.totalorder %v998, %v2374
  %vm2380 = vcmp.eq.s32.totalorder %v999, %v2374
  %vm2381 = vcmp.eq.s32.totalorder %v1000, %v2374
  %vm2382 = vcmp.eq.s32.totalorder %v1001, %v2374
  %vm2383 = vcmp.eq.s32.totalorder %v1002, %v2374
  %vm2384 = vcmp.eq.s32.totalorder %v1003, %v2374
  %vm2385 = vcmp.eq.s32.totalorder %v1004, %v2374
  %vm2386 = vcmp.eq.s32.totalorder %v1005, %v2374
  %vm2387 = vcmp.eq.s32.totalorder %v1006, %v2374
  %vm2388 = vcmp.eq.s32.totalorder %v1007, %v2374
  %vm2389 = vcmp.eq.s32.totalorder %v1008, %v2374
  %vm2390 = vcmp.eq.s32.totalorder %v1009, %v2374
  %v2391 = vsel %vm2375, %v919, 0.0
  %v2392 = vsel %vm2376, %v921, 0.0
  %v2393 = vsel %vm2377, %v924, 0.0
  %v2394 = vsel %vm2378, %v926, 0.0
  %v2395 = vsel %vm2379, %v929, 0.0
  %v2396 = vsel %vm2380, %v931, 0.0
  %v2397 = vsel %vm2381, %v934, 0.0
  %v2398 = vsel %vm2382, %v936, 0.0
  %v2399 = vsel %vm2383, %v939, 0.0
  %v2400 = vsel %vm2384, %v941, 0.0
  %v2401 = vsel %vm2385, %v944, 0.0
  %v2402 = vsel %vm2386, %v946, 0.0
  %v2403 = vsel %vm2387, %v949, 0.0
  %v2404 = vsel %vm2388, %v951, 0.0
  %v2405 = vsel %vm2389, %v954, 0.0
  %v2406 = vsel %vm2390, %v956, 0.0
  %v2407 = vadd.f32 %v2391, %v2392
  %v2408 = vadd.f32 %v2407, %v2393
  %v2409 = vadd.f32 %v2408, %v2394
  %v2410 = vadd.f32 %v2409, %v2395
  %v2411 = vadd.f32 %v2410, %v2396
  %v2412 = vadd.f32 %v2411, %v2397
  %v2413 = vadd.f32 %v2412, %v2398
  %v2414 = vadd.f32 %v2413, %v2399
  %v2415 = vadd.f32 %v2414, %v2400
  %v2416 = vadd.f32 %v2415, %v2401
  %v2417 = vadd.f32 %v2416, %v2402
  %v2418 = vadd.f32 %v2417, %v2403
  %v2419 = vadd.f32 %v2418, %v2404
  %v2420 = vadd.f32 %v2419, %v2405
  %v2421 = vadd.f32 %v2420, %v2406
  %v2422 = vrot.slane %v2421, 4
  %v2423 = vadd.f32 %v2421, %v2422
  %v2424 = vrot.slane %v2423, 2
  %v2425 = vadd.f32 %v2423, %v2424
  %v2426 = vrot.slane %v2425, 1
  %v2427 = vadd.f32 %v2425, %v2426
  %vm2428 = vcmp.eq.s32.totalorder %v994, 22
  %vm2429 = vcmp.eq.s32.totalorder %v995, 22
  %vm2430 = vcmp.eq.s32.totalorder %v996, 22
  %vm2431 = vcmp.eq.s32.totalorder %v997, 22
  %v2432 = vsel %vm2428, %v2427, %v2370
  %v2433 = vsel %vm2429, %v2427, %v2371
  %v2434 = vsel %vm2430, %v2427, %v2372
  %v2435 = vsel %vm2431, %v2427, %v2373
  %v2436 = vperm.slane %v991, 7
  %vm2437 = vcmp.eq.s32.totalorder %v994, %v2436
  %vm2438 = vcmp.eq.s32.totalorder %v995, %v2436
  %vm2439 = vcmp.eq.s32.totalorder %v996, %v2436
  %vm2440 = vcmp.eq.s32.totalorder %v997, %v2436
  %vm2441 = vcmp.eq.s32.totalorder %v998, %v2436
  %vm2442 = vcmp.eq.s32.totalorder %v999, %v2436
  %vm2443 = vcmp.eq.s32.totalorder %v1000, %v2436
  %vm2444 = vcmp.eq.s32.totalorder %v1001, %v2436
  %vm2445 = vcmp.eq.s32.totalorder %v1002, %v2436
  %vm2446 = vcmp.eq.s32.totalorder %v1003, %v2436
  %vm2447 = vcmp.eq.s32.totalorder %v1004, %v2436
  %vm2448 = vcmp.eq.s32.totalorder %v1005, %v2436
  %vm2449 = vcmp.eq.s32.totalorder %v1006, %v2436
  %vm2450 = vcmp.eq.s32.totalorder %v1007, %v2436
  %vm2451 = vcmp.eq.s32.totalorder %v1008, %v2436
  %vm2452 = vcmp.eq.s32.totalorder %v1009, %v2436
  %v2453 = vsel %vm2437, %v919, 0.0
  %v2454 = vsel %vm2438, %v921, 0.0
  %v2455 = vsel %vm2439, %v924, 0.0
  %v2456 = vsel %vm2440, %v926, 0.0
  %v2457 = vsel %vm2441, %v929, 0.0
  %v2458 = vsel %vm2442, %v931, 0.0
  %v2459 = vsel %vm2443, %v934, 0.0
  %v2460 = vsel %vm2444, %v936, 0.0
  %v2461 = vsel %vm2445, %v939, 0.0
  %v2462 = vsel %vm2446, %v941, 0.0
  %v2463 = vsel %vm2447, %v944, 0.0
  %v2464 = vsel %vm2448, %v946, 0.0
  %v2465 = vsel %vm2449, %v949, 0.0
  %v2466 = vsel %vm2450, %v951, 0.0
  %v2467 = vsel %vm2451, %v954, 0.0
  %v2468 = vsel %vm2452, %v956, 0.0
  %v2469 = vadd.f32 %v2453, %v2454
  %v2470 = vadd.f32 %v2469, %v2455
  %v2471 = vadd.f32 %v2470, %v2456
  %v2472 = vadd.f32 %v2471, %v2457
  %v2473 = vadd.f32 %v2472, %v2458
  %v2474 = vadd.f32 %v2473, %v2459
  %v2475 = vadd.f32 %v2474, %v2460
  %v2476 = vadd.f32 %v2475, %v2461
  %v2477 = vadd.f32 %v2476, %v2462
  %v2478 = vadd.f32 %v2477, %v2463
  %v2479 = vadd.f32 %v2478, %v2464
  %v2480 = vadd.f32 %v2479, %v2465
  %v2481 = vadd.f32 %v2480, %v2466
  %v2482 = vadd.f32 %v2481, %v2467
  %v2483 = vadd.f32 %v2482, %v2468
  %v2484 = vrot.slane %v2483, 4
  %v2485 = vadd.f32 %v2483, %v2484
  %v2486 = vrot.slane %v2485, 2
  %v2487 = vadd.f32 %v2485, %v2486
  %v2488 = vrot.slane %v2487, 1
  %v2489 = vadd.f32 %v2487, %v2488
  %vm2490 = vcmp.eq.s32.totalorder %v994, 23
  %vm2491 = vcmp.eq.s32.totalorder %v995, 23
  %vm2492 = vcmp.eq.s32.totalorder %v996, 23
  %vm2493 = vcmp.eq.s32.totalorder %v997, 23
  %v2494 = vsel %vm2490, %v2489, %v2432
  %v2495 = vsel %vm2491, %v2489, %v2433
  %v2496 = vsel %vm2492, %v2489, %v2434
  %v2497 = vsel %vm2493, %v2489, %v2435
  %v2498 = vperm.slane %v992, 0
  %vm2499 = vcmp.eq.s32.totalorder %v994, %v2498
  %vm2500 = vcmp.eq.s32.totalorder %v995, %v2498
  %vm2501 = vcmp.eq.s32.totalorder %v996, %v2498
  %vm2502 = vcmp.eq.s32.totalorder %v997, %v2498
  %vm2503 = vcmp.eq.s32.totalorder %v998, %v2498
  %vm2504 = vcmp.eq.s32.totalorder %v999, %v2498
  %vm2505 = vcmp.eq.s32.totalorder %v1000, %v2498
  %vm2506 = vcmp.eq.s32.totalorder %v1001, %v2498
  %vm2507 = vcmp.eq.s32.totalorder %v1002, %v2498
  %vm2508 = vcmp.eq.s32.totalorder %v1003, %v2498
  %vm2509 = vcmp.eq.s32.totalorder %v1004, %v2498
  %vm2510 = vcmp.eq.s32.totalorder %v1005, %v2498
  %vm2511 = vcmp.eq.s32.totalorder %v1006, %v2498
  %vm2512 = vcmp.eq.s32.totalorder %v1007, %v2498
  %vm2513 = vcmp.eq.s32.totalorder %v1008, %v2498
  %vm2514 = vcmp.eq.s32.totalorder %v1009, %v2498
  %v2515 = vsel %vm2499, %v919, 0.0
  %v2516 = vsel %vm2500, %v921, 0.0
  %v2517 = vsel %vm2501, %v924, 0.0
  %v2518 = vsel %vm2502, %v926, 0.0
  %v2519 = vsel %vm2503, %v929, 0.0
  %v2520 = vsel %vm2504, %v931, 0.0
  %v2521 = vsel %vm2505, %v934, 0.0
  %v2522 = vsel %vm2506, %v936, 0.0
  %v2523 = vsel %vm2507, %v939, 0.0
  %v2524 = vsel %vm2508, %v941, 0.0
  %v2525 = vsel %vm2509, %v944, 0.0
  %v2526 = vsel %vm2510, %v946, 0.0
  %v2527 = vsel %vm2511, %v949, 0.0
  %v2528 = vsel %vm2512, %v951, 0.0
  %v2529 = vsel %vm2513, %v954, 0.0
  %v2530 = vsel %vm2514, %v956, 0.0
  %v2531 = vadd.f32 %v2515, %v2516
  %v2532 = vadd.f32 %v2531, %v2517
  %v2533 = vadd.f32 %v2532, %v2518
  %v2534 = vadd.f32 %v2533, %v2519
  %v2535 = vadd.f32 %v2534, %v2520
  %v2536 = vadd.f32 %v2535, %v2521
  %v2537 = vadd.f32 %v2536, %v2522
  %v2538 = vadd.f32 %v2537, %v2523
  %v2539 = vadd.f32 %v2538, %v2524
  %v2540 = vadd.f32 %v2539, %v2525
  %v2541 = vadd.f32 %v2540, %v2526
  %v2542 = vadd.f32 %v2541, %v2527
  %v2543 = vadd.f32 %v2542, %v2528
  %v2544 = vadd.f32 %v2543, %v2529
  %v2545 = vadd.f32 %v2544, %v2530
  %v2546 = vrot.slane %v2545, 4
  %v2547 = vadd.f32 %v2545, %v2546
  %v2548 = vrot.slane %v2547, 2
  %v2549 = vadd.f32 %v2547, %v2548
  %v2550 = vrot.slane %v2549, 1
  %v2551 = vadd.f32 %v2549, %v2550
  %vm2552 = vcmp.eq.s32.totalorder %v994, 24
  %vm2553 = vcmp.eq.s32.totalorder %v995, 24
  %vm2554 = vcmp.eq.s32.totalorder %v996, 24
  %vm2555 = vcmp.eq.s32.totalorder %v997, 24
  %v2556 = vsel %vm2552, %v2551, %v2494
  %v2557 = vsel %vm2553, %v2551, %v2495
  %v2558 = vsel %vm2554, %v2551, %v2496
  %v2559 = vsel %vm2555, %v2551, %v2497
  %v2560 = vperm.slane %v992, 1
  %vm2561 = vcmp.eq.s32.totalorder %v994, %v2560
  %vm2562 = vcmp.eq.s32.totalorder %v995, %v2560
  %vm2563 = vcmp.eq.s32.totalorder %v996, %v2560
  %vm2564 = vcmp.eq.s32.totalorder %v997, %v2560
  %vm2565 = vcmp.eq.s32.totalorder %v998, %v2560
  %vm2566 = vcmp.eq.s32.totalorder %v999, %v2560
  %vm2567 = vcmp.eq.s32.totalorder %v1000, %v2560
  %vm2568 = vcmp.eq.s32.totalorder %v1001, %v2560
  %vm2569 = vcmp.eq.s32.totalorder %v1002, %v2560
  %vm2570 = vcmp.eq.s32.totalorder %v1003, %v2560
  %vm2571 = vcmp.eq.s32.totalorder %v1004, %v2560
  %vm2572 = vcmp.eq.s32.totalorder %v1005, %v2560
  %vm2573 = vcmp.eq.s32.totalorder %v1006, %v2560
  %vm2574 = vcmp.eq.s32.totalorder %v1007, %v2560
  %vm2575 = vcmp.eq.s32.totalorder %v1008, %v2560
  %vm2576 = vcmp.eq.s32.totalorder %v1009, %v2560
  %v2577 = vsel %vm2561, %v919, 0.0
  %v2578 = vsel %vm2562, %v921, 0.0
  %v2579 = vsel %vm2563, %v924, 0.0
  %v2580 = vsel %vm2564, %v926, 0.0
  %v2581 = vsel %vm2565, %v929, 0.0
  %v2582 = vsel %vm2566, %v931, 0.0
  %v2583 = vsel %vm2567, %v934, 0.0
  %v2584 = vsel %vm2568, %v936, 0.0
  %v2585 = vsel %vm2569, %v939, 0.0
  %v2586 = vsel %vm2570, %v941, 0.0
  %v2587 = vsel %vm2571, %v944, 0.0
  %v2588 = vsel %vm2572, %v946, 0.0
  %v2589 = vsel %vm2573, %v949, 0.0
  %v2590 = vsel %vm2574, %v951, 0.0
  %v2591 = vsel %vm2575, %v954, 0.0
  %v2592 = vsel %vm2576, %v956, 0.0
  %v2593 = vadd.f32 %v2577, %v2578
  %v2594 = vadd.f32 %v2593, %v2579
  %v2595 = vadd.f32 %v2594, %v2580
  %v2596 = vadd.f32 %v2595, %v2581
  %v2597 = vadd.f32 %v2596, %v2582
  %v2598 = vadd.f32 %v2597, %v2583
  %v2599 = vadd.f32 %v2598, %v2584
  %v2600 = vadd.f32 %v2599, %v2585
  %v2601 = vadd.f32 %v2600, %v2586
  %v2602 = vadd.f32 %v2601, %v2587
  %v2603 = vadd.f32 %v2602, %v2588
  %v2604 = vadd.f32 %v2603, %v2589
  %v2605 = vadd.f32 %v2604, %v2590
  %v2606 = vadd.f32 %v2605, %v2591
  %v2607 = vadd.f32 %v2606, %v2592
  %v2608 = vrot.slane %v2607, 4
  %v2609 = vadd.f32 %v2607, %v2608
  %v2610 = vrot.slane %v2609, 2
  %v2611 = vadd.f32 %v2609, %v2610
  %v2612 = vrot.slane %v2611, 1
  %v2613 = vadd.f32 %v2611, %v2612
  %vm2614 = vcmp.eq.s32.totalorder %v994, 25
  %vm2615 = vcmp.eq.s32.totalorder %v995, 25
  %vm2616 = vcmp.eq.s32.totalorder %v996, 25
  %vm2617 = vcmp.eq.s32.totalorder %v997, 25
  %v2618 = vsel %vm2614, %v2613, %v2556
  %v2619 = vsel %vm2615, %v2613, %v2557
  %v2620 = vsel %vm2616, %v2613, %v2558
  %v2621 = vsel %vm2617, %v2613, %v2559
  %v2622 = vperm.slane %v987, 0
  %v2623 = vadd.f32 %v2618, %v2622
  %v2624 = vadd.f32 %v2619, %v2622
  %v2625 = vadd.f32 %v2620, %v2622
  %v2626 = vadd.f32 %v2621, %v2622
  %v2627 = vmul.f32 %v2623, 0.17677669
  %v2628 = vmul.f32 %v2624, 0.17677669
  %v2629 = vmul.f32 %v2625, 0.17677669
  %v2630 = vmul.f32 %v2626, 0.17677669
  %2631 = vst [vmem:[%s9] sm:$0xff] %v2627
  %2632 = vst [vmem:[%s9 + $0x8] sm:$0xff] %v2628
  %2633 = vst [vmem:[%s9 + $0x10] sm:$0xff] %v2629
  %2634 = vst [vmem:[%s9 + $0x18] sm:$0xff] %v2630
  %vm2635 = vcmp.lt.s32.totalorder %v994, 26
  %vm2636 = vcmp.lt.s32.totalorder %v995, 26
  %vm2637 = vcmp.lt.s32.totalorder %v996, 26
  %vm2638 = vcmp.lt.s32.totalorder %v997, 26
  %v2639 = vsel %vm2635, %v2627, -1e+30
  %v2640 = vsel %vm2636, %v2628, -1e+30
  %v2641 = vsel %vm2637, %v2629, -1e+30
  %v2642 = vsel %vm2638, %v2630, -1e+30
  %v2643 = vmax.f32 %v2639, %v2640
  %v2644 = vmax.f32 %v2641, %v2642
  %v2645 = vmax.f32 %v2643, %v2644
  %v2646 = vrot.slane %v2645, 4
  %v2647 = vmax.f32 %v2645, %v2646
  %v2648 = vrot.slane %v2647, 2
  %v2649 = vmax.f32 %v2647, %v2648
  %v2650 = vrot.slane %v2649, 1
  %v2651 = vmax.f32 %v2649, %v2650
  %v2652 = vsub.f32 %v2639, %v2651
  %v2653 = vsub.f32 %v2640, %v2651
  %v2654 = vsub.f32 %v2641, %v2651
  %v2655 = vsub.f32 %v2642, %v2651
  %v2656 = vmul.f32 %v2652, 1.442695
  %v2657 = vpow.pop %v2656
  %v2658 = vmul.f32 %v2653, 1.442695
  %v2659 = vpow.pop %v2658
  %v2660 = vmul.f32 %v2654, 1.442695
  %v2661 = vpow.pop %v2660
  %v2662 = vmul.f32 %v2655, 1.442695
  %v2663 = vpow.pop %v2662
  %v2664 = vadd.f32 %v2657, %v2659
  %v2665 = vadd.f32 %v2664, %v2661
  %v2666 = vadd.f32 %v2665, %v2663
  %v2667 = vrot.slane %v2666, 4
  %v2668 = vadd.f32 %v2666, %v2667
  %v2669 = vrot.slane %v2668, 2
  %v2670 = vadd.f32 %v2668, %v2669
  %v2671 = vrot.slane %v2670, 1
  %v2672 = vadd.f32 %v2670, %v2671
  %v2673 = vrcp.pop %v2672
  %v2674 = vmul.f32 %v2657, %v2673
  %v2675 = vmul.f32 %v2659, %v2673
  %v2676 = vmul.f32 %v2661, %v2673
  %v2677 = vmul.f32 %v2663, %v2673
  %v2678 = vmax.f32 %v2674, %v2675
  %v2679 = vmax.f32 %v2676, %v2677
  %v2680 = vmax.f32 %v2678, %v2679
  %v2681 = vrot.slane %v2680, 4
  %v2682 = vmax.f32 %v2680, %v2681
  %v2683 = vrot.slane %v2682, 2
  %v2684 = vmax.f32 %v2682, %v2683
  %v2685 = vrot.slane %v2684, 1
  %v2686 = vmax.f32 %v2684, %v2685
  %v2687 = vmax.f32 %v2686, 1e-12
  %v2688 = vrcp.pop %v2687
  %v2689 = vmul.f32 %v2674, %v2688
  %v2690 = vmul.f32 %v2675, %v2688
  %v2691 = vmul.f32 %v2676, %v2688
  %v2692 = vmul.f32 %v2677, %v2688
  %2693 = vst [vmem:[%s10] sm:$0xff] %v2689
  %2694 = vst [vmem:[%s10 + $0x8] sm:$0xff] %v2690
  %2695 = vst [vmem:[%s10 + $0x10] sm:$0xff] %v2691
  %2696 = vst [vmem:[%s10 + $0x18] sm:$0xff] %v2692
  // Predicated region
  $region38: #{scene_net_forward.1} parent=0 // pred_check
    _
  $region39: #{scene_net_forward.1} parent=0 // pred_check_branch
    %2698 = sbr.rel (0) target = $region41
  $region40: #{scene_net_forward.1} parent=0 // pred_region
    _
  $region41: #{scene_net_forward.1} parent=0 // pred_fallthru
    _
  // Predicated region
  $region42: #{scene_net_forward.1} parent=0 // pred_check
    _
  $region43: #{scene_net_forward.1} parent=0 // pred_check_branch
    %2700 = sbr.rel (0) target = $region45
  $region44: #{scene_net_forward.1} parent=0 // pred_region
    _
  $region45: #{scene_net_forward.1} parent=0 // pred_fallthru
    _
  // Predicated region
  $region46: #{scene_net_forward.1} parent=0 // pred_check
    _
  $region47: #{scene_net_forward.1} parent=0 // pred_check_branch
    %2702 = sbr.rel (0) target = $region49
  $region48: #{scene_net_forward.1} parent=0 // pred_region
    _
  $region49: #{scene_net_forward.1} parent=0 // pred_fallthru
    _
  // Predicated region
  $region50: #{scene_net_forward.1} parent=0 // pred_check
    _
  $region51: #{scene_net_forward.1} parent=0 // pred_check_branch
    %2704 = sbr.rel (0) target = $region53
  $region52: #{scene_net_forward.1} parent=0 // pred_region
    _
  $region53: #{scene_net_forward.1} parent=0 // pred_fallthru
    _

</llo_original>
